<compile_context>
chip_gen: v5e
topology: v5e:2x2
jax: 0.10.0
libtpu: 0.0.40
codegen_flags: <defaults>
</compile_context>

<pallas_src>
import functools

import jax
import jax.numpy as jnp
from jax.experimental import pallas as pl
from jax.experimental.pallas import tpu as pltpu


# --------------------------------------------------------------------------- kernels
def _up_kernel_xlu(x1_ref, x2_ref, w_ref, b_ref, o_ref, *, th, w):
    """Batched deconv taps + XLU (stack/reshape) interleave, flat lane-dense blocks.

    x1_ref: (1, Cin,  th*W)      input rows for this (n, h-tile), native dtype
    x2_ref: (1, Cout, 4*th*W)    skip-connection tile, flattened (2*th, 2*W)
    w_ref : (4, Cout, Cin)       w_ref[2*di+dj, co, ci] = weight[ci, co, di, dj]
    b_ref : (Cout, 1)            bias, f32
    o_ref : (1, Cout, 4*th*W)    fused output tile
    """
    cout = o_ref.shape[1]
    m = th * w
    x = x1_ref[0]                                  # (Cin, th*W), native dtype
    wt = w_ref[...]                                # (4, Cout, Cin), native dtype
    # One MXU matmul per 2x2 deconv tap over the whole tile (f32 accumulation).
    y = [jnp.dot(wt[t], x, preferred_element_type=jnp.float32) for t in range(4)]
    # dj (even/odd lane) interleave on the XLU: r[:, 2*m + dj] = y_dj[:, m].
    r0 = jnp.stack([y[0], y[1]], axis=-1).reshape(cout, 2 * m)   # rows with di = 0
    r1 = jnp.stack([y[2], y[3]], axis=-1).reshape(cout, 2 * m)   # rows with di = 1
    # di (row) interleave: output rows alternate r0 / r1 in chunks of 2*W lanes.
    z = jnp.stack([r0.reshape(cout, th, 2 * w),
                   r1.reshape(cout, th, 2 * w)], axis=2).reshape(cout, 4 * m)
    z = z + b_ref[...] + x2_ref[0].astype(jnp.float32)           # fused bias + residual
    o_ref[0] = z.astype(o_ref.dtype)


def _up_kernel_mxu(x1_ref, x2_ref, w_ref, b_ref, e_ref, o_ref, *, th, w):
    """Conservative fallback: batched deconv taps + per-row MXU 0/1 lane scatter.

    Same semantics as _up_kernel_xlu; only used if the XLU interleave fails to lower.
    e_ref: (2, W, 2*W) with e_ref[dj, w, 2*w + dj] = 1, else 0 (f32).
    """
    x = x1_ref[0]                                  # (Cin, th*W)
    wt = w_ref[...]
    y = [jnp.dot(wt[t], x, preferred_element_type=jnp.float32) for t in range(4)]
    b = b_ref[...]                                 # (Cout, 1)
    e0 = e_ref[0]                                  # (W, 2W)
    e1 = e_ref[1]
    for t in range(th):
        sl = slice(t * w, (t + 1) * w)
        for di in range(2):
            z = jnp.dot(y[2 * di][:, sl], e0, preferred_element_type=jnp.float32)
            z = z + jnp.dot(y[2 * di + 1][:, sl], e1, preferred_element_type=jnp.float32)
            r = 2 * t + di
            cols = slice(r * 2 * w, (r + 1) * 2 * w)
            z = z + b + x2_ref[0, :, cols].astype(jnp.float32)
            o_ref[0, :, cols] = z.astype(o_ref.dtype)


# --------------------------------------------------------------------------- wrapper
def _pick_h_tile(H, W, per_row_bytes, budget_bytes, n_batch):
    """Largest divisor of H giving 128-aligned flat blocks within the VMEM budget."""
    cands = [t for t in range(1, H + 1) if H % t == 0 and (t * W) % 128 == 0]
    if not cands:
        # Rare: no 128-aligned tiling exists; whole-height blocks (block dims == full
        # array dims stay legal).  For very large images this may need a smaller budget.
        cands = [H]
    fits = [t for t in cands if t * per_row_bytes <= budget_bytes]
    pool = fits if fits else [min(cands)]
    if n_batch == 1:
        # Keep >= 2 parallel grid blocks so v7x's two TensorCores both get work.
        multi = [t for t in pool if H // t >= 2]
        if multi:
            pool = multi
    return max(pool)


def up_forward(x1, x2, weight, bias, *, h_tile=None, interleave=None):
    """Fused Pallas version of up.forward (ConvTranspose2d k=2,s=2 + pad + add), NCHW."""
    N, Cin, H, W = x1.shape
    Cout = Cin // 2
    assert weight.shape == (Cin, Cout, 2, 2)
    assert x2.shape[0] == N and x2.shape[1] == Cout

    H2, W2 = 2 * H, 2 * W
    diffY = x2.shape[2] - H2
    diffX = x2.shape[3] - W2
    assert diffY >= 0 and diffX >= 0, "skip connection must be >= upsampled size"
    top, left = diffY // 2, diffX // 2

    out_dtype = jnp.result_type(x1.dtype, x2.dtype, weight.dtype)

    x2c = x2
    if diffY or diffX:  # crop x2 to the window covered by the upsampled x1 (rare path)
        x2c = x2[:, :, top:top + H2, left:left + W2]

    # Native dtypes end to end; free metadata reshapes to the lane-dense flat layout.
    x1f = x1.reshape(N, Cin, H * W)
    x2f = x2c.reshape(N, Cout, H2 * W2)
    # (Cin, Cout, 2, 2) -> (4, Cout, Cin); tiny, done once in XLA, kept in input dtype.
    wm = jnp.transpose(weight, (2, 3, 1, 0)).reshape(4, Cout, Cin).astype(x1.dtype)
    bm = bias.astype(jnp.float32).reshape(Cout, 1)

    if h_tile is None:
        per_row = (Cin * W * x1.dtype.itemsize
                   + 4 * Cout * W * (x2.dtype.itemsize + jnp.dtype(out_dtype).itemsize))
        h_tile = _pick_h_tile(H, W, per_row, 6 << 20, N)
    assert H % h_tile == 0
    th = h_tile
    grid = (N, H // th)

    compiler_params = pltpu.CompilerParams(
        dimension_semantics=("parallel", "parallel"),
        vmem_limit_bytes=48 * 1024 * 1024)   # sized for v7x's 64 MiB physical VMEM

    def call(mode):
        if mode == "xlu":
            kernel = functools.partial(_up_kernel_xlu, th=th, w=W)
            extra_in, extra_specs = (), ()
        else:
            # 0/1 spread matrices for the fallback lane scatter: e[dj, w, 2*w + dj] = 1.
            wi = jax.lax.broadcasted_iota(jnp.int32, (W, 2 * W), 0)
            ci = jax.lax.broadcasted_iota(jnp.int32, (W, 2 * W), 1)
            e = jnp.stack([(ci == 2 * wi).astype(jnp.float32),
                           (ci == 2 * wi + 1).astype(jnp.float32)], axis=0)
            kernel = functools.partial(_up_kernel_mxu, th=th, w=W)
            extra_in = (e,)
            extra_specs = (pl.BlockSpec((2, W, 2 * W), lambda n, h: (0, 0, 0)),)
        return pl.pallas_call(
            kernel,
            out_shape=jax.ShapeDtypeStruct((N, Cout, H2 * W2), out_dtype),
            grid=grid,
            in_specs=[
                pl.BlockSpec((1, Cin, th * W), lambda n, h: (n, 0, h)),
                pl.BlockSpec((1, Cout, 4 * th * W), lambda n, h: (n, 0, h)),
                pl.BlockSpec((4, Cout, Cin), lambda n, h: (0, 0, 0)),
                pl.BlockSpec((Cout, 1), lambda n, h: (0, 0)),
                *extra_specs,
            ],
            out_specs=pl.BlockSpec((1, Cout, 4 * th * W), lambda n, h: (n, 0, h)),
            compiler_params=compiler_params,
        )(x1f, x2f, wm, bm, *extra_in)

    if interleave is not None:
        outf = call(interleave)
    else:
        try:
            outf = call("xlu")
            jax.block_until_ready(outf)
        except Exception:
            # TODO(synk): drop this fallback once the stack+reshape lane interleave is
            # guaranteed to lower on every deployed Mosaic version.
            outf = call("mxu")

    out = outf.reshape(N, Cout, H2, W2)
    if diffY == 0 and diffX == 0:
        return out
    # rare (diff > 0) path: border of the result equals x2 (zero-padded deconv region).
    return x2.astype(out_dtype).at[:, :, top:top + H2, left:left + W2].set(out)


# --------------------------------------------------------------------------- reference
def up_reference(x1, x2, weight, bias):
    """Pure-JAX (f32) reference of the PyTorch forward pass."""
    N, Cin, H, W = x1.shape
    Cout = Cin // 2
    x1f = x1.astype(jnp.float32)
    wf = weight.astype(jnp.float32)
    up_x1 = jnp.einsum("nihw,iopq->nohpwq", x1f, wf).reshape(N, Cout, 2 * H, 2 * W)
    up_x1 = up_x1 + bias.astype(jnp.float32)[None, :, None, None]
    diffY = x2.shape[2] - up_x1.shape[2]
    diffX = x2.shape[3] - up_x1.shape[3]
    up_x1 = jnp.pad(
        up_x1,
        ((0, 0), (0, 0),
         (diffY // 2, diffY - diffY // 2),
         (diffX // 2, diffX - diffX // 2)),
    )
    return up_x1 + x2.astype(jnp.float32)


if __name__ == "__main__":
    key = jax.random.PRNGKey(0)
    k1, k2, k3, k4 = jax.random.split(key, 4)

    # Small shapes consistent with the module: in_channels=8 -> out_channels=4,
    # spatial 16x16 upsampled to 32x32 to match the skip connection x2.
    N, Cin, H, W = 2, 8, 16, 16
    Cout = Cin // 2
    x1 = jax.random.normal(k1, (N, Cin, H, W), jnp.float32)
    x2 = jax.random.normal(k2, (N, Cout, 2 * H, 2 * W), jnp.float32)
    weight = 0.1 * jax.random.normal(k3, (Cin, Cout, 2, 2), jnp.float32)
    bias = 0.1 * jax.random.normal(k4, (Cout,), jnp.float32)

    ref = up_reference(x1, x2, weight, bias)

    # f32 path (exact MXU accumulation)
    out = up_forward(x1, x2, weight, bias)
    jax.block_until_ready(out)
    assert out.shape == x2.shape
    assert out.dtype == x2.dtype
    assert jnp.allclose(out, ref, atol=1e-4, rtol=1e-4)

    # native bf16 path (bf16 tap matmuls, f32 accumulation, bf16 output)
    out_bf = up_forward(x1.astype(jnp.bfloat16), x2.astype(jnp.bfloat16),
                        weight.astype(jnp.bfloat16), bias.astype(jnp.bfloat16))
    jax.block_until_ready(out_bf)
    assert out_bf.dtype == jnp.bfloat16
    assert jnp.allclose(out_bf.astype(jnp.float32), ref, atol=1e-1, rtol=5e-2)

    print("KERNEL_OK")
</pallas_src>

<mosaic_0001>
module attributes {stable_mosaic.version = 11 : i64} {
  func.func @_up_kernel_xlu(%arg0: i32, %arg1: i32, %arg2: memref<1x8x256xf32, #tpu.memory_space<vmem>>, %arg3: memref<1x4x1024xf32, #tpu.memory_space<vmem>>, %arg4: memref<4x4x8xf32, #tpu.memory_space<vmem>>, %arg5: memref<4x1xf32, #tpu.memory_space<vmem>>, %arg6: memref<1x4x1024xf32, #tpu.memory_space<vmem>>) attributes {dimension_semantics = [#tpu.dimension_semantics<parallel>, #tpu.dimension_semantics<parallel>], iteration_bounds = array<i64: 2, 1>, scalar_prefetch = 0 : i64, scratch_operands = 0 : i64, tpu.core_type = #tpu.core_type<tc>, window_params = [{transform_indices = @transform_0, window_bounds = array<i64: 1, 8, 256>}, {transform_indices = @transform_1, window_bounds = array<i64: 1, 4, 1024>}, {pipeline_mode = #tpu.pipeline_mode<synchronous>, transform_indices = @transform_2, window_bounds = array<i64: 4, 4, 8>}, {pipeline_mode = #tpu.pipeline_mode<synchronous>, transform_indices = @transform_3, window_bounds = array<i64: 4, 1>}, {transform_indices = @transform_4, window_bounds = array<i64: 1, 4, 1024>}]} {
    %c0 = arith.constant 0 : index
    %c0_0 = arith.constant 0 : index
    %c0_1 = arith.constant 0 : index
    %0 = vector.load %arg2[%c0, %c0_0, %c0_1] : memref<1x8x256xf32, #tpu.memory_space<vmem>>, vector<1x8x256xf32>
    %1 = vector.shape_cast %0 : vector<1x8x256xf32> to vector<8x256xf32>
    %c0_2 = arith.constant 0 : index
    %c0_3 = arith.constant 0 : index
    %c0_4 = arith.constant 0 : index
    %2 = vector.load %arg4[%c0_2, %c0_3, %c0_4] : memref<4x4x8xf32, #tpu.memory_space<vmem>>, vector<4x4x8xf32>
    %3 = vector.extract_strided_slice %2 {offsets = [0, 0, 0], sizes = [1, 4, 8], strides = [1, 1, 1]} : vector<4x4x8xf32> to vector<1x4x8xf32>
    %4 = vector.shape_cast %3 : vector<1x4x8xf32> to vector<4x8xf32>
    %cst = arith.constant dense<0.000000e+00> : vector<4x256xf32>
    %5 = tpu.matmul %4, %1, %cst {dimension_numbers = #tpu.dot_dimension_numbers<[1], [0], [0], [1], [0, 0, 1, 1], [], []>} : vector<4x8xf32>, vector<8x256xf32>, vector<4x256xf32> -> vector<4x256xf32>
    %6 = vector.extract_strided_slice %2 {offsets = [1, 0, 0], sizes = [1, 4, 8], strides = [1, 1, 1]} : vector<4x4x8xf32> to vector<1x4x8xf32>
    %7 = vector.shape_cast %6 : vector<1x4x8xf32> to vector<4x8xf32>
    %cst_5 = arith.constant dense<0.000000e+00> : vector<4x256xf32>
    %8 = tpu.matmul %7, %1, %cst_5 {dimension_numbers = #tpu.dot_dimension_numbers<[1], [0], [0], [1], [0, 0, 1, 1], [], []>} : vector<4x8xf32>, vector<8x256xf32>, vector<4x256xf32> -> vector<4x256xf32>
    %9 = vector.extract_strided_slice %2 {offsets = [2, 0, 0], sizes = [1, 4, 8], strides = [1, 1, 1]} : vector<4x4x8xf32> to vector<1x4x8xf32>
    %10 = vector.shape_cast %9 : vector<1x4x8xf32> to vector<4x8xf32>
    %cst_6 = arith.constant dense<0.000000e+00> : vector<4x256xf32>
    %11 = tpu.matmul %10, %1, %cst_6 {dimension_numbers = #tpu.dot_dimension_numbers<[1], [0], [0], [1], [0, 0, 1, 1], [], []>} : vector<4x8xf32>, vector<8x256xf32>, vector<4x256xf32> -> vector<4x256xf32>
    %12 = vector.extract_strided_slice %2 {offsets = [3, 0, 0], sizes = [1, 4, 8], strides = [1, 1, 1]} : vector<4x4x8xf32> to vector<1x4x8xf32>
    %13 = vector.shape_cast %12 : vector<1x4x8xf32> to vector<4x8xf32>
    %cst_7 = arith.constant dense<0.000000e+00> : vector<4x256xf32>
    %14 = tpu.matmul %13, %1, %cst_7 {dimension_numbers = #tpu.dot_dimension_numbers<[1], [0], [0], [1], [0, 0, 1, 1], [], []>} : vector<4x8xf32>, vector<8x256xf32>, vector<4x256xf32> -> vector<4x256xf32>
    %15 = vector.shape_cast %5 : vector<4x256xf32> to vector<4x256x1xf32>
    %16 = vector.shape_cast %8 : vector<4x256xf32> to vector<4x256x1xf32>
    %17 = tpu.concatenate %15, %16 in 2 : vector<4x256x1xf32>, vector<4x256x1xf32> -> vector<4x256x2xf32>
    %18 = vector.shape_cast %17 : vector<4x256x2xf32> to vector<4x512xf32>
    %19 = vector.shape_cast %11 : vector<4x256xf32> to vector<4x256x1xf32>
    %20 = vector.shape_cast %14 : vector<4x256xf32> to vector<4x256x1xf32>
    %21 = tpu.concatenate %19, %20 in 2 : vector<4x256x1xf32>, vector<4x256x1xf32> -> vector<4x256x2xf32>
    %22 = vector.shape_cast %21 : vector<4x256x2xf32> to vector<4x512xf32>
    %23 = vector.shape_cast %18 : vector<4x512xf32> to vector<4x16x32xf32>
    %24 = vector.shape_cast %22 : vector<4x512xf32> to vector<4x16x32xf32>
    %25 = vector.shape_cast %23 : vector<4x16x32xf32> to vector<4x16x1x32xf32>
    %26 = vector.shape_cast %24 : vector<4x16x32xf32> to vector<4x16x1x32xf32>
    %27 = tpu.concatenate %25, %26 in 2 : vector<4x16x1x32xf32>, vector<4x16x1x32xf32> -> vector<4x16x2x32xf32>
    %28 = vector.shape_cast %27 : vector<4x16x2x32xf32> to vector<4x1024xf32>
    %c0_8 = arith.constant 0 : index
    %c0_9 = arith.constant 0 : index
    %29 = vector.load %arg5[%c0_8, %c0_9] : memref<4x1xf32, #tpu.memory_space<vmem>>, vector<4x1xf32>
    %30 = vector.broadcast %29 : vector<4x1xf32> to vector<4x1024xf32>
    %31 = arith.addf %28, %30 : vector<4x1024xf32>
    %c0_10 = arith.constant 0 : index
    %c0_11 = arith.constant 0 : index
    %c0_12 = arith.constant 0 : index
    %32 = vector.load %arg3[%c0_10, %c0_11, %c0_12] : memref<1x4x1024xf32, #tpu.memory_space<vmem>>, vector<1x4x1024xf32>
    %33 = vector.shape_cast %32 : vector<1x4x1024xf32> to vector<4x1024xf32>
    %34 = arith.addf %31, %33 : vector<4x1024xf32>
    %c0_13 = arith.constant 0 : index
    %c0_14 = arith.constant 0 : index
    %c0_15 = arith.constant 0 : index
    %35 = vector.load %arg6[%c0_13, %c0_14, %c0_15] : memref<1x4x1024xf32, #tpu.memory_space<vmem>>, vector<1x4x1024xf32>
    %36 = vector.shape_cast %35 : vector<1x4x1024xf32> to vector<4x1024xf32>
    %37 = vector.shape_cast %34 : vector<4x1024xf32> to vector<1x4x1024xf32>
    tpu.vector_store %arg6[%c0_13, %c0_14, %c0_15], %37 {strides = array<i32>} : memref<1x4x1024xf32, #tpu.memory_space<vmem>>, vector<1x4x1024xf32>,
    return
  }
  func.func @transform_0(%arg0: i32, %arg1: i32) -> (i32, i32, i32) {
    %c0_i32 = arith.constant 0 : i32
    %c0_i32_0 = arith.constant 0 : i32
    return %arg0, %c0_i32, %arg1 : i32, i32, i32
  }
  func.func @transform_1(%arg0: i32, %arg1: i32) -> (i32, i32, i32) {
    %c0_i32 = arith.constant 0 : i32
    %c0_i32_0 = arith.constant 0 : i32
    return %arg0, %c0_i32, %arg1 : i32, i32, i32
  }
  func.func @transform_2(%arg0: i32, %arg1: i32) -> (i32, i32, i32) {
    %c0_i32 = arith.constant 0 : i32
    %c0_i32_0 = arith.constant 0 : i32
    %c0_i32_1 = arith.constant 0 : i32
    %c0_i32_2 = arith.constant 0 : i32
    return %c0_i32, %c0_i32_0, %c0_i32_1 : i32, i32, i32
  }
  func.func @transform_3(%arg0: i32, %arg1: i32) -> (i32, i32) {
    %c0_i32 = arith.constant 0 : i32
    %c0_i32_0 = arith.constant 0 : i32
    %c0_i32_1 = arith.constant 0 : i32
    return %c0_i32, %c0_i32_0 : i32, i32
  }
  func.func @transform_4(%arg0: i32, %arg1: i32) -> (i32, i32, i32) {
    %c0_i32 = arith.constant 0 : i32
    %c0_i32_0 = arith.constant 0 : i32
    return %arg0, %c0_i32, %arg1 : i32, i32, i32
  }
}

module attributes {stable_mosaic.version = 11 : i64} {
  func.func @_up_kernel_mxu(%arg0: i32, %arg1: i32, %arg2: memref<1x8x256xf32, #tpu.memory_space<vmem>>, %arg3: memref<1x4x1024xf32, #tpu.memory_space<vmem>>, %arg4: memref<4x4x8xf32, #tpu.memory_space<vmem>>, %arg5: memref<4x1xf32, #tpu.memory_space<vmem>>, %arg6: memref<2x16x32xf32, #tpu.memory_space<vmem>>, %arg7: memref<1x4x1024xf32, #tpu.memory_space<vmem>>) attributes {dimension_semantics = [#tpu.dimension_semantics<parallel>, #tpu.dimension_semantics<parallel>], iteration_bounds = array<i64: 2, 1>, scalar_prefetch = 0 : i64, scratch_operands = 0 : i64, tpu.core_type = #tpu.core_type<tc>, window_params = [{transform_indices = @transform_0, window_bounds = array<i64: 1, 8, 256>}, {transform_indices = @transform_1, window_bounds = array<i64: 1, 4, 1024>}, {pipeline_mode = #tpu.pipeline_mode<synchronous>, transform_indices = @transform_2, window_bounds = array<i64: 4, 4, 8>}, {pipeline_mode = #tpu.pipeline_mode<synchronous>, transform_indices = @transform_3, window_bounds = array<i64: 4, 1>}, {pipeline_mode = #tpu.pipeline_mode<synchronous>, transform_indices = @transform_4, window_bounds = array<i64: 2, 16, 32>}, {transform_indices = @transform_5, window_bounds = array<i64: 1, 4, 1024>}]} {
    %c0 = arith.constant 0 : index
    %c0_0 = arith.constant 0 : index
    %c0_1 = arith.constant 0 : index
    %0 = vector.load %arg2[%c0, %c0_0, %c0_1] : memref<1x8x256xf32, #tpu.memory_space<vmem>>, vector<1x8x256xf32>
    %1 = vector.shape_cast %0 : vector<1x8x256xf32> to vector<8x256xf32>
    %c0_2 = arith.constant 0 : index
    %c0_3 = arith.constant 0 : index
    %c0_4 = arith.constant 0 : index
    %2 = vector.load %arg4[%c0_2, %c0_3, %c0_4] : memref<4x4x8xf32, #tpu.memory_space<vmem>>, vector<4x4x8xf32>
    %3 = vector.extract_strided_slice %2 {offsets = [0, 0, 0], sizes = [1, 4, 8], strides = [1, 1, 1]} : vector<4x4x8xf32> to vector<1x4x8xf32>
    %4 = vector.shape_cast %3 : vector<1x4x8xf32> to vector<4x8xf32>
    %cst = arith.constant dense<0.000000e+00> : vector<4x256xf32>
    %5 = tpu.matmul %4, %1, %cst {dimension_numbers = #tpu.dot_dimension_numbers<[1], [0], [0], [1], [0, 0, 1, 1], [], []>} : vector<4x8xf32>, vector<8x256xf32>, vector<4x256xf32> -> vector<4x256xf32>
    %6 = vector.extract_strided_slice %2 {offsets = [1, 0, 0], sizes = [1, 4, 8], strides = [1, 1, 1]} : vector<4x4x8xf32> to vector<1x4x8xf32>
    %7 = vector.shape_cast %6 : vector<1x4x8xf32> to vector<4x8xf32>
    %cst_5 = arith.constant dense<0.000000e+00> : vector<4x256xf32>
    %8 = tpu.matmul %7, %1, %cst_5 {dimension_numbers = #tpu.dot_dimension_numbers<[1], [0], [0], [1], [0, 0, 1, 1], [], []>} : vector<4x8xf32>, vector<8x256xf32>, vector<4x256xf32> -> vector<4x256xf32>
    %9 = vector.extract_strided_slice %2 {offsets = [2, 0, 0], sizes = [1, 4, 8], strides = [1, 1, 1]} : vector<4x4x8xf32> to vector<1x4x8xf32>
    %10 = vector.shape_cast %9 : vector<1x4x8xf32> to vector<4x8xf32>
    %cst_6 = arith.constant dense<0.000000e+00> : vector<4x256xf32>
    %11 = tpu.matmul %10, %1, %cst_6 {dimension_numbers = #tpu.dot_dimension_numbers<[1], [0], [0], [1], [0, 0, 1, 1], [], []>} : vector<4x8xf32>, vector<8x256xf32>, vector<4x256xf32> -> vector<4x256xf32>
    %12 = vector.extract_strided_slice %2 {offsets = [3, 0, 0], sizes = [1, 4, 8], strides = [1, 1, 1]} : vector<4x4x8xf32> to vector<1x4x8xf32>
    %13 = vector.shape_cast %12 : vector<1x4x8xf32> to vector<4x8xf32>
    %cst_7 = arith.constant dense<0.000000e+00> : vector<4x256xf32>
    %14 = tpu.matmul %13, %1, %cst_7 {dimension_numbers = #tpu.dot_dimension_numbers<[1], [0], [0], [1], [0, 0, 1, 1], [], []>} : vector<4x8xf32>, vector<8x256xf32>, vector<4x256xf32> -> vector<4x256xf32>
    %c0_8 = arith.constant 0 : index
    %c0_9 = arith.constant 0 : index
    %15 = vector.load %arg5[%c0_8, %c0_9] : memref<4x1xf32, #tpu.memory_space<vmem>>, vector<4x1xf32>
    %c0_10 = arith.constant 0 : index
    %c0_11 = arith.constant 0 : index
    %c0_12 = arith.constant 0 : index
    %16 = vector.load %arg6[%c0_10, %c0_11, %c0_12] : memref<2x16x32xf32, #tpu.memory_space<vmem>>, vector<1x16x32xf32>
    %17 = vector.shape_cast %16 : vector<1x16x32xf32> to vector<16x32xf32>
    %c1 = arith.constant 1 : index
    %c0_13 = arith.constant 0 : index
    %c0_14 = arith.constant 0 : index
    %18 = vector.load %arg6[%c1, %c0_13, %c0_14] : memref<2x16x32xf32, #tpu.memory_space<vmem>>, vector<1x16x32xf32>
    %19 = vector.shape_cast %18 : vector<1x16x32xf32> to vector<16x32xf32>
    %20 = vector.extract_strided_slice %5 {offsets = [0, 0], sizes = [4, 16], strides = [1, 1]} : vector<4x256xf32> to vector<4x16xf32>
    %cst_15 = arith.constant dense<0.000000e+00> : vector<4x32xf32>
    %21 = tpu.matmul %20, %17, %cst_15 {dimension_numbers = #tpu.dot_dimension_numbers<[1], [0], [0], [1], [0, 0, 1, 1], [], []>} : vector<4x16xf32>, vector<16x32xf32>, vector<4x32xf32> -> vector<4x32xf32>
    %22 = vector.extract_strided_slice %8 {offsets = [0, 0], sizes = [4, 16], strides = [1, 1]} : vector<4x256xf32> to vector<4x16xf32>
    %cst_16 = arith.constant dense<0.000000e+00> : vector<4x32xf32>
    %23 = tpu.matmul %22, %19, %cst_16 {dimension_numbers = #tpu.dot_dimension_numbers<[1], [0], [0], [1], [0, 0, 1, 1], [], []>} : vector<4x16xf32>, vector<16x32xf32>, vector<4x32xf32> -> vector<4x32xf32>
    %24 = arith.addf %21, %23 : vector<4x32xf32>
    %25 = vector.broadcast %15 : vector<4x1xf32> to vector<4x32xf32>
    %26 = arith.addf %24, %25 : vector<4x32xf32>
    %c0_17 = arith.constant 0 : index
    %c0_18 = arith.constant 0 : index
    %c0_19 = arith.constant 0 : index
    %27 = vector.load %arg3[%c0_17, %c0_18, %c0_19] : memref<1x4x1024xf32, #tpu.memory_space<vmem>>, vector<1x4x32xf32>
    %28 = vector.shape_cast %27 : vector<1x4x32xf32> to vector<4x32xf32>
    %29 = arith.addf %26, %28 : vector<4x32xf32>
    %c0_20 = arith.constant 0 : index
    %c0_21 = arith.constant 0 : index
    %c0_22 = arith.constant 0 : index
    %30 = vector.load %arg7[%c0_20, %c0_21, %c0_22] : memref<1x4x1024xf32, #tpu.memory_space<vmem>>, vector<1x4x32xf32>
    %31 = vector.shape_cast %30 : vector<1x4x32xf32> to vector<4x32xf32>
    %32 = vector.shape_cast %29 : vector<4x32xf32> to vector<1x4x32xf32>
    tpu.vector_store %arg7[%c0_20, %c0_21, %c0_22], %32 {strides = array<i32>} : memref<1x4x1024xf32, #tpu.memory_space<vmem>>, vector<1x4x32xf32>,
    %33 = vector.extract_strided_slice %11 {offsets = [0, 0], sizes = [4, 16], strides = [1, 1]} : vector<4x256xf32> to vector<4x16xf32>
    %cst_23 = arith.constant dense<0.000000e+00> : vector<4x32xf32>
    %34 = tpu.matmul %33, %17, %cst_23 {dimension_numbers = #tpu.dot_dimension_numbers<[1], [0], [0], [1], [0, 0, 1, 1], [], []>} : vector<4x16xf32>, vector<16x32xf32>, vector<4x32xf32> -> vector<4x32xf32>
    %35 = vector.extract_strided_slice %14 {offsets = [0, 0], sizes = [4, 16], strides = [1, 1]} : vector<4x256xf32> to vector<4x16xf32>
    %cst_24 = arith.constant dense<0.000000e+00> : vector<4x32xf32>
    %36 = tpu.matmul %35, %19, %cst_24 {dimension_numbers = #tpu.dot_dimension_numbers<[1], [0], [0], [1], [0, 0, 1, 1], [], []>} : vector<4x16xf32>, vector<16x32xf32>, vector<4x32xf32> -> vector<4x32xf32>
    %37 = arith.addf %34, %36 : vector<4x32xf32>
    %38 = vector.broadcast %15 : vector<4x1xf32> to vector<4x32xf32>
    %39 = arith.addf %37, %38 : vector<4x32xf32>
    %c0_25 = arith.constant 0 : index
    %c0_26 = arith.constant 0 : index
    %c32 = arith.constant 32 : index
    %40 = vector.load %arg3[%c0_25, %c0_26, %c32] : memref<1x4x1024xf32, #tpu.memory_space<vmem>>, vector<1x4x32xf32>
    %41 = vector.shape_cast %40 : vector<1x4x32xf32> to vector<4x32xf32>
    %42 = arith.addf %39, %41 : vector<4x32xf32>
    %c0_27 = arith.constant 0 : index
    %c0_28 = arith.constant 0 : index
    %c32_29 = arith.constant 32 : index
    %43 = vector.load %arg7[%c0_27, %c0_28, %c32_29] : memref<1x4x1024xf32, #tpu.memory_space<vmem>>, vector<1x4x32xf32>
    %44 = vector.shape_cast %43 : vector<1x4x32xf32> to vector<4x32xf32>
    %45 = vector.shape_cast %42 : vector<4x32xf32> to vector<1x4x32xf32>
    tpu.vector_store %arg7[%c0_27, %c0_28, %c32_29], %45 {strides = array<i32>} : memref<1x4x1024xf32, #tpu.memory_space<vmem>>, vector<1x4x32xf32>,
    %46 = vector.extract_strided_slice %5 {offsets = [0, 16], sizes = [4, 16], strides = [1, 1]} : vector<4x256xf32> to vector<4x16xf32>
    %cst_30 = arith.constant dense<0.000000e+00> : vector<4x32xf32>
    %47 = tpu.matmul %46, %17, %cst_30 {dimension_numbers = #tpu.dot_dimension_numbers<[1], [0], [0], [1], [0, 0, 1, 1], [], []>} : vector<4x16xf32>, vector<16x32xf32>, vector<4x32xf32> -> vector<4x32xf32>
    %48 = vector.extract_strided_slice %8 {offsets = [0, 16], sizes = [4, 16], strides = [1, 1]} : vector<4x256xf32> to vector<4x16xf32>
    %cst_31 = arith.constant dense<0.000000e+00> : vector<4x32xf32>
    %49 = tpu.matmul %48, %19, %cst_31 {dimension_numbers = #tpu.dot_dimension_numbers<[1], [0], [0], [1], [0, 0, 1, 1], [], []>} : vector<4x16xf32>, vector<16x32xf32>, vector<4x32xf32> -> vector<4x32xf32>
    %50 = arith.addf %47, %49 : vector<4x32xf32>
    %51 = vector.broadcast %15 : vector<4x1xf32> to vector<4x32xf32>
    %52 = arith.addf %50, %51 : vector<4x32xf32>
    %c0_32 = arith.constant 0 : index
    %c0_33 = arith.constant 0 : index
    %c64 = arith.constant 64 : index
    %53 = vector.load %arg3[%c0_32, %c0_33, %c64] : memref<1x4x1024xf32, #tpu.memory_space<vmem>>, vector<1x4x32xf32>
    %54 = vector.shape_cast %53 : vector<1x4x32xf32> to vector<4x32xf32>
    %55 = arith.addf %52, %54 : vector<4x32xf32>
    %c0_34 = arith.constant 0 : index
    %c0_35 = arith.constant 0 : index
    %c64_36 = arith.constant 64 : index
    %56 = vector.load %arg7[%c0_34, %c0_35, %c64_36] : memref<1x4x1024xf32, #tpu.memory_space<vmem>>, vector<1x4x32xf32>
    %57 = vector.shape_cast %56 : vector<1x4x32xf32> to vector<4x32xf32>
    %58 = vector.shape_cast %55 : vector<4x32xf32> to vector<1x4x32xf32>
    tpu.vector_store %arg7[%c0_34, %c0_35, %c64_36], %58 {strides = array<i32>} : memref<1x4x1024xf32, #tpu.memory_space<vmem>>, vector<1x4x32xf32>,
    %59 = vector.extract_strided_slice %11 {offsets = [0, 16], sizes = [4, 16], strides = [1, 1]} : vector<4x256xf32> to vector<4x16xf32>
    %cst_37 = arith.constant dense<0.000000e+00> : vector<4x32xf32>
    %60 = tpu.matmul %59, %17, %cst_37 {dimension_numbers = #tpu.dot_dimension_numbers<[1], [0], [0], [1], [0, 0, 1, 1], [], []>} : vector<4x16xf32>, vector<16x32xf32>, vector<4x32xf32> -> vector<4x32xf32>
    %61 = vector.extract_strided_slice %14 {offsets = [0, 16], sizes = [4, 16], strides = [1, 1]} : vector<4x256xf32> to vector<4x16xf32>
    %cst_38 = arith.constant dense<0.000000e+00> : vector<4x32xf32>
    %62 = tpu.matmul %61, %19, %cst_38 {dimension_numbers = #tpu.dot_dimension_numbers<[1], [0], [0], [1], [0, 0, 1, 1], [], []>} : vector<4x16xf32>, vector<16x32xf32>, vector<4x32xf32> -> vector<4x32xf32>
    %63 = arith.addf %60, %62 : vector<4x32xf32>
    %64 = vector.broadcast %15 : vector<4x1xf32> to vector<4x32xf32>
    %65 = arith.addf %63, %64 : vector<4x32xf32>
    %c0_39 = arith.constant 0 : index
    %c0_40 = arith.constant 0 : index
    %c96 = arith.constant 96 : index
    %66 = vector.load %arg3[%c0_39, %c0_40, %c96] : memref<1x4x1024xf32, #tpu.memory_space<vmem>>, vector<1x4x32xf32>
    %67 = vector.shape_cast %66 : vector<1x4x32xf32> to vector<4x32xf32>
    %68 = arith.addf %65, %67 : vector<4x32xf32>
    %c0_41 = arith.constant 0 : index
    %c0_42 = arith.constant 0 : index
    %c96_43 = arith.constant 96 : index
    %69 = vector.load %arg7[%c0_41, %c0_42, %c96_43] : memref<1x4x1024xf32, #tpu.memory_space<vmem>>, vector<1x4x32xf32>
    %70 = vector.shape_cast %69 : vector<1x4x32xf32> to vector<4x32xf32>
    %71 = vector.shape_cast %68 : vector<4x32xf32> to vector<1x4x32xf32>
    tpu.vector_store %arg7[%c0_41, %c0_42, %c96_43], %71 {strides = array<i32>} : memref<1x4x1024xf32, #tpu.memory_space<vmem>>, vector<1x4x32xf32>,
    %72 = vector.extract_strided_slice %5 {offsets = [0, 32], sizes = [4, 16], strides = [1, 1]} : vector<4x256xf32> to vector<4x16xf32>
    %cst_44 = arith.constant dense<0.000000e+00> : vector<4x32xf32>
    %73 = tpu.matmul %72, %17, %cst_44 {dimension_numbers = #tpu.dot_dimension_numbers<[1], [0], [0], [1], [0, 0, 1, 1], [], []>} : vector<4x16xf32>, vector<16x32xf32>, vector<4x32xf32> -> vector<4x32xf32>
    %74 = vector.extract_strided_slice %8 {offsets = [0, 32], sizes = [4, 16], strides = [1, 1]} : vector<4x256xf32> to vector<4x16xf32>
    %cst_45 = arith.constant dense<0.000000e+00> : vector<4x32xf32>
    %75 = tpu.matmul %74, %19, %cst_45 {dimension_numbers = #tpu.dot_dimension_numbers<[1], [0], [0], [1], [0, 0, 1, 1], [], []>} : vector<4x16xf32>, vector<16x32xf32>, vector<4x32xf32> -> vector<4x32xf32>
    %76 = arith.addf %73, %75 : vector<4x32xf32>
    %77 = vector.broadcast %15 : vector<4x1xf32> to vector<4x32xf32>
    %78 = arith.addf %76, %77 : vector<4x32xf32>
    %c0_46 = arith.constant 0 : index
    %c0_47 = arith.constant 0 : index
    %c128 = arith.constant 128 : index
    %79 = vector.load %arg3[%c0_46, %c0_47, %c128] : memref<1x4x1024xf32, #tpu.memory_space<vmem>>, vector<1x4x32xf32>
    %80 = vector.shape_cast %79 : vector<1x4x32xf32> to vector<4x32xf32>
    %81 = arith.addf %78, %80 : vector<4x32xf32>
    %c0_48 = arith.constant 0 : index
    %c0_49 = arith.constant 0 : index
    %c128_50 = arith.constant 128 : index
    %82 = vector.load %arg7[%c0_48, %c0_49, %c128_50] : memref<1x4x1024xf32, #tpu.memory_space<vmem>>, vector<1x4x32xf32>
    %83 = vector.shape_cast %82 : vector<1x4x32xf32> to vector<4x32xf32>
    %84 = vector.shape_cast %81 : vector<4x32xf32> to vector<1x4x32xf32>
    tpu.vector_store %arg7[%c0_48, %c0_49, %c128_50], %84 {strides = array<i32>} : memref<1x4x1024xf32, #tpu.memory_space<vmem>>, vector<1x4x32xf32>,
    %85 = vector.extract_strided_slice %11 {offsets = [0, 32], sizes = [4, 16], strides = [1, 1]} : vector<4x256xf32> to vector<4x16xf32>
    %cst_51 = arith.constant dense<0.000000e+00> : vector<4x32xf32>
    %86 = tpu.matmul %85, %17, %cst_51 {dimension_numbers = #tpu.dot_dimension_numbers<[1], [0], [0], [1], [0, 0, 1, 1], [], []>} : vector<4x16xf32>, vector<16x32xf32>, vector<4x32xf32> -> vector<4x32xf32>
    %87 = vector.extract_strided_slice %14 {offsets = [0, 32], sizes = [4, 16], strides = [1, 1]} : vector<4x256xf32> to vector<4x16xf32>
    %cst_52 = arith.constant dense<0.000000e+00> : vector<4x32xf32>
    %88 = tpu.matmul %87, %19, %cst_52 {dimension_numbers = #tpu.dot_dimension_numbers<[1], [0], [0], [1], [0, 0, 1, 1], [], []>} : vector<4x16xf32>, vector<16x32xf32>, vector<4x32xf32> -> vector<4x32xf32>
    %89 = arith.addf %86, %88 : vector<4x32xf32>
    %90 = vector.broadcast %15 : vector<4x1xf32> to vector<4x32xf32>
    %91 = arith.addf %89, %90 : vector<4x32xf32>
    %c0_53 = arith.constant 0 : index
    %c0_54 = arith.constant 0 : index
    %c160 = arith.constant 160 : index
    %92 = vector.load %arg3[%c0_53, %c0_54, %c160] : memref<1x4x1024xf32, #tpu.memory_space<vmem>>, vector<1x4x32xf32>
    %93 = vector.shape_cast %92 : vector<1x4x32xf32> to vector<4x32xf32>
    %94 = arith.addf %91, %93 : vector<4x32xf32>
    %c0_55 = arith.constant 0 : index
    %c0_56 = arith.constant 0 : index
    %c160_57 = arith.constant 160 : index
    %95 = vector.load %arg7[%c0_55, %c0_56, %c160_57] : memref<1x4x1024xf32, #tpu.memory_space<vmem>>, vector<1x4x32xf32>
    %96 = vector.shape_cast %95 : vector<1x4x32xf32> to vector<4x32xf32>
    %97 = vector.shape_cast %94 : vector<4x32xf32> to vector<1x4x32xf32>
    tpu.vector_store %arg7[%c0_55, %c0_56, %c160_57], %97 {strides = array<i32>} : memref<1x4x1024xf32, #tpu.memory_space<vmem>>, vector<1x4x32xf32>,
    %98 = vector.extract_strided_slice %5 {offsets = [0, 48], sizes = [4, 16], strides = [1, 1]} : vector<4x256xf32> to vector<4x16xf32>
    %cst_58 = arith.constant dense<0.000000e+00> : vector<4x32xf32>
    %99 = tpu.matmul %98, %17, %cst_58 {dimension_numbers = #tpu.dot_dimension_numbers<[1], [0], [0], [1], [0, 0, 1, 1], [], []>} : vector<4x16xf32>, vector<16x32xf32>, vector<4x32xf32> -> vector<4x32xf32>
    %100 = vector.extract_strided_slice %8 {offsets = [0, 48], sizes = [4, 16], strides = [1, 1]} : vector<4x256xf32> to vector<4x16xf32>
    %cst_59 = arith.constant dense<0.000000e+00> : vector<4x32xf32>
    %101 = tpu.matmul %100, %19, %cst_59 {dimension_numbers = #tpu.dot_dimension_numbers<[1], [0], [0], [1], [0, 0, 1, 1], [], []>} : vector<4x16xf32>, vector<16x32xf32>, vector<4x32xf32> -> vector<4x32xf32>
    %102 = arith.addf %99, %101 : vector<4x32xf32>
    %103 = vector.broadcast %15 : vector<4x1xf32> to vector<4x32xf32>
    %104 = arith.addf %102, %103 : vector<4x32xf32>
    %c0_60 = arith.constant 0 : index
    %c0_61 = arith.constant 0 : index
    %c192 = arith.constant 192 : index
    %105 = vector.load %arg3[%c0_60, %c0_61, %c192] : memref<1x4x1024xf32, #tpu.memory_space<vmem>>, vector<1x4x32xf32>
    %106 = vector.shape_cast %105 : vector<1x4x32xf32> to vector<4x32xf32>
    %107 = arith.addf %104, %106 : vector<4x32xf32>
    %c0_62 = arith.constant 0 : index
    %c0_63 = arith.constant 0 : index
    %c192_64 = arith.constant 192 : index
    %108 = vector.load %arg7[%c0_62, %c0_63, %c192_64] : memref<1x4x1024xf32, #tpu.memory_space<vmem>>, vector<1x4x32xf32>
    %109 = vector.shape_cast %108 : vector<1x4x32xf32> to vector<4x32xf32>
    %110 = vector.shape_cast %107 : vector<4x32xf32> to vector<1x4x32xf32>
    tpu.vector_store %arg7[%c0_62, %c0_63, %c192_64], %110 {strides = array<i32>} : memref<1x4x1024xf32, #tpu.memory_space<vmem>>, vector<1x4x32xf32>,
    %111 = vector.extract_strided_slice %11 {offsets = [0, 48], sizes = [4, 16], strides = [1, 1]} : vector<4x256xf32> to vector<4x16xf32>
    %cst_65 = arith.constant dense<0.000000e+00> : vector<4x32xf32>
    %112 = tpu.matmul %111, %17, %cst_65 {dimension_numbers = #tpu.dot_dimension_numbers<[1], [0], [0], [1], [0, 0, 1, 1], [], []>} : vector<4x16xf32>, vector<16x32xf32>, vector<4x32xf32> -> vector<4x32xf32>
    %113 = vector.extract_strided_slice %14 {offsets = [0, 48], sizes = [4, 16], strides = [1, 1]} : vector<4x256xf32> to vector<4x16xf32>
    %cst_66 = arith.constant dense<0.000000e+00> : vector<4x32xf32>
    %114 = tpu.matmul %113, %19, %cst_66 {dimension_numbers = #tpu.dot_dimension_numbers<[1], [0], [0], [1], [0, 0, 1, 1], [], []>} : vector<4x16xf32>, vector<16x32xf32>, vector<4x32xf32> -> vector<4x32xf32>
    %115 = arith.addf %112, %114 : vector<4x32xf32>
    %116 = vector.broadcast %15 : vector<4x1xf32> to vector<4x32xf32>
    %117 = arith.addf %115, %116 : vector<4x32xf32>
    %c0_67 = arith.constant 0 : index
    %c0_68 = arith.constant 0 : index
    %c224 = arith.constant 224 : index
    %118 = vector.load %arg3[%c0_67, %c0_68, %c224] : memref<1x4x1024xf32, #tpu.memory_space<vmem>>, vector<1x4x32xf32>
    %119 = vector.shape_cast %118 : vector<1x4x32xf32> to vector<4x32xf32>
    %120 = arith.addf %117, %119 : vector<4x32xf32>
    %c0_69 = arith.constant 0 : index
    %c0_70 = arith.constant 0 : index
    %c224_71 = arith.constant 224 : index
    %121 = vector.load %arg7[%c0_69, %c0_70, %c224_71] : memref<1x4x1024xf32, #tpu.memory_space<vmem>>, vector<1x4x32xf32>
    %122 = vector.shape_cast %121 : vector<1x4x32xf32> to vector<4x32xf32>
    %123 = vector.shape_cast %120 : vector<4x32xf32> to vector<1x4x32xf32>
    tpu.vector_store %arg7[%c0_69, %c0_70, %c224_71], %123 {strides = array<i32>} : memref<1x4x1024xf32, #tpu.memory_space<vmem>>, vector<1x4x32xf32>,
    %124 = vector.extract_strided_slice %5 {offsets = [0, 64], sizes = [4, 16], strides = [1, 1]} : vector<4x256xf32> to vector<4x16xf32>
    %cst_72 = arith.constant dense<0.000000e+00> : vector<4x32xf32>
    %125 = tpu.matmul %124, %17, %cst_72 {dimension_numbers = #tpu.dot_dimension_numbers<[1], [0], [0], [1], [0, 0, 1, 1], [], []>} : vector<4x16xf32>, vector<16x32xf32>, vector<4x32xf32> -> vector<4x32xf32>
    %126 = vector.extract_strided_slice %8 {offsets = [0, 64], sizes = [4, 16], strides = [1, 1]} : vector<4x256xf32> to vector<4x16xf32>
    %cst_73 = arith.constant dense<0.000000e+00> : vector<4x32xf32>
    %127 = tpu.matmul %126, %19, %cst_73 {dimension_numbers = #tpu.dot_dimension_numbers<[1], [0], [0], [1], [0, 0, 1, 1], [], []>} : vector<4x16xf32>, vector<16x32xf32>, vector<4x32xf32> -> vector<4x32xf32>
    %128 = arith.addf %125, %127 : vector<4x32xf32>
    %129 = vector.broadcast %15 : vector<4x1xf32> to vector<4x32xf32>
    %130 = arith.addf %128, %129 : vector<4x32xf32>
    %c0_74 = arith.constant 0 : index
    %c0_75 = arith.constant 0 : index
    %c256 = arith.constant 256 : index
    %131 = vector.load %arg3[%c0_74, %c0_75, %c256] : memref<1x4x1024xf32, #tpu.memory_space<vmem>>, vector<1x4x32xf32>
    %132 = vector.shape_cast %131 : vector<1x4x32xf32> to vector<4x32xf32>
    %133 = arith.addf %130, %132 : vector<4x32xf32>
    %c0_76 = arith.constant 0 : index
    %c0_77 = arith.constant 0 : index
    %c256_78 = arith.constant 256 : index
    %134 = vector.load %arg7[%c0_76, %c0_77, %c256_78] : memref<1x4x1024xf32, #tpu.memory_space<vmem>>, vector<1x4x32xf32>
    %135 = vector.shape_cast %134 : vector<1x4x32xf32> to vector<4x32xf32>
    %136 = vector.shape_cast %133 : vector<4x32xf32> to vector<1x4x32xf32>
    tpu.vector_store %arg7[%c0_76, %c0_77, %c256_78], %136 {strides = array<i32>} : memref<1x4x1024xf32, #tpu.memory_space<vmem>>, vector<1x4x32xf32>,
    %137 = vector.extract_strided_slice %11 {offsets = [0, 64], sizes = [4, 16], strides = [1, 1]} : vector<4x256xf32> to vector<4x16xf32>
    %cst_79 = arith.constant dense<0.000000e+00> : vector<4x32xf32>
    %138 = tpu.matmul %137, %17, %cst_79 {dimension_numbers = #tpu.dot_dimension_numbers<[1], [0], [0], [1], [0, 0, 1, 1], [], []>} : vector<4x16xf32>, vector<16x32xf32>, vector<4x32xf32> -> vector<4x32xf32>
    %139 = vector.extract_strided_slice %14 {offsets = [0, 64], sizes = [4, 16], strides = [1, 1]} : vector<4x256xf32> to vector<4x16xf32>
    %cst_80 = arith.constant dense<0.000000e+00> : vector<4x32xf32>
    %140 = tpu.matmul %139, %19, %cst_80 {dimension_numbers = #tpu.dot_dimension_numbers<[1], [0], [0], [1], [0, 0, 1, 1], [], []>} : vector<4x16xf32>, vector<16x32xf32>, vector<4x32xf32> -> vector<4x32xf32>
    %141 = arith.addf %138, %140 : vector<4x32xf32>
    %142 = vector.broadcast %15 : vector<4x1xf32> to vector<4x32xf32>
    %143 = arith.addf %141, %142 : vector<4x32xf32>
    %c0_81 = arith.constant 0 : index
    %c0_82 = arith.constant 0 : index
    %c288 = arith.constant 288 : index
    %144 = vector.load %arg3[%c0_81, %c0_82, %c288] : memref<1x4x1024xf32, #tpu.memory_space<vmem>>, vector<1x4x32xf32>
    %145 = vector.shape_cast %144 : vector<1x4x32xf32> to vector<4x32xf32>
    %146 = arith.addf %143, %145 : vector<4x32xf32>
    %c0_83 = arith.constant 0 : index
    %c0_84 = arith.constant 0 : index
    %c288_85 = arith.constant 288 : index
    %147 = vector.load %arg7[%c0_83, %c0_84, %c288_85] : memref<1x4x1024xf32, #tpu.memory_space<vmem>>, vector<1x4x32xf32>
    %148 = vector.shape_cast %147 : vector<1x4x32xf32> to vector<4x32xf32>
    %149 = vector.shape_cast %146 : vector<4x32xf32> to vector<1x4x32xf32>
    tpu.vector_store %arg7[%c0_83, %c0_84, %c288_85], %149 {strides = array<i32>} : memref<1x4x1024xf32, #tpu.memory_space<vmem>>, vector<1x4x32xf32>,
    %150 = vector.extract_strided_slice %5 {offsets = [0, 80], sizes = [4, 16], strides = [1, 1]} : vector<4x256xf32> to vector<4x16xf32>
    %cst_86 = arith.constant dense<0.000000e+00> : vector<4x32xf32>
    %151 = tpu.matmul %150, %17, %cst_86 {dimension_numbers = #tpu.dot_dimension_numbers<[1], [0], [0], [1], [0, 0, 1, 1], [], []>} : vector<4x16xf32>, vector<16x32xf32>, vector<4x32xf32> -> vector<4x32xf32>
    %152 = vector.extract_strided_slice %8 {offsets = [0, 80], sizes = [4, 16], strides = [1, 1]} : vector<4x256xf32> to vector<4x16xf32>
    %cst_87 = arith.constant dense<0.000000e+00> : vector<4x32xf32>
    %153 = tpu.matmul %152, %19, %cst_87 {dimension_numbers = #tpu.dot_dimension_numbers<[1], [0], [0], [1], [0, 0, 1, 1], [], []>} : vector<4x16xf32>, vector<16x32xf32>, vector<4x32xf32> -> vector<4x32xf32>
    %154 = arith.addf %151, %153 : vector<4x32xf32>
    %155 = vector.broadcast %15 : vector<4x1xf32> to vector<4x32xf32>
    %156 = arith.addf %154, %155 : vector<4x32xf32>
    %c0_88 = arith.constant 0 : index
    %c0_89 = arith.constant 0 : index
    %c320 = arith.constant 320 : index
    %157 = vector.load %arg3[%c0_88, %c0_89, %c320] : memref<1x4x1024xf32, #tpu.memory_space<vmem>>, vector<1x4x32xf32>
    %158 = vector.shape_cast %157 : vector<1x4x32xf32> to vector<4x32xf32>
    %159 = arith.addf %156, %158 : vector<4x32xf32>
    %c0_90 = arith.constant 0 : index
    %c0_91 = arith.constant 0 : index
    %c320_92 = arith.constant 320 : index
    %160 = vector.load %arg7[%c0_90, %c0_91, %c320_92] : memref<1x4x1024xf32, #tpu.memory_space<vmem>>, vector<1x4x32xf32>
    %161 = vector.shape_cast %160 : vector<1x4x32xf32> to vector<4x32xf32>
    %162 = vector.shape_cast %159 : vector<4x32xf32> to vector<1x4x32xf32>
    tpu.vector_store %arg7[%c0_90, %c0_91, %c320_92], %162 {strides = array<i32>} : memref<1x4x1024xf32, #tpu.memory_space<vmem>>, vector<1x4x32xf32>,
    %163 = vector.extract_strided_slice %11 {offsets = [0, 80], sizes = [4, 16], strides = [1, 1]} : vector<4x256xf32> to vector<4x16xf32>
    %cst_93 = arith.constant dense<0.000000e+00> : vector<4x32xf32>
    %164 = tpu.matmul %163, %17, %cst_93 {dimension_numbers = #tpu.dot_dimension_numbers<[1], [0], [0], [1], [0, 0, 1, 1], [], []>} : vector<4x16xf32>, vector<16x32xf32>, vector<4x32xf32> -> vector<4x32xf32>
    %165 = vector.extract_strided_slice %14 {offsets = [0, 80], sizes = [4, 16], strides = [1, 1]} : vector<4x256xf32> to vector<4x16xf32>
    %cst_94 = arith.constant dense<0.000000e+00> : vector<4x32xf32>
    %166 = tpu.matmul %165, %19, %cst_94 {dimension_numbers = #tpu.dot_dimension_numbers<[1], [0], [0], [1], [0, 0, 1, 1], [], []>} : vector<4x16xf32>, vector<16x32xf32>, vector<4x32xf32> -> vector<4x32xf32>
    %167 = arith.addf %164, %166 : vector<4x32xf32>
    %168 = vector.broadcast %15 : vector<4x1xf32> to vector<4x32xf32>
    %169 = arith.addf %167, %168 : vector<4x32xf32>
    %c0_95 = arith.constant 0 : index
    %c0_96 = arith.constant 0 : index
    %c352 = arith.constant 352 : index
    %170 = vector.load %arg3[%c0_95, %c0_96, %c352] : memref<1x4x1024xf32, #tpu.memory_space<vmem>>, vector<1x4x32xf32>
    %171 = vector.shape_cast %170 : vector<1x4x32xf32> to vector<4x32xf32>
    %172 = arith.addf %169, %171 : vector<4x32xf32>
    %c0_97 = arith.constant 0 : index
    %c0_98 = arith.constant 0 : index
    %c352_99 = arith.constant 352 : index
    %173 = vector.load %arg7[%c0_97, %c0_98, %c352_99] : memref<1x4x1024xf32, #tpu.memory_space<vmem>>, vector<1x4x32xf32>
    %174 = vector.shape_cast %173 : vector<1x4x32xf32> to vector<4x32xf32>
    %175 = vector.shape_cast %172 : vector<4x32xf32> to vector<1x4x32xf32>
    tpu.vector_store %arg7[%c0_97, %c0_98, %c352_99], %175 {strides = array<i32>} : memref<1x4x1024xf32, #tpu.memory_space<vmem>>, vector<1x4x32xf32>,
    %176 = vector.extract_strided_slice %5 {offsets = [0, 96], sizes = [4, 16], strides = [1, 1]} : vector<4x256xf32> to vector<4x16xf32>
    %cst_100 = arith.constant dense<0.000000e+00> : vector<4x32xf32>
    %177 = tpu.matmul %176, %17, %cst_100 {dimension_numbers = #tpu.dot_dimension_numbers<[1], [0], [0], [1], [0, 0, 1, 1], [], []>} : vector<4x16xf32>, vector<16x32xf32>, vector<4x32xf32> -> vector<4x32xf32>
    %178 = vector.extract_strided_slice %8 {offsets = [0, 96], sizes = [4, 16], strides = [1, 1]} : vector<4x256xf32> to vector<4x16xf32>
    %cst_101 = arith.constant dense<0.000000e+00> : vector<4x32xf32>
    %179 = tpu.matmul %178, %19, %cst_101 {dimension_numbers = #tpu.dot_dimension_numbers<[1], [0], [0], [1], [0, 0, 1, 1], [], []>} : vector<4x16xf32>, vector<16x32xf32>, vector<4x32xf32> -> vector<4x32xf32>
    %180 = arith.addf %177, %179 : vector<4x32xf32>
    %181 = vector.broadcast %15 : vector<4x1xf32> to vector<4x32xf32>
    %182 = arith.addf %180, %181 : vector<4x32xf32>
    %c0_102 = arith.constant 0 : index
    %c0_103 = arith.constant 0 : index
    %c384 = arith.constant 384 : index
    %183 = vector.load %arg3[%c0_102, %c0_103, %c384] : memref<1x4x1024xf32, #tpu.memory_space<vmem>>, vector<1x4x32xf32>
    %184 = vector.shape_cast %183 : vector<1x4x32xf32> to vector<4x32xf32>
    %185 = arith.addf %182, %184 : vector<4x32xf32>
    %c0_104 = arith.constant 0 : index
    %c0_105 = arith.constant 0 : index
    %c384_106 = arith.constant 384 : index
    %186 = vector.load %arg7[%c0_104, %c0_105, %c384_106] : memref<1x4x1024xf32, #tpu.memory_space<vmem>>, vector<1x4x32xf32>
    %187 = vector.shape_cast %186 : vector<1x4x32xf32> to vector<4x32xf32>
    %188 = vector.shape_cast %185 : vector<4x32xf32> to vector<1x4x32xf32>
    tpu.vector_store %arg7[%c0_104, %c0_105, %c384_106], %188 {strides = array<i32>} : memref<1x4x1024xf32, #tpu.memory_space<vmem>>, vector<1x4x32xf32>,
    %189 = vector.extract_strided_slice %11 {offsets = [0, 96], sizes = [4, 16], strides = [1, 1]} : vector<4x256xf32> to vector<4x16xf32>
    %cst_107 = arith.constant dense<0.000000e+00> : vector<4x32xf32>
    %190 = tpu.matmul %189, %17, %cst_107 {dimension_numbers = #tpu.dot_dimension_numbers<[1], [0], [0], [1], [0, 0, 1, 1], [], []>} : vector<4x16xf32>, vector<16x32xf32>, vector<4x32xf32> -> vector<4x32xf32>
    %191 = vector.extract_strided_slice %14 {offsets = [0, 96], sizes = [4, 16], strides = [1, 1]} : vector<4x256xf32> to vector<4x16xf32>
    %cst_108 = arith.constant dense<0.000000e+00> : vector<4x32xf32>
    %192 = tpu.matmul %191, %19, %cst_108 {dimension_numbers = #tpu.dot_dimension_numbers<[1], [0], [0], [1], [0, 0, 1, 1], [], []>} : vector<4x16xf32>, vector<16x32xf32>, vector<4x32xf32> -> vector<4x32xf32>
    %193 = arith.addf %190, %192 : vector<4x32xf32>
    %194 = vector.broadcast %15 : vector<4x1xf32> to vector<4x32xf32>
    %195 = arith.addf %193, %194 : vector<4x32xf32>
    %c0_109 = arith.constant 0 : index
    %c0_110 = arith.constant 0 : index
    %c416 = arith.constant 416 : index
    %196 = vector.load %arg3[%c0_109, %c0_110, %c416] : memref<1x4x1024xf32, #tpu.memory_space<vmem>>, vector<1x4x32xf32>
    %197 = vector.shape_cast %196 : vector<1x4x32xf32> to vector<4x32xf32>
    %198 = arith.addf %195, %197 : vector<4x32xf32>
    %c0_111 = arith.constant 0 : index
    %c0_112 = arith.constant 0 : index
    %c416_113 = arith.constant 416 : index
    %199 = vector.load %arg7[%c0_111, %c0_112, %c416_113] : memref<1x4x1024xf32, #tpu.memory_space<vmem>>, vector<1x4x32xf32>
    %200 = vector.shape_cast %199 : vector<1x4x32xf32> to vector<4x32xf32>
    %201 = vector.shape_cast %198 : vector<4x32xf32> to vector<1x4x32xf32>
    tpu.vector_store %arg7[%c0_111, %c0_112, %c416_113], %201 {strides = array<i32>} : memref<1x4x1024xf32, #tpu.memory_space<vmem>>, vector<1x4x32xf32>,
    %202 = vector.extract_strided_slice %5 {offsets = [0, 112], sizes = [4, 16], strides = [1, 1]} : vector<4x256xf32> to vector<4x16xf32>
    %cst_114 = arith.constant dense<0.000000e+00> : vector<4x32xf32>
    %203 = tpu.matmul %202, %17, %cst_114 {dimension_numbers = #tpu.dot_dimension_numbers<[1], [0], [0], [1], [0, 0, 1, 1], [], []>} : vector<4x16xf32>, vector<16x32xf32>, vector<4x32xf32> -> vector<4x32xf32>
    %204 = vector.extract_strided_slice %8 {offsets = [0, 112], sizes = [4, 16], strides = [1, 1]} : vector<4x256xf32> to vector<4x16xf32>
    %cst_115 = arith.constant dense<0.000000e+00> : vector<4x32xf32>
    %205 = tpu.matmul %204, %19, %cst_115 {dimension_numbers = #tpu.dot_dimension_numbers<[1], [0], [0], [1], [0, 0, 1, 1], [], []>} : vector<4x16xf32>, vector<16x32xf32>, vector<4x32xf32> -> vector<4x32xf32>
    %206 = arith.addf %203, %205 : vector<4x32xf32>
    %207 = vector.broadcast %15 : vector<4x1xf32> to vector<4x32xf32>
    %208 = arith.addf %206, %207 : vector<4x32xf32>
    %c0_116 = arith.constant 0 : index
    %c0_117 = arith.constant 0 : index
    %c448 = arith.constant 448 : index
    %209 = vector.load %arg3[%c0_116, %c0_117, %c448] : memref<1x4x1024xf32, #tpu.memory_space<vmem>>, vector<1x4x32xf32>
    %210 = vector.shape_cast %209 : vector<1x4x32xf32> to vector<4x32xf32>
    %211 = arith.addf %208, %210 : vector<4x32xf32>
    %c0_118 = arith.constant 0 : index
    %c0_119 = arith.constant 0 : index
    %c448_120 = arith.constant 448 : index
    %212 = vector.load %arg7[%c0_118, %c0_119, %c448_120] : memref<1x4x1024xf32, #tpu.memory_space<vmem>>, vector<1x4x32xf32>
    %213 = vector.shape_cast %212 : vector<1x4x32xf32> to vector<4x32xf32>
    %214 = vector.shape_cast %211 : vector<4x32xf32> to vector<1x4x32xf32>
    tpu.vector_store %arg7[%c0_118, %c0_119, %c448_120], %214 {strides = array<i32>} : memref<1x4x1024xf32, #tpu.memory_space<vmem>>, vector<1x4x32xf32>,
    %215 = vector.extract_strided_slice %11 {offsets = [0, 112], sizes = [4, 16], strides = [1, 1]} : vector<4x256xf32> to vector<4x16xf32>
    %cst_121 = arith.constant dense<0.000000e+00> : vector<4x32xf32>
    %216 = tpu.matmul %215, %17, %cst_121 {dimension_numbers = #tpu.dot_dimension_numbers<[1], [0], [0], [1], [0, 0, 1, 1], [], []>} : vector<4x16xf32>, vector<16x32xf32>, vector<4x32xf32> -> vector<4x32xf32>
    %217 = vector.extract_strided_slice %14 {offsets = [0, 112], sizes = [4, 16], strides = [1, 1]} : vector<4x256xf32> to vector<4x16xf32>
    %cst_122 = arith.constant dense<0.000000e+00> : vector<4x32xf32>
    %218 = tpu.matmul %217, %19, %cst_122 {dimension_numbers = #tpu.dot_dimension_numbers<[1], [0], [0], [1], [0, 0, 1, 1], [], []>} : vector<4x16xf32>, vector<16x32xf32>, vector<4x32xf32> -> vector<4x32xf32>
    %219 = arith.addf %216, %218 : vector<4x32xf32>
    %220 = vector.broadcast %15 : vector<4x1xf32> to vector<4x32xf32>
    %221 = arith.addf %219, %220 : vector<4x32xf32>
    %c0_123 = arith.constant 0 : index
    %c0_124 = arith.constant 0 : index
    %c480 = arith.constant 480 : index
    %222 = vector.load %arg3[%c0_123, %c0_124, %c480] : memref<1x4x1024xf32, #tpu.memory_space<vmem>>, vector<1x4x32xf32>
    %223 = vector.shape_cast %222 : vector<1x4x32xf32> to vector<4x32xf32>
    %224 = arith.addf %221, %223 : vector<4x32xf32>
    %c0_125 = arith.constant 0 : index
    %c0_126 = arith.constant 0 : index
    %c480_127 = arith.constant 480 : index
    %225 = vector.load %arg7[%c0_125, %c0_126, %c480_127] : memref<1x4x1024xf32, #tpu.memory_space<vmem>>, vector<1x4x32xf32>
    %226 = vector.shape_cast %225 : vector<1x4x32xf32> to vector<4x32xf32>
    %227 = vector.shape_cast %224 : vector<4x32xf32> to vector<1x4x32xf32>
    tpu.vector_store %arg7[%c0_125, %c0_126, %c480_127], %227 {strides = array<i32>} : memref<1x4x1024xf32, #tpu.memory_space<vmem>>, vector<1x4x32xf32>,
    %228 = vector.extract_strided_slice %5 {offsets = [0, 128], sizes = [4, 16], strides = [1, 1]} : vector<4x256xf32> to vector<4x16xf32>
    %cst_128 = arith.constant dense<0.000000e+00> : vector<4x32xf32>
    %229 = tpu.matmul %228, %17, %cst_128 {dimension_numbers = #tpu.dot_dimension_numbers<[1], [0], [0], [1], [0, 0, 1, 1], [], []>} : vector<4x16xf32>, vector<16x32xf32>, vector<4x32xf32> -> vector<4x32xf32>
    %230 = vector.extract_strided_slice %8 {offsets = [0, 128], sizes = [4, 16], strides = [1, 1]} : vector<4x256xf32> to vector<4x16xf32>
    %cst_129 = arith.constant dense<0.000000e+00> : vector<4x32xf32>
    %231 = tpu.matmul %230, %19, %cst_129 {dimension_numbers = #tpu.dot_dimension_numbers<[1], [0], [0], [1], [0, 0, 1, 1], [], []>} : vector<4x16xf32>, vector<16x32xf32>, vector<4x32xf32> -> vector<4x32xf32>
    %232 = arith.addf %229, %231 : vector<4x32xf32>
    %233 = vector.broadcast %15 : vector<4x1xf32> to vector<4x32xf32>
    %234 = arith.addf %232, %233 : vector<4x32xf32>
    %c0_130 = arith.constant 0 : index
    %c0_131 = arith.constant 0 : index
    %c512 = arith.constant 512 : index
    %235 = vector.load %arg3[%c0_130, %c0_131, %c512] : memref<1x4x1024xf32, #tpu.memory_space<vmem>>, vector<1x4x32xf32>
    %236 = vector.shape_cast %235 : vector<1x4x32xf32> to vector<4x32xf32>
    %237 = arith.addf %234, %236 : vector<4x32xf32>
    %c0_132 = arith.constant 0 : index
    %c0_133 = arith.constant 0 : index
    %c512_134 = arith.constant 512 : index
    %238 = vector.load %arg7[%c0_132, %c0_133, %c512_134] : memref<1x4x1024xf32, #tpu.memory_space<vmem>>, vector<1x4x32xf32>
    %239 = vector.shape_cast %238 : vector<1x4x32xf32> to vector<4x32xf32>
    %240 = vector.shape_cast %237 : vector<4x32xf32> to vector<1x4x32xf32>
    tpu.vector_store %arg7[%c0_132, %c0_133, %c512_134], %240 {strides = array<i32>} : memref<1x4x1024xf32, #tpu.memory_space<vmem>>, vector<1x4x32xf32>,
    %241 = vector.extract_strided_slice %11 {offsets = [0, 128], sizes = [4, 16], strides = [1, 1]} : vector<4x256xf32> to vector<4x16xf32>
    %cst_135 = arith.constant dense<0.000000e+00> : vector<4x32xf32>
    %242 = tpu.matmul %241, %17, %cst_135 {dimension_numbers = #tpu.dot_dimension_numbers<[1], [0], [0], [1], [0, 0, 1, 1], [], []>} : vector<4x16xf32>, vector<16x32xf32>, vector<4x32xf32> -> vector<4x32xf32>
    %243 = vector.extract_strided_slice %14 {offsets = [0, 128], sizes = [4, 16], strides = [1, 1]} : vector<4x256xf32> to vector<4x16xf32>
    %cst_136 = arith.constant dense<0.000000e+00> : vector<4x32xf32>
    %244 = tpu.matmul %243, %19, %cst_136 {dimension_numbers = #tpu.dot_dimension_numbers<[1], [0], [0], [1], [0, 0, 1, 1], [], []>} : vector<4x16xf32>, vector<16x32xf32>, vector<4x32xf32> -> vector<4x32xf32>
    %245 = arith.addf %242, %244 : vector<4x32xf32>
    %246 = vector.broadcast %15 : vector<4x1xf32> to vector<4x32xf32>
    %247 = arith.addf %245, %246 : vector<4x32xf32>
    %c0_137 = arith.constant 0 : index
    %c0_138 = arith.constant 0 : index
    %c544 = arith.constant 544 : index
    %248 = vector.load %arg3[%c0_137, %c0_138, %c544] : memref<1x4x1024xf32, #tpu.memory_space<vmem>>, vector<1x4x32xf32>
    %249 = vector.shape_cast %248 : vector<1x4x32xf32> to vector<4x32xf32>
    %250 = arith.addf %247, %249 : vector<4x32xf32>
    %c0_139 = arith.constant 0 : index
    %c0_140 = arith.constant 0 : index
    %c544_141 = arith.constant 544 : index
    %251 = vector.load %arg7[%c0_139, %c0_140, %c544_141] : memref<1x4x1024xf32, #tpu.memory_space<vmem>>, vector<1x4x32xf32>
    %252 = vector.shape_cast %251 : vector<1x4x32xf32> to vector<4x32xf32>
    %253 = vector.shape_cast %250 : vector<4x32xf32> to vector<1x4x32xf32>
    tpu.vector_store %arg7[%c0_139, %c0_140, %c544_141], %253 {strides = array<i32>} : memref<1x4x1024xf32, #tpu.memory_space<vmem>>, vector<1x4x32xf32>,
    %254 = vector.extract_strided_slice %5 {offsets = [0, 144], sizes = [4, 16], strides = [1, 1]} : vector<4x256xf32> to vector<4x16xf32>
    %cst_142 = arith.constant dense<0.000000e+00> : vector<4x32xf32>
    %255 = tpu.matmul %254, %17, %cst_142 {dimension_numbers = #tpu.dot_dimension_numbers<[1], [0], [0], [1], [0, 0, 1, 1], [], []>} : vector<4x16xf32>, vector<16x32xf32>, vector<4x32xf32> -> vector<4x32xf32>
    %256 = vector.extract_strided_slice %8 {offsets = [0, 144], sizes = [4, 16], strides = [1, 1]} : vector<4x256xf32> to vector<4x16xf32>
    %cst_143 = arith.constant dense<0.000000e+00> : vector<4x32xf32>
    %257 = tpu.matmul %256, %19, %cst_143 {dimension_numbers = #tpu.dot_dimension_numbers<[1], [0], [0], [1], [0, 0, 1, 1], [], []>} : vector<4x16xf32>, vector<16x32xf32>, vector<4x32xf32> -> vector<4x32xf32>
    %258 = arith.addf %255, %257 : vector<4x32xf32>
    %259 = vector.broadcast %15 : vector<4x1xf32> to vector<4x32xf32>
    %260 = arith.addf %258, %259 : vector<4x32xf32>
    %c0_144 = arith.constant 0 : index
    %c0_145 = arith.constant 0 : index
    %c576 = arith.constant 576 : index
    %261 = vector.load %arg3[%c0_144, %c0_145, %c576] : memref<1x4x1024xf32, #tpu.memory_space<vmem>>, vector<1x4x32xf32>
    %262 = vector.shape_cast %261 : vector<1x4x32xf32> to vector<4x32xf32>
    %263 = arith.addf %260, %262 : vector<4x32xf32>
    %c0_146 = arith.constant 0 : index
    %c0_147 = arith.constant 0 : index
    %c576_148 = arith.constant 576 : index
    %264 = vector.load %arg7[%c0_146, %c0_147, %c576_148] : memref<1x4x1024xf32, #tpu.memory_space<vmem>>, vector<1x4x32xf32>
    %265 = vector.shape_cast %264 : vector<1x4x32xf32> to vector<4x32xf32>
    %266 = vector.shape_cast %263 : vector<4x32xf32> to vector<1x4x32xf32>
    tpu.vector_store %arg7[%c0_146, %c0_147, %c576_148], %266 {strides = array<i32>} : memref<1x4x1024xf32, #tpu.memory_space<vmem>>, vector<1x4x32xf32>,
    %267 = vector.extract_strided_slice %11 {offsets = [0, 144], sizes = [4, 16], strides = [1, 1]} : vector<4x256xf32> to vector<4x16xf32>
    %cst_149 = arith.constant dense<0.000000e+00> : vector<4x32xf32>
    %268 = tpu.matmul %267, %17, %cst_149 {dimension_numbers = #tpu.dot_dimension_numbers<[1], [0], [0], [1], [0, 0, 1, 1], [], []>} : vector<4x16xf32>, vector<16x32xf32>, vector<4x32xf32> -> vector<4x32xf32>
    %269 = vector.extract_strided_slice %14 {offsets = [0, 144], sizes = [4, 16], strides = [1, 1]} : vector<4x256xf32> to vector<4x16xf32>
    %cst_150 = arith.constant dense<0.000000e+00> : vector<4x32xf32>
    %270 = tpu.matmul %269, %19, %cst_150 {dimension_numbers = #tpu.dot_dimension_numbers<[1], [0], [0], [1], [0, 0, 1, 1], [], []>} : vector<4x16xf32>, vector<16x32xf32>, vector<4x32xf32> -> vector<4x32xf32>
    %271 = arith.addf %268, %270 : vector<4x32xf32>
    %272 = vector.broadcast %15 : vector<4x1xf32> to vector<4x32xf32>
    %273 = arith.addf %271, %272 : vector<4x32xf32>
    %c0_151 = arith.constant 0 : index
    %c0_152 = arith.constant 0 : index
    %c608 = arith.constant 608 : index
    %274 = vector.load %arg3[%c0_151, %c0_152, %c608] : memref<1x4x1024xf32, #tpu.memory_space<vmem>>, vector<1x4x32xf32>
    %275 = vector.shape_cast %274 : vector<1x4x32xf32> to vector<4x32xf32>
    %276 = arith.addf %273, %275 : vector<4x32xf32>
    %c0_153 = arith.constant 0 : index
    %c0_154 = arith.constant 0 : index
    %c608_155 = arith.constant 608 : index
    %277 = vector.load %arg7[%c0_153, %c0_154, %c608_155] : memref<1x4x1024xf32, #tpu.memory_space<vmem>>, vector<1x4x32xf32>
    %278 = vector.shape_cast %277 : vector<1x4x32xf32> to vector<4x32xf32>
    %279 = vector.shape_cast %276 : vector<4x32xf32> to vector<1x4x32xf32>
    tpu.vector_store %arg7[%c0_153, %c0_154, %c608_155], %279 {strides = array<i32>} : memref<1x4x1024xf32, #tpu.memory_space<vmem>>, vector<1x4x32xf32>,
    %280 = vector.extract_strided_slice %5 {offsets = [0, 160], sizes = [4, 16], strides = [1, 1]} : vector<4x256xf32> to vector<4x16xf32>
    %cst_156 = arith.constant dense<0.000000e+00> : vector<4x32xf32>
    %281 = tpu.matmul %280, %17, %cst_156 {dimension_numbers = #tpu.dot_dimension_numbers<[1], [0], [0], [1], [0, 0, 1, 1], [], []>} : vector<4x16xf32>, vector<16x32xf32>, vector<4x32xf32> -> vector<4x32xf32>
    %282 = vector.extract_strided_slice %8 {offsets = [0, 160], sizes = [4, 16], strides = [1, 1]} : vector<4x256xf32> to vector<4x16xf32>
    %cst_157 = arith.constant dense<0.000000e+00> : vector<4x32xf32>
    %283 = tpu.matmul %282, %19, %cst_157 {dimension_numbers = #tpu.dot_dimension_numbers<[1], [0], [0], [1], [0, 0, 1, 1], [], []>} : vector<4x16xf32>, vector<16x32xf32>, vector<4x32xf32> -> vector<4x32xf32>
    %284 = arith.addf %281, %283 : vector<4x32xf32>
    %285 = vector.broadcast %15 : vector<4x1xf32> to vector<4x32xf32>
    %286 = arith.addf %284, %285 : vector<4x32xf32>
    %c0_158 = arith.constant 0 : index
    %c0_159 = arith.constant 0 : index
    %c640 = arith.constant 640 : index
    %287 = vector.load %arg3[%c0_158, %c0_159, %c640] : memref<1x4x1024xf32, #tpu.memory_space<vmem>>, vector<1x4x32xf32>
    %288 = vector.shape_cast %287 : vector<1x4x32xf32> to vector<4x32xf32>
    %289 = arith.addf %286, %288 : vector<4x32xf32>
    %c0_160 = arith.constant 0 : index
    %c0_161 = arith.constant 0 : index
    %c640_162 = arith.constant 640 : index
    %290 = vector.load %arg7[%c0_160, %c0_161, %c640_162] : memref<1x4x1024xf32, #tpu.memory_space<vmem>>, vector<1x4x32xf32>
    %291 = vector.shape_cast %290 : vector<1x4x32xf32> to vector<4x32xf32>
    %292 = vector.shape_cast %289 : vector<4x32xf32> to vector<1x4x32xf32>
    tpu.vector_store %arg7[%c0_160, %c0_161, %c640_162], %292 {strides = array<i32>} : memref<1x4x1024xf32, #tpu.memory_space<vmem>>, vector<1x4x32xf32>,
    %293 = vector.extract_strided_slice %11 {offsets = [0, 160], sizes = [4, 16], strides = [1, 1]} : vector<4x256xf32> to vector<4x16xf32>
    %cst_163 = arith.constant dense<0.000000e+00> : vector<4x32xf32>
    %294 = tpu.matmul %293, %17, %cst_163 {dimension_numbers = #tpu.dot_dimension_numbers<[1], [0], [0], [1], [0, 0, 1, 1], [], []>} : vector<4x16xf32>, vector<16x32xf32>, vector<4x32xf32> -> vector<4x32xf32>
    %295 = vector.extract_strided_slice %14 {offsets = [0, 160], sizes = [4, 16], strides = [1, 1]} : vector<4x256xf32> to vector<4x16xf32>
    %cst_164 = arith.constant dense<0.000000e+00> : vector<4x32xf32>
    %296 = tpu.matmul %295, %19, %cst_164 {dimension_numbers = #tpu.dot_dimension_numbers<[1], [0], [0], [1], [0, 0, 1, 1], [], []>} : vector<4x16xf32>, vector<16x32xf32>, vector<4x32xf32> -> vector<4x32xf32>
    %297 = arith.addf %294, %296 : vector<4x32xf32>
    %298 = vector.broadcast %15 : vector<4x1xf32> to vector<4x32xf32>
    %299 = arith.addf %297, %298 : vector<4x32xf32>
    %c0_165 = arith.constant 0 : index
    %c0_166 = arith.constant 0 : index
    %c672 = arith.constant 672 : index
    %300 = vector.load %arg3[%c0_165, %c0_166, %c672] : memref<1x4x1024xf32, #tpu.memory_space<vmem>>, vector<1x4x32xf32>
    %301 = vector.shape_cast %300 : vector<1x4x32xf32> to vector<4x32xf32>
    %302 = arith.addf %299, %301 : vector<4x32xf32>
    %c0_167 = arith.constant 0 : index
    %c0_168 = arith.constant 0 : index
    %c672_169 = arith.constant 672 : index
    %303 = vector.load %arg7[%c0_167, %c0_168, %c672_169] : memref<1x4x1024xf32, #tpu.memory_space<vmem>>, vector<1x4x32xf32>
    %304 = vector.shape_cast %303 : vector<1x4x32xf32> to vector<4x32xf32>
    %305 = vector.shape_cast %302 : vector<4x32xf32> to vector<1x4x32xf32>
    tpu.vector_store %arg7[%c0_167, %c0_168, %c672_169], %305 {strides = array<i32>} : memref<1x4x1024xf32, #tpu.memory_space<vmem>>, vector<1x4x32xf32>,
    %306 = vector.extract_strided_slice %5 {offsets = [0, 176], sizes = [4, 16], strides = [1, 1]} : vector<4x256xf32> to vector<4x16xf32>
    %cst_170 = arith.constant dense<0.000000e+00> : vector<4x32xf32>
    %307 = tpu.matmul %306, %17, %cst_170 {dimension_numbers = #tpu.dot_dimension_numbers<[1], [0], [0], [1], [0, 0, 1, 1], [], []>} : vector<4x16xf32>, vector<16x32xf32>, vector<4x32xf32> -> vector<4x32xf32>
    %308 = vector.extract_strided_slice %8 {offsets = [0, 176], sizes = [4, 16], strides = [1, 1]} : vector<4x256xf32> to vector<4x16xf32>
    %cst_171 = arith.constant dense<0.000000e+00> : vector<4x32xf32>
    %309 = tpu.matmul %308, %19, %cst_171 {dimension_numbers = #tpu.dot_dimension_numbers<[1], [0], [0], [1], [0, 0, 1, 1], [], []>} : vector<4x16xf32>, vector<16x32xf32>, vector<4x32xf32> -> vector<4x32xf32>
    %310 = arith.addf %307, %309 : vector<4x32xf32>
    %311 = vector.broadcast %15 : vector<4x1xf32> to vector<4x32xf32>
    %312 = arith.addf %310, %311 : vector<4x32xf32>
    %c0_172 = arith.constant 0 : index
    %c0_173 = arith.constant 0 : index
    %c704 = arith.constant 704 : index
    %313 = vector.load %arg3[%c0_172, %c0_173, %c704] : memref<1x4x1024xf32, #tpu.memory_space<vmem>>, vector<1x4x32xf32>
    %314 = vector.shape_cast %313 : vector<1x4x32xf32> to vector<4x32xf32>
    %315 = arith.addf %312, %314 : vector<4x32xf32>
    %c0_174 = arith.constant 0 : index
    %c0_175 = arith.constant 0 : index
    %c704_176 = arith.constant 704 : index
    %316 = vector.load %arg7[%c0_174, %c0_175, %c704_176] : memref<1x4x1024xf32, #tpu.memory_space<vmem>>, vector<1x4x32xf32>
    %317 = vector.shape_cast %316 : vector<1x4x32xf32> to vector<4x32xf32>
    %318 = vector.shape_cast %315 : vector<4x32xf32> to vector<1x4x32xf32>
    tpu.vector_store %arg7[%c0_174, %c0_175, %c704_176], %318 {strides = array<i32>} : memref<1x4x1024xf32, #tpu.memory_space<vmem>>, vector<1x4x32xf32>,
    %319 = vector.extract_strided_slice %11 {offsets = [0, 176], sizes = [4, 16], strides = [1, 1]} : vector<4x256xf32> to vector<4x16xf32>
    %cst_177 = arith.constant dense<0.000000e+00> : vector<4x32xf32>
    %320 = tpu.matmul %319, %17, %cst_177 {dimension_numbers = #tpu.dot_dimension_numbers<[1], [0], [0], [1], [0, 0, 1, 1], [], []>} : vector<4x16xf32>, vector<16x32xf32>, vector<4x32xf32> -> vector<4x32xf32>
    %321 = vector.extract_strided_slice %14 {offsets = [0, 176], sizes = [4, 16], strides = [1, 1]} : vector<4x256xf32> to vector<4x16xf32>
    %cst_178 = arith.constant dense<0.000000e+00> : vector<4x32xf32>
    %322 = tpu.matmul %321, %19, %cst_178 {dimension_numbers = #tpu.dot_dimension_numbers<[1], [0], [0], [1], [0, 0, 1, 1], [], []>} : vector<4x16xf32>, vector<16x32xf32>, vector<4x32xf32> -> vector<4x32xf32>
    %323 = arith.addf %320, %322 : vector<4x32xf32>
    %324 = vector.broadcast %15 : vector<4x1xf32> to vector<4x32xf32>
    %325 = arith.addf %323, %324 : vector<4x32xf32>
    %c0_179 = arith.constant 0 : index
    %c0_180 = arith.constant 0 : index
    %c736 = arith.constant 736 : index
    %326 = vector.load %arg3[%c0_179, %c0_180, %c736] : memref<1x4x1024xf32, #tpu.memory_space<vmem>>, vector<1x4x32xf32>
    %327 = vector.shape_cast %326 : vector<1x4x32xf32> to vector<4x32xf32>
    %328 = arith.addf %325, %327 : vector<4x32xf32>
    %c0_181 = arith.constant 0 : index
    %c0_182 = arith.constant 0 : index
    %c736_183 = arith.constant 736 : index
    %329 = vector.load %arg7[%c0_181, %c0_182, %c736_183] : memref<1x4x1024xf32, #tpu.memory_space<vmem>>, vector<1x4x32xf32>
    %330 = vector.shape_cast %329 : vector<1x4x32xf32> to vector<4x32xf32>
    %331 = vector.shape_cast %328 : vector<4x32xf32> to vector<1x4x32xf32>
    tpu.vector_store %arg7[%c0_181, %c0_182, %c736_183], %331 {strides = array<i32>} : memref<1x4x1024xf32, #tpu.memory_space<vmem>>, vector<1x4x32xf32>,
    %332 = vector.extract_strided_slice %5 {offsets = [0, 192], sizes = [4, 16], strides = [1, 1]} : vector<4x256xf32> to vector<4x16xf32>
    %cst_184 = arith.constant dense<0.000000e+00> : vector<4x32xf32>
    %333 = tpu.matmul %332, %17, %cst_184 {dimension_numbers = #tpu.dot_dimension_numbers<[1], [0], [0], [1], [0, 0, 1, 1], [], []>} : vector<4x16xf32>, vector<16x32xf32>, vector<4x32xf32> -> vector<4x32xf32>
    %334 = vector.extract_strided_slice %8 {offsets = [0, 192], sizes = [4, 16], strides = [1, 1]} : vector<4x256xf32> to vector<4x16xf32>
    %cst_185 = arith.constant dense<0.000000e+00> : vector<4x32xf32>
    %335 = tpu.matmul %334, %19, %cst_185 {dimension_numbers = #tpu.dot_dimension_numbers<[1], [0], [0], [1], [0, 0, 1, 1], [], []>} : vector<4x16xf32>, vector<16x32xf32>, vector<4x32xf32> -> vector<4x32xf32>
    %336 = arith.addf %333, %335 : vector<4x32xf32>
    %337 = vector.broadcast %15 : vector<4x1xf32> to vector<4x32xf32>
    %338 = arith.addf %336, %337 : vector<4x32xf32>
    %c0_186 = arith.constant 0 : index
    %c0_187 = arith.constant 0 : index
    %c768 = arith.constant 768 : index
    %339 = vector.load %arg3[%c0_186, %c0_187, %c768] : memref<1x4x1024xf32, #tpu.memory_space<vmem>>, vector<1x4x32xf32>
    %340 = vector.shape_cast %339 : vector<1x4x32xf32> to vector<4x32xf32>
    %341 = arith.addf %338, %340 : vector<4x32xf32>
    %c0_188 = arith.constant 0 : index
    %c0_189 = arith.constant 0 : index
    %c768_190 = arith.constant 768 : index
    %342 = vector.load %arg7[%c0_188, %c0_189, %c768_190] : memref<1x4x1024xf32, #tpu.memory_space<vmem>>, vector<1x4x32xf32>
    %343 = vector.shape_cast %342 : vector<1x4x32xf32> to vector<4x32xf32>
    %344 = vector.shape_cast %341 : vector<4x32xf32> to vector<1x4x32xf32>
    tpu.vector_store %arg7[%c0_188, %c0_189, %c768_190], %344 {strides = array<i32>} : memref<1x4x1024xf32, #tpu.memory_space<vmem>>, vector<1x4x32xf32>,
    %345 = vector.extract_strided_slice %11 {offsets = [0, 192], sizes = [4, 16], strides = [1, 1]} : vector<4x256xf32> to vector<4x16xf32>
    %cst_191 = arith.constant dense<0.000000e+00> : vector<4x32xf32>
    %346 = tpu.matmul %345, %17, %cst_191 {dimension_numbers = #tpu.dot_dimension_numbers<[1], [0], [0], [1], [0, 0, 1, 1], [], []>} : vector<4x16xf32>, vector<16x32xf32>, vector<4x32xf32> -> vector<4x32xf32>
    %347 = vector.extract_strided_slice %14 {offsets = [0, 192], sizes = [4, 16], strides = [1, 1]} : vector<4x256xf32> to vector<4x16xf32>
    %cst_192 = arith.constant dense<0.000000e+00> : vector<4x32xf32>
    %348 = tpu.matmul %347, %19, %cst_192 {dimension_numbers = #tpu.dot_dimension_numbers<[1], [0], [0], [1], [0, 0, 1, 1], [], []>} : vector<4x16xf32>, vector<16x32xf32>, vector<4x32xf32> -> vector<4x32xf32>
    %349 = arith.addf %346, %348 : vector<4x32xf32>
    %350 = vector.broadcast %15 : vector<4x1xf32> to vector<4x32xf32>
    %351 = arith.addf %349, %350 : vector<4x32xf32>
    %c0_193 = arith.constant 0 : index
    %c0_194 = arith.constant 0 : index
    %c800 = arith.constant 800 : index
    %352 = vector.load %arg3[%c0_193, %c0_194, %c800] : memref<1x4x1024xf32, #tpu.memory_space<vmem>>, vector<1x4x32xf32>
    %353 = vector.shape_cast %352 : vector<1x4x32xf32> to vector<4x32xf32>
    %354 = arith.addf %351, %353 : vector<4x32xf32>
    %c0_195 = arith.constant 0 : index
    %c0_196 = arith.constant 0 : index
    %c800_197 = arith.constant 800 : index
    %355 = vector.load %arg7[%c0_195, %c0_196, %c800_197] : memref<1x4x1024xf32, #tpu.memory_space<vmem>>, vector<1x4x32xf32>
    %356 = vector.shape_cast %355 : vector<1x4x32xf32> to vector<4x32xf32>
    %357 = vector.shape_cast %354 : vector<4x32xf32> to vector<1x4x32xf32>
    tpu.vector_store %arg7[%c0_195, %c0_196, %c800_197], %357 {strides = array<i32>} : memref<1x4x1024xf32, #tpu.memory_space<vmem>>, vector<1x4x32xf32>,
    %358 = vector.extract_strided_slice %5 {offsets = [0, 208], sizes = [4, 16], strides = [1, 1]} : vector<4x256xf32> to vector<4x16xf32>
    %cst_198 = arith.constant dense<0.000000e+00> : vector<4x32xf32>
    %359 = tpu.matmul %358, %17, %cst_198 {dimension_numbers = #tpu.dot_dimension_numbers<[1], [0], [0], [1], [0, 0, 1, 1], [], []>} : vector<4x16xf32>, vector<16x32xf32>, vector<4x32xf32> -> vector<4x32xf32>
    %360 = vector.extract_strided_slice %8 {offsets = [0, 208], sizes = [4, 16], strides = [1, 1]} : vector<4x256xf32> to vector<4x16xf32>
    %cst_199 = arith.constant dense<0.000000e+00> : vector<4x32xf32>
    %361 = tpu.matmul %360, %19, %cst_199 {dimension_numbers = #tpu.dot_dimension_numbers<[1], [0], [0], [1], [0, 0, 1, 1], [], []>} : vector<4x16xf32>, vector<16x32xf32>, vector<4x32xf32> -> vector<4x32xf32>
    %362 = arith.addf %359, %361 : vector<4x32xf32>
    %363 = vector.broadcast %15 : vector<4x1xf32> to vector<4x32xf32>
    %364 = arith.addf %362, %363 : vector<4x32xf32>
    %c0_200 = arith.constant 0 : index
    %c0_201 = arith.constant 0 : index
    %c832 = arith.constant 832 : index
    %365 = vector.load %arg3[%c0_200, %c0_201, %c832] : memref<1x4x1024xf32, #tpu.memory_space<vmem>>, vector<1x4x32xf32>
    %366 = vector.shape_cast %365 : vector<1x4x32xf32> to vector<4x32xf32>
    %367 = arith.addf %364, %366 : vector<4x32xf32>
    %c0_202 = arith.constant 0 : index
    %c0_203 = arith.constant 0 : index
    %c832_204 = arith.constant 832 : index
    %368 = vector.load %arg7[%c0_202, %c0_203, %c832_204] : memref<1x4x1024xf32, #tpu.memory_space<vmem>>, vector<1x4x32xf32>
    %369 = vector.shape_cast %368 : vector<1x4x32xf32> to vector<4x32xf32>
    %370 = vector.shape_cast %367 : vector<4x32xf32> to vector<1x4x32xf32>
    tpu.vector_store %arg7[%c0_202, %c0_203, %c832_204], %370 {strides = array<i32>} : memref<1x4x1024xf32, #tpu.memory_space<vmem>>, vector<1x4x32xf32>,
    %371 = vector.extract_strided_slice %11 {offsets = [0, 208], sizes = [4, 16], strides = [1, 1]} : vector<4x256xf32> to vector<4x16xf32>
    %cst_205 = arith.constant dense<0.000000e+00> : vector<4x32xf32>
    %372 = tpu.matmul %371, %17, %cst_205 {dimension_numbers = #tpu.dot_dimension_numbers<[1], [0], [0], [1], [0, 0, 1, 1], [], []>} : vector<4x16xf32>, vector<16x32xf32>, vector<4x32xf32> -> vector<4x32xf32>
    %373 = vector.extract_strided_slice %14 {offsets = [0, 208], sizes = [4, 16], strides = [1, 1]} : vector<4x256xf32> to vector<4x16xf32>
    %cst_206 = arith.constant dense<0.000000e+00> : vector<4x32xf32>
    %374 = tpu.matmul %373, %19, %cst_206 {dimension_numbers = #tpu.dot_dimension_numbers<[1], [0], [0], [1], [0, 0, 1, 1], [], []>} : vector<4x16xf32>, vector<16x32xf32>, vector<4x32xf32> -> vector<4x32xf32>
    %375 = arith.addf %372, %374 : vector<4x32xf32>
    %376 = vector.broadcast %15 : vector<4x1xf32> to vector<4x32xf32>
    %377 = arith.addf %375, %376 : vector<4x32xf32>
    %c0_207 = arith.constant 0 : index
    %c0_208 = arith.constant 0 : index
    %c864 = arith.constant 864 : index
    %378 = vector.load %arg3[%c0_207, %c0_208, %c864] : memref<1x4x1024xf32, #tpu.memory_space<vmem>>, vector<1x4x32xf32>
    %379 = vector.shape_cast %378 : vector<1x4x32xf32> to vector<4x32xf32>
    %380 = arith.addf %377, %379 : vector<4x32xf32>
    %c0_209 = arith.constant 0 : index
    %c0_210 = arith.constant 0 : index
    %c864_211 = arith.constant 864 : index
    %381 = vector.load %arg7[%c0_209, %c0_210, %c864_211] : memref<1x4x1024xf32, #tpu.memory_space<vmem>>, vector<1x4x32xf32>
    %382 = vector.shape_cast %381 : vector<1x4x32xf32> to vector<4x32xf32>
    %383 = vector.shape_cast %380 : vector<4x32xf32> to vector<1x4x32xf32>
    tpu.vector_store %arg7[%c0_209, %c0_210, %c864_211], %383 {strides = array<i32>} : memref<1x4x1024xf32, #tpu.memory_space<vmem>>, vector<1x4x32xf32>,
    %384 = vector.extract_strided_slice %5 {offsets = [0, 224], sizes = [4, 16], strides = [1, 1]} : vector<4x256xf32> to vector<4x16xf32>
    %cst_212 = arith.constant dense<0.000000e+00> : vector<4x32xf32>
    %385 = tpu.matmul %384, %17, %cst_212 {dimension_numbers = #tpu.dot_dimension_numbers<[1], [0], [0], [1], [0, 0, 1, 1], [], []>} : vector<4x16xf32>, vector<16x32xf32>, vector<4x32xf32> -> vector<4x32xf32>
    %386 = vector.extract_strided_slice %8 {offsets = [0, 224], sizes = [4, 16], strides = [1, 1]} : vector<4x256xf32> to vector<4x16xf32>
    %cst_213 = arith.constant dense<0.000000e+00> : vector<4x32xf32>
    %387 = tpu.matmul %386, %19, %cst_213 {dimension_numbers = #tpu.dot_dimension_numbers<[1], [0], [0], [1], [0, 0, 1, 1], [], []>} : vector<4x16xf32>, vector<16x32xf32>, vector<4x32xf32> -> vector<4x32xf32>
    %388 = arith.addf %385, %387 : vector<4x32xf32>
    %389 = vector.broadcast %15 : vector<4x1xf32> to vector<4x32xf32>
    %390 = arith.addf %388, %389 : vector<4x32xf32>
    %c0_214 = arith.constant 0 : index
    %c0_215 = arith.constant 0 : index
    %c896 = arith.constant 896 : index
    %391 = vector.load %arg3[%c0_214, %c0_215, %c896] : memref<1x4x1024xf32, #tpu.memory_space<vmem>>, vector<1x4x32xf32>
    %392 = vector.shape_cast %391 : vector<1x4x32xf32> to vector<4x32xf32>
    %393 = arith.addf %390, %392 : vector<4x32xf32>
    %c0_216 = arith.constant 0 : index
    %c0_217 = arith.constant 0 : index
    %c896_218 = arith.constant 896 : index
    %394 = vector.load %arg7[%c0_216, %c0_217, %c896_218] : memref<1x4x1024xf32, #tpu.memory_space<vmem>>, vector<1x4x32xf32>
    %395 = vector.shape_cast %394 : vector<1x4x32xf32> to vector<4x32xf32>
    %396 = vector.shape_cast %393 : vector<4x32xf32> to vector<1x4x32xf32>
    tpu.vector_store %arg7[%c0_216, %c0_217, %c896_218], %396 {strides = array<i32>} : memref<1x4x1024xf32, #tpu.memory_space<vmem>>, vector<1x4x32xf32>,
    %397 = vector.extract_strided_slice %11 {offsets = [0, 224], sizes = [4, 16], strides = [1, 1]} : vector<4x256xf32> to vector<4x16xf32>
    %cst_219 = arith.constant dense<0.000000e+00> : vector<4x32xf32>
    %398 = tpu.matmul %397, %17, %cst_219 {dimension_numbers = #tpu.dot_dimension_numbers<[1], [0], [0], [1], [0, 0, 1, 1], [], []>} : vector<4x16xf32>, vector<16x32xf32>, vector<4x32xf32> -> vector<4x32xf32>
    %399 = vector.extract_strided_slice %14 {offsets = [0, 224], sizes = [4, 16], strides = [1, 1]} : vector<4x256xf32> to vector<4x16xf32>
    %cst_220 = arith.constant dense<0.000000e+00> : vector<4x32xf32>
    %400 = tpu.matmul %399, %19, %cst_220 {dimension_numbers = #tpu.dot_dimension_numbers<[1], [0], [0], [1], [0, 0, 1, 1], [], []>} : vector<4x16xf32>, vector<16x32xf32>, vector<4x32xf32> -> vector<4x32xf32>
    %401 = arith.addf %398, %400 : vector<4x32xf32>
    %402 = vector.broadcast %15 : vector<4x1xf32> to vector<4x32xf32>
    %403 = arith.addf %401, %402 : vector<4x32xf32>
    %c0_221 = arith.constant 0 : index
    %c0_222 = arith.constant 0 : index
    %c928 = arith.constant 928 : index
    %404 = vector.load %arg3[%c0_221, %c0_222, %c928] : memref<1x4x1024xf32, #tpu.memory_space<vmem>>, vector<1x4x32xf32>
    %405 = vector.shape_cast %404 : vector<1x4x32xf32> to vector<4x32xf32>
    %406 = arith.addf %403, %405 : vector<4x32xf32>
    %c0_223 = arith.constant 0 : index
    %c0_224 = arith.constant 0 : index
    %c928_225 = arith.constant 928 : index
    %407 = vector.load %arg7[%c0_223, %c0_224, %c928_225] : memref<1x4x1024xf32, #tpu.memory_space<vmem>>, vector<1x4x32xf32>
    %408 = vector.shape_cast %407 : vector<1x4x32xf32> to vector<4x32xf32>
    %409 = vector.shape_cast %406 : vector<4x32xf32> to vector<1x4x32xf32>
    tpu.vector_store %arg7[%c0_223, %c0_224, %c928_225], %409 {strides = array<i32>} : memref<1x4x1024xf32, #tpu.memory_space<vmem>>, vector<1x4x32xf32>,
    %410 = vector.extract_strided_slice %5 {offsets = [0, 240], sizes = [4, 16], strides = [1, 1]} : vector<4x256xf32> to vector<4x16xf32>
    %cst_226 = arith.constant dense<0.000000e+00> : vector<4x32xf32>
    %411 = tpu.matmul %410, %17, %cst_226 {dimension_numbers = #tpu.dot_dimension_numbers<[1], [0], [0], [1], [0, 0, 1, 1], [], []>} : vector<4x16xf32>, vector<16x32xf32>, vector<4x32xf32> -> vector<4x32xf32>
    %412 = vector.extract_strided_slice %8 {offsets = [0, 240], sizes = [4, 16], strides = [1, 1]} : vector<4x256xf32> to vector<4x16xf32>
    %cst_227 = arith.constant dense<0.000000e+00> : vector<4x32xf32>
    %413 = tpu.matmul %412, %19, %cst_227 {dimension_numbers = #tpu.dot_dimension_numbers<[1], [0], [0], [1], [0, 0, 1, 1], [], []>} : vector<4x16xf32>, vector<16x32xf32>, vector<4x32xf32> -> vector<4x32xf32>
    %414 = arith.addf %411, %413 : vector<4x32xf32>
    %415 = vector.broadcast %15 : vector<4x1xf32> to vector<4x32xf32>
    %416 = arith.addf %414, %415 : vector<4x32xf32>
    %c0_228 = arith.constant 0 : index
    %c0_229 = arith.constant 0 : index
    %c960 = arith.constant 960 : index
    %417 = vector.load %arg3[%c0_228, %c0_229, %c960] : memref<1x4x1024xf32, #tpu.memory_space<vmem>>, vector<1x4x32xf32>
    %418 = vector.shape_cast %417 : vector<1x4x32xf32> to vector<4x32xf32>
    %419 = arith.addf %416, %418 : vector<4x32xf32>
    %c0_230 = arith.constant 0 : index
    %c0_231 = arith.constant 0 : index
    %c960_232 = arith.constant 960 : index
    %420 = vector.load %arg7[%c0_230, %c0_231, %c960_232] : memref<1x4x1024xf32, #tpu.memory_space<vmem>>, vector<1x4x32xf32>
    %421 = vector.shape_cast %420 : vector<1x4x32xf32> to vector<4x32xf32>
    %422 = vector.shape_cast %419 : vector<4x32xf32> to vector<1x4x32xf32>
    tpu.vector_store %arg7[%c0_230, %c0_231, %c960_232], %422 {strides = array<i32>} : memref<1x4x1024xf32, #tpu.memory_space<vmem>>, vector<1x4x32xf32>,
    %423 = vector.extract_strided_slice %11 {offsets = [0, 240], sizes = [4, 16], strides = [1, 1]} : vector<4x256xf32> to vector<4x16xf32>
    %cst_233 = arith.constant dense<0.000000e+00> : vector<4x32xf32>
    %424 = tpu.matmul %423, %17, %cst_233 {dimension_numbers = #tpu.dot_dimension_numbers<[1], [0], [0], [1], [0, 0, 1, 1], [], []>} : vector<4x16xf32>, vector<16x32xf32>, vector<4x32xf32> -> vector<4x32xf32>
    %425 = vector.extract_strided_slice %14 {offsets = [0, 240], sizes = [4, 16], strides = [1, 1]} : vector<4x256xf32> to vector<4x16xf32>
    %cst_234 = arith.constant dense<0.000000e+00> : vector<4x32xf32>
    %426 = tpu.matmul %425, %19, %cst_234 {dimension_numbers = #tpu.dot_dimension_numbers<[1], [0], [0], [1], [0, 0, 1, 1], [], []>} : vector<4x16xf32>, vector<16x32xf32>, vector<4x32xf32> -> vector<4x32xf32>
    %427 = arith.addf %424, %426 : vector<4x32xf32>
    %428 = vector.broadcast %15 : vector<4x1xf32> to vector<4x32xf32>
    %429 = arith.addf %427, %428 : vector<4x32xf32>
    %c0_235 = arith.constant 0 : index
    %c0_236 = arith.constant 0 : index
    %c992 = arith.constant 992 : index
    %430 = vector.load %arg3[%c0_235, %c0_236, %c992] : memref<1x4x1024xf32, #tpu.memory_space<vmem>>, vector<1x4x32xf32>
    %431 = vector.shape_cast %430 : vector<1x4x32xf32> to vector<4x32xf32>
    %432 = arith.addf %429, %431 : vector<4x32xf32>
    %c0_237 = arith.constant 0 : index
    %c0_238 = arith.constant 0 : index
    %c992_239 = arith.constant 992 : index
    %433 = vector.load %arg7[%c0_237, %c0_238, %c992_239] : memref<1x4x1024xf32, #tpu.memory_space<vmem>>, vector<1x4x32xf32>
    %434 = vector.shape_cast %433 : vector<1x4x32xf32> to vector<4x32xf32>
    %435 = vector.shape_cast %432 : vector<4x32xf32> to vector<1x4x32xf32>
    tpu.vector_store %arg7[%c0_237, %c0_238, %c992_239], %435 {strides = array<i32>} : memref<1x4x1024xf32, #tpu.memory_space<vmem>>, vector<1x4x32xf32>,
    return
  }
  func.func @transform_0(%arg0: i32, %arg1: i32) -> (i32, i32, i32) {
    %c0_i32 = arith.constant 0 : i32
    %c0_i32_0 = arith.constant 0 : i32
    return %arg0, %c0_i32, %arg1 : i32, i32, i32
  }
  func.func @transform_1(%arg0: i32, %arg1: i32) -> (i32, i32, i32) {
    %c0_i32 = arith.constant 0 : i32
    %c0_i32_0 = arith.constant 0 : i32
    return %arg0, %c0_i32, %arg1 : i32, i32, i32
  }
  func.func @transform_2(%arg0: i32, %arg1: i32) -> (i32, i32, i32) {
    %c0_i32 = arith.constant 0 : i32
    %c0_i32_0 = arith.constant 0 : i32
    %c0_i32_1 = arith.constant 0 : i32
    %c0_i32_2 = arith.constant 0 : i32
    return %c0_i32, %c0_i32_0, %c0_i32_1 : i32, i32, i32
  }
  func.func @transform_3(%arg0: i32, %arg1: i32) -> (i32, i32) {
    %c0_i32 = arith.constant 0 : i32
    %c0_i32_0 = arith.constant 0 : i32
    %c0_i32_1 = arith.constant 0 : i32
    return %c0_i32, %c0_i32_0 : i32, i32
  }
  func.func @transform_4(%arg0: i32, %arg1: i32) -> (i32, i32, i32) {
    %c0_i32 = arith.constant 0 : i32
    %c0_i32_0 = arith.constant 0 : i32
    %c0_i32_1 = arith.constant 0 : i32
    %c0_i32_2 = arith.constant 0 : i32
    return %c0_i32, %c0_i32_0, %c0_i32_1 : i32, i32, i32
  }
  func.func @transform_5(%arg0: i32, %arg1: i32) -> (i32, i32, i32) {
    %c0_i32 = arith.constant 0 : i32
    %c0_i32_0 = arith.constant 0 : i32
    return %arg0, %c0_i32, %arg1 : i32, i32, i32
  }
}

</mosaic_0001>

<llo_original>
// kernel: tpu_custom_call.1
$region0: #{tpu_custom_call.1}
  #allocation0 [shape = 'u32[]', space=smem, size = 0x4, offset = 0x4, fixed_abs, tag = 'smem constant byte address 0x4 - core index']
  #allocation1 [shape = 'u32[72,128]{1,0:T(1,128)}', space=vmem, size = 0x9000, scoped, tag = 'internal scratch']
  %s0 = inlined_call_operand.hbm [shape: f32[2,8,256], index: 0, kind: input, shape index: {}]
  %s1 = inlined_call_operand.hbm [shape: f32[2,4,1024], index: 1, kind: input, shape index: {}]
  %s2 = inlined_call_operand.hbm [shape: f32[4,4,8], index: 2, kind: input, shape index: {}]
  %s3 = inlined_call_operand.vmem [shape: f32[4,1], index: 3, kind: input, shape index: {}]
  %s4 = inlined_call_operand.hbm [shape: f32[2,16,32], index: 4, kind: input, shape index: {}]
  %s5 = inlined_call_operand.hbm [shape: f32[2,4,1024], index: 5, kind: output, shape index: {}]
  %s6 = sld [smem:[#allocation0]]
  $region69: #{tpu_custom_call.1} parent=0
    _
  %s8 = ssub.s32 1, %s6
  %s9 = scalar_select 0, %s8, %s6
  $region1: #{tpu_custom_call.1} parent=0
    #allocation2 [shape = 'u8[16384]{0}', space=vmem, size = 0x4000, scoped, tag = 'input window, operand 0']
    #allocation3 [shape = 's32[2]{0}', space=sflag, size = 0x8, scoped, tag = 'scoped memory for tpu_custom_call.1']
    #allocation4 [shape = 's32[2]{0}', space=sflag, size = 0x8, scoped, tag = 'scoped memory for tpu_custom_call.1']
    #allocation5 [shape = 'u8[32768]{0}', space=vmem, size = 0x8000, scoped, tag = 'input window, operand 1']
    #allocation6 [shape = 's32[2]{0}', space=sflag, size = 0x8, scoped, tag = 'scoped memory for tpu_custom_call.1']
    #allocation7 [shape = 'u8[8192]{0}', space=vmem, size = 0x2000, scoped, tag = 'input window, operand 2, single buffered']
    #allocation8 [shape = 'u8[16384]{0}', space=vmem, size = 0x4000, scoped, tag = 'input window, operand 4, single buffered']
    #allocation9 [shape = 's32[1]{0}', space=sflag, size = 0x4, scoped, tag = 'scoped memory for tpu_custom_call.1']
    #allocation10 [shape = 'u8[32768]{0}', space=vmem, size = 0x8000, scoped, tag = 'output window, operand 0']
    %10 = vsyncpa [#allocation3], 0
    %s11 = scalar_lea.sflag [#allocation3], 1
    %12 = vsyncpa %s11, 0
    %13 = vsyncpa [#allocation6], 0
    %s14 = scalar_lea.sflag [#allocation6], 1
    %15 = vsyncpa %s14, 0
    %16 = vsyncpa [#allocation9], 0
    %17 = vsyncpa [#allocation4], 0
    %s18 = scalar_lea.sflag [#allocation4], 1
    %19 = vsyncpa %s18, 0
    loop: start=0, step=1, limit=4
    $region2: #{tpu_custom_call.1} parent=1 // loop_pre_header
      _
    $region3: #{tpu_custom_call.1} parent=1 // loop_header
      %s21 = sphi 0, %s25
      %p22 = scmp.ge.s32.totalorder %s21, 4
      %s28 = sphi 0, %s40
      %s29 = sphi 0, %s36
      %s30 = sphi 0, %s28
      %s31 = sphi 0, %s29
      %s32 = sphi 0, %s30
      %s33 = sphi 0, %s31
      %s45 = sphi 0, %s47
      %s48 = sphi 0, %s45
      %s49 = sphi 0, %s48
      %s65 = sphi 0, %s49
      %s73 = sphi 0, %s75
      %s76 = sphi 0, %s73
      %s77 = sphi 0, %s76
      %s93 = sphi 0, %s77
      %s97 = sphi 0, %s97
      %s99 = sphi 0, %s97
      %s100 = sphi 0, %s99
      %s114 = sphi 0, %s100
      %s118 = sphi 0, %s118
      %s120 = sphi 0, %s118
      %s121 = sphi 0, %s120
      %s135 = sphi 0, %s121
      %s139 = sphi 0, %s139
      %s141 = sphi 0, %s139
      %s142 = sphi 0, %s141
      %s156 = sphi 0, %s142
      %s164 = sphi 0, %s166
      %s167 = sphi 0, %s164
      %s168 = sphi 0, %s167
      %s184 = sphi 0, %s168
    $region4: #{tpu_custom_call.1} parent=1 // loop_header_branch
      %24 = sbr.rel (%p22) target = $region8
    $region5: #{tpu_custom_call.1} parent=1 // loop_body
      %s26 = ssub.s32 %s21, 1
      %s27 = ssub.s32 %s21, 2
      %s34 = sadd.s32 1, %s29
      %p35 = scmp.ge.s32.totalorder %s34, 1
      %s36 = scalar_select %p35, 0, %s34
      %s37 = sadd.s32 1, %s28
      %s38 = scalar_select %p35, %s37, %s28
      %p39 = scmp.ge.s32.totalorder %s38, 2
      %s40 = scalar_select %p39, 0, %s38
      %s41 = ssub.s32 %s28, %s40
      %s42 = ssub.s32 %s29, %s36
      %s43 = sor.u32 %s41, %s42
      %p44 = scmp.eq.s32.totalorder %s43, 0
      %s46 = sadd.s32 %s45, 1
      %s47 = scalar_select %p44, %s45, %s46
      %p50 = pneg %p44
      %p51 = scmp.eq.s32.totalorder %s21, 1
      %p52 = por %p50, %p51
      %p53 = scmp.ne.s32.totalorder %s45, %s48
      %p54 = scmp.eq.s32.totalorder %s21, 0
      %p55 = por %p53, %p54
      %p56 = scmp.ne.s32.totalorder %s45, %s48
      %p57 = scmp.eq.s32.totalorder %s26, 1
      %p58 = por %p56, %p57
      %p59 = scmp.ne.s32.totalorder %s48, %s49
      %p60 = scmp.eq.s32.totalorder %s26, 0
      %p61 = por %p59, %p60
      %p62 = scmp.ne.s32.totalorder %s48, %s49
      %p63 = scmp.eq.s32.totalorder %s27, 1
      %p64 = por %p62, %p63
      %p66 = scmp.ne.s32.totalorder %s49, %s65
      %p67 = scmp.eq.s32.totalorder %s27, 0
      %p68 = por %p66, %p67
      %s69 = ssub.s32 %s28, %s40
      %s70 = ssub.s32 %s29, %s36
      %s71 = sor.u32 %s69, %s70
      %p72 = scmp.eq.s32.totalorder %s71, 0
      %s74 = sadd.s32 %s73, 1
      %s75 = scalar_select %p72, %s73, %s74
      %p78 = pneg %p72
      %p79 = scmp.eq.s32.totalorder %s21, 1
      %p80 = por %p78, %p79
      %p81 = scmp.ne.s32.totalorder %s73, %s76
      %p82 = scmp.eq.s32.totalorder %s21, 0
      %p83 = por %p81, %p82
      %p84 = scmp.ne.s32.totalorder %s73, %s76
      %p85 = scmp.eq.s32.totalorder %s26, 1
      %p86 = por %p84, %p85
      %p87 = scmp.ne.s32.totalorder %s76, %s77
      %p88 = scmp.eq.s32.totalorder %s26, 0
      %p89 = por %p87, %p88
      %p90 = scmp.ne.s32.totalorder %s76, %s77
      %p91 = scmp.eq.s32.totalorder %s27, 1
      %p92 = por %p90, %p91
      %p94 = scmp.ne.s32.totalorder %s77, %s93
      %p95 = scmp.eq.s32.totalorder %s27, 0
      %p96 = por %p94, %p95
      %s98 = sadd.s32 %s97, 1
      %p101 = scmp.eq.s32.totalorder %s21, 1
      %p102 = scmp.ne.s32.totalorder %s97, %s99
      %p103 = scmp.eq.s32.totalorder %s21, 0
      %p104 = por %p102, %p103
      %p105 = scmp.ne.s32.totalorder %s97, %s99
      %p106 = scmp.eq.s32.totalorder %s26, 1
      %p107 = por %p105, %p106
      %p108 = scmp.ne.s32.totalorder %s99, %s100
      %p109 = scmp.eq.s32.totalorder %s26, 0
      %p110 = por %p108, %p109
      %p111 = scmp.ne.s32.totalorder %s99, %s100
      %p112 = scmp.eq.s32.totalorder %s27, 1
      %p113 = por %p111, %p112
      %p115 = scmp.ne.s32.totalorder %s100, %s114
      %p116 = scmp.eq.s32.totalorder %s27, 0
      %p117 = por %p115, %p116
      %s119 = sadd.s32 %s118, 1
      %p122 = scmp.eq.s32.totalorder %s21, 1
      %p123 = scmp.ne.s32.totalorder %s118, %s120
      %p124 = scmp.eq.s32.totalorder %s21, 0
      %p125 = por %p123, %p124
      %p126 = scmp.ne.s32.totalorder %s118, %s120
      %p127 = scmp.eq.s32.totalorder %s26, 1
      %p128 = por %p126, %p127
      %p129 = scmp.ne.s32.totalorder %s120, %s121
      %p130 = scmp.eq.s32.totalorder %s26, 0
      %p131 = por %p129, %p130
      %p132 = scmp.ne.s32.totalorder %s120, %s121
      %p133 = scmp.eq.s32.totalorder %s27, 1
      %p134 = por %p132, %p133
      %p136 = scmp.ne.s32.totalorder %s121, %s135
      %p137 = scmp.eq.s32.totalorder %s27, 0
      %p138 = por %p136, %p137
      %s140 = sadd.s32 %s139, 1
      %p143 = scmp.eq.s32.totalorder %s21, 1
      %p144 = scmp.ne.s32.totalorder %s139, %s141
      %p145 = scmp.eq.s32.totalorder %s21, 0
      %p146 = por %p144, %p145
      %p147 = scmp.ne.s32.totalorder %s139, %s141
      %p148 = scmp.eq.s32.totalorder %s26, 1
      %p149 = por %p147, %p148
      %p150 = scmp.ne.s32.totalorder %s141, %s142
      %p151 = scmp.eq.s32.totalorder %s26, 0
      %p152 = por %p150, %p151
      %p153 = scmp.ne.s32.totalorder %s141, %s142
      %p154 = scmp.eq.s32.totalorder %s27, 1
      %p155 = por %p153, %p154
      %p157 = scmp.ne.s32.totalorder %s142, %s156
      %p158 = scmp.eq.s32.totalorder %s27, 0
      %p159 = por %p157, %p158
      %s160 = ssub.s32 %s28, %s40
      %s161 = ssub.s32 %s29, %s36
      %s162 = sor.u32 %s160, %s161
      %p163 = scmp.eq.s32.totalorder %s162, 0
      %s165 = sadd.s32 %s164, 1
      %s166 = scalar_select %p163, %s164, %s165
      %p169 = pneg %p163
      %p170 = scmp.eq.s32.totalorder %s21, 1
      %p171 = por %p169, %p170
      %p172 = scmp.ne.s32.totalorder %s164, %s167
      %p173 = scmp.eq.s32.totalorder %s21, 0
      %p174 = por %p172, %p173
      %p175 = scmp.ne.s32.totalorder %s164, %s167
      %p176 = scmp.eq.s32.totalorder %s26, 1
      %p177 = por %p175, %p176
      %p178 = scmp.ne.s32.totalorder %s167, %s168
      %p179 = scmp.eq.s32.totalorder %s26, 0
      %p180 = por %p178, %p179
      %p181 = scmp.ne.s32.totalorder %s167, %s168
      %p182 = scmp.eq.s32.totalorder %s27, 1
      %p183 = por %p181, %p182
      %p185 = scmp.ne.s32.totalorder %s168, %s184
      %p186 = scmp.eq.s32.totalorder %s27, 0
      %p187 = por %p185, %p186
      %p188 = scmp.le.s32.totalorder 1, %s21
      %p189 = scmp.lt.s32.totalorder %s21, 3
      %p190 = pnand %p188, %p189
      %p191 = pneg %p190
      // Predicated region
      $region9: #{tpu_custom_call.1} parent=5 // pred_check
        _
      $region10: #{tpu_custom_call.1} parent=5 // pred_check_branch
        %193 = sbr.rel (%p190) target = $region12
      $region11: #{tpu_custom_call.1} parent=5 // pred_region
        %s194 = ssub.s32 %s21, 1
        // Predicated region
        $region13: #{tpu_custom_call.1} parent=11 // pred_check
          %p195 = pneg %p110
        $region14: #{tpu_custom_call.1} parent=11 // pred_check_branch
          %197 = sbr.rel (%p195) target = $region16
        $region15: #{tpu_custom_call.1} parent=11 // pred_region
          %199 = vsyncadd [#allocation6], 0
          %s200 = sshll.u32 %s2, 4
          %s201 = int_to_ptr.hbm [resolvable:$true] %s200
          %s202 = sshll.u32 [#allocation7], 4
          %s203 = int_to_ptr.vmem [resolvable:$true] %s202
          %208 = dma.hbm_to_vmem [thread:$0]  %s201, 256, %s203, [#allocation6], 64, 64, 4
        $region16: #{tpu_custom_call.1} parent=11 // pred_fallthru
          _
        // Predicated region
        $region17: #{tpu_custom_call.1} parent=11 // pred_check
          %p209 = pneg %p131
        $region18: #{tpu_custom_call.1} parent=11 // pred_check_branch
          %211 = sbr.rel (%p209) target = $region20
        $region19: #{tpu_custom_call.1} parent=11 // pred_region
          _
        $region20: #{tpu_custom_call.1} parent=11 // pred_fallthru
          _
        // Predicated region
        $region21: #{tpu_custom_call.1} parent=11 // pred_check
          %p212 = pneg %p152
        $region22: #{tpu_custom_call.1} parent=11 // pred_check_branch
          %214 = sbr.rel (%p212) target = $region24
        $region23: #{tpu_custom_call.1} parent=11 // pred_region
          %216 = vsyncadd [#allocation9], 0
          %s217 = sshll.u32 %s4, 4
          %s218 = int_to_ptr.hbm [resolvable:$true] %s217
          %s219 = sshll.u32 [#allocation8], 4
          %s220 = int_to_ptr.vmem [resolvable:$true] %s219
          %225 = dma.hbm_to_vmem [thread:$0]  %s218, 512, %s220, [#allocation9], 128, 128, 8
        $region24: #{tpu_custom_call.1} parent=11 // pred_fallthru
          _
      $region12: #{tpu_custom_call.1} parent=5 // pred_fallthru
        _
      %p226 = scmp.lt.s32.totalorder %s21, 2
      // Predicated region
      $region25: #{tpu_custom_call.1} parent=5 // pred_check
        %p227 = pneg %p226
      $region26: #{tpu_custom_call.1} parent=5 // pred_check_branch
        %229 = sbr.rel (%p227) target = $region28
      $region27: #{tpu_custom_call.1} parent=5 // pred_region
        // Predicated region
        $region29: #{tpu_custom_call.1} parent=27 // pred_check
          %p230 = pneg %p55
        $region30: #{tpu_custom_call.1} parent=27 // pred_check_branch
          %232 = sbr.rel (%p230) target = $region32
        $region31: #{tpu_custom_call.1} parent=27 // pred_region
          %s233 = sand.u32 %s45, 1
          %s234 = scalar_lea.sflag [#allocation3], %s233
          %s235 = sand.u32 %s45, 1
          %s236 = smul.addr %s235, 16
          %s237 = scalar_lea.vmem [#allocation2], %s236
          %s238 = smul.u32 2, %s29
          %240 = vsyncadd %s234, 0
          %s241 = smul.addr %s28, 2
          %s242 = sadd.s32 %s238, %s241
          %s243 = smul.addr %s242, 8
          %s244 = scalar_lea.hbm %s0, %s243
          %s246 = sshll.u32 %s244, 4
          %s247 = int_to_ptr.hbm [resolvable:$true] %s246
          %s248 = sshll.u32 %s237, 4
          %s249 = int_to_ptr.vmem [resolvable:$true] %s248
          %251 = dma.hbm_to_vmem [thread:$0]  %s247, 256, %s249, %s234
        $region32: #{tpu_custom_call.1} parent=27 // pred_fallthru
          _
        // Predicated region
        $region33: #{tpu_custom_call.1} parent=27 // pred_check
          %p252 = pneg %p83
        $region34: #{tpu_custom_call.1} parent=27 // pred_check_branch
          %254 = sbr.rel (%p252) target = $region36
        $region35: #{tpu_custom_call.1} parent=27 // pred_region
          %s255 = sand.u32 %s21, 1
          %s256 = scalar_lea.sflag [#allocation6], %s255
          %s257 = sand.u32 %s73, 1
          %s258 = smul.addr %s257, 32
          %s259 = scalar_lea.vmem [#allocation5], %s258
          %s260 = smul.u32 8, %s29
          %262 = vsyncadd %s256, 0
          %s263 = smul.addr %s28, 8
          %s264 = sadd.s32 %s260, %s263
          %s265 = smul.addr %s264, 4
          %s266 = scalar_lea.hbm %s1, %s265
          %s268 = sshll.u32 %s266, 4
          %s269 = int_to_ptr.hbm [resolvable:$true] %s268
          %s270 = sshll.u32 %s259, 4
          %s271 = int_to_ptr.vmem [resolvable:$true] %s270
          %273 = dma.hbm_to_vmem [thread:$0]  %s269, 512, %s271, %s256
        $region36: #{tpu_custom_call.1} parent=27 // pred_fallthru
          _
      $region28: #{tpu_custom_call.1} parent=5 // pred_fallthru
        _
      %p274 = scmp.le.s32.totalorder 1, %s21
      %p275 = scmp.lt.s32.totalorder %s21, 3
      %p276 = pnand %p274, %p275
      %p277 = pneg %p276
      // Predicated region
      $region37: #{tpu_custom_call.1} parent=5 // pred_check
        _
      $region38: #{tpu_custom_call.1} parent=5 // pred_check_branch
        %279 = sbr.rel (%p276) target = $region40
      $region39: #{tpu_custom_call.1} parent=5 // pred_region
        %s280 = ssub.s32 %s21, 1
        %s281 = sand.u32 %s48, 1
        %s282 = scalar_lea.sflag [#allocation3], %s281
        %s283 = sand.u32 %s48, 1
        %s284 = smul.addr %s283, 16
        %s285 = scalar_lea.vmem [#allocation2], %s284
        // Predicated region
        $region41: #{tpu_custom_call.1} parent=39 // pred_check
          %p286 = pneg %p61
        $region42: #{tpu_custom_call.1} parent=39 // pred_check_branch
          %288 = sbr.rel (%p286) target = $region44
        $region43: #{tpu_custom_call.1} parent=39 // pred_region
          %290 = dma.done %s282, 256
        $region44: #{tpu_custom_call.1} parent=39 // pred_fallthru
          _
        %s291 = sand.u32 %s26, 1
        %s292 = scalar_lea.sflag [#allocation6], %s291
        %s293 = sand.u32 %s76, 1
        %s294 = smul.addr %s293, 32
        %s295 = scalar_lea.vmem [#allocation5], %s294
        // Predicated region
        $region45: #{tpu_custom_call.1} parent=39 // pred_check
          %p296 = pneg %p89
        $region46: #{tpu_custom_call.1} parent=39 // pred_check_branch
          %298 = sbr.rel (%p296) target = $region48
        $region47: #{tpu_custom_call.1} parent=39 // pred_region
          %300 = dma.done %s292, 512
        $region48: #{tpu_custom_call.1} parent=39 // pred_fallthru
          _
        // Predicated region
        $region49: #{tpu_custom_call.1} parent=39 // pred_check
          %p301 = pneg %p110
        $region50: #{tpu_custom_call.1} parent=39 // pred_check_branch
          %303 = sbr.rel (%p301) target = $region52
        $region51: #{tpu_custom_call.1} parent=39 // pred_region
          %305 = dma.done [#allocation6], 256
        $region52: #{tpu_custom_call.1} parent=39 // pred_fallthru
          _
        // Predicated region
        $region53: #{tpu_custom_call.1} parent=39 // pred_check
          %p306 = pneg %p152
        $region54: #{tpu_custom_call.1} parent=39 // pred_check_branch
          %308 = sbr.rel (%p306) target = $region56
        $region55: #{tpu_custom_call.1} parent=39 // pred_region
          %310 = dma.done [#allocation9], 512
        $region56: #{tpu_custom_call.1} parent=39 // pred_fallthru
          _
        %s311 = sand.u32 %s48, 1
        %s312 = scalar_lea.sflag [#allocation3], %s311
        %s313 = sand.u32 %s48, 1
        %s314 = smul.addr %s313, 16
        %s315 = scalar_lea.vmem [#allocation2], %s314
        %p316 = pneg %p61
        %p317 = pneg %p58
        %s318 = sand.u32 %s26, 1
        %s319 = scalar_lea.sflag [#allocation6], %s318
        %s320 = sand.u32 %s76, 1
        %s321 = smul.addr %s320, 32
        %s322 = scalar_lea.vmem [#allocation5], %s321
        %p323 = pneg %p89
        %p324 = pneg %p86
        %p325 = pneg %p110
        %p326 = pneg %p107
        %p327 = pneg %p131
        %p328 = pneg %p128
        %p329 = pneg %p152
        %p330 = pneg %p149
        %p331 = pneg %p180
        %p332 = pneg %p177
        %s333 = sand.u32 %s167, 1
        %s334 = scalar_lea.sflag [#allocation4], %s333
        %s335 = sand.u32 %s167, 1
        %s336 = smul.addr %s335, 32
        %s337 = scalar_lea.vmem [#allocation10], %s336
        %s338 = smul.u32 2, %s31
        %s339 = smul.u32 8, %s31
        %s340 = smul.u32 8, %s31
        %v341 = vld [vmem:[%s285] sm:$0xff]
        %v342 = vld [vmem:[%s285 + $0x8] sm:$0xff]
        %v343 = vld [vmem:[#allocation7] sm:$0xf]
        %v344 = vld [vmem:[#allocation7 + $0x4] sm:$0xf]
        %v345 = vld [vmem:[#allocation7 + $0x8] sm:$0xf]
        %v346 = vld [vmem:[#allocation7 + $0xc] sm:$0xf]
        %vm347 = vcmask 64512
        %v349 = vsel %vm347, %v343, 0
        %351 = vmatpush.msra.mxu0 0.0
        %352 = vmatpush.msra.mxu0 0.0
        %353 = vmatpush.msra.mxu0 0.0
        %354 = vmatpush.msra.mxu0 0.0
        %355 = vmatpush.msra.mxu0 0.0
        %356 = vmatpush.msra.mxu0 0.0
        %357 = vmatpush.msra.mxu0 0.0
        %358 = vmatpush.msra.mxu0 0.0
        %359 = vmatpush.msra.mxu0 0.0
        %360 = vmatpush.msra.mxu0 0.0
        %361 = vmatpush.msra.mxu0 0.0
        %362 = vmatpush.msra.mxu0 0.0
        %363 = vmatpush.msra.mxu0 0.0
        %364 = vmatpush.msra.mxu0 0.0
        %365 = vmatpush.msra.mxu0 0.0
        %366 = vmatpush.msra.mxu0 %v341
        %367 = vmatmul.f32.gmra.mxu0 %v349
        %v368 = vpop.f32.mrf.mxu0
        %v369 = vadd.f32 0.0, %v368
        %370 = vdwg.mxu0
        %371 = vmatpush.msra.mxu0 0.0
        %372 = vmatpush.msra.mxu0 0.0
        %373 = vmatpush.msra.mxu0 0.0
        %374 = vmatpush.msra.mxu0 0.0
        %375 = vmatpush.msra.mxu0 0.0
        %376 = vmatpush.msra.mxu0 0.0
        %377 = vmatpush.msra.mxu0 0.0
        %378 = vmatpush.msra.mxu0 0.0
        %379 = vmatpush.msra.mxu0 0.0
        %380 = vmatpush.msra.mxu0 0.0
        %381 = vmatpush.msra.mxu0 0.0
        %382 = vmatpush.msra.mxu0 0.0
        %383 = vmatpush.msra.mxu0 0.0
        %384 = vmatpush.msra.mxu0 0.0
        %385 = vmatpush.msra.mxu0 0.0
        %386 = vmatpush.msra.mxu0 %v342
        %387 = vmatmul.f32.gmra.mxu0 %v349
        %v388 = vpop.f32.mrf.mxu0
        %v389 = vadd.f32 0.0, %v388
        %390 = vdwg.mxu0
        %v392 = vsel %vm347, %v344, 0
        %394 = vmatpush.msra.mxu0 0.0
        %395 = vmatpush.msra.mxu0 0.0
        %396 = vmatpush.msra.mxu0 0.0
        %397 = vmatpush.msra.mxu0 0.0
        %398 = vmatpush.msra.mxu0 0.0
        %399 = vmatpush.msra.mxu0 0.0
        %400 = vmatpush.msra.mxu0 0.0
        %401 = vmatpush.msra.mxu0 0.0
        %402 = vmatpush.msra.mxu0 0.0
        %403 = vmatpush.msra.mxu0 0.0
        %404 = vmatpush.msra.mxu0 0.0
        %405 = vmatpush.msra.mxu0 0.0
        %406 = vmatpush.msra.mxu0 0.0
        %407 = vmatpush.msra.mxu0 0.0
        %408 = vmatpush.msra.mxu0 0.0
        %409 = vmatpush.msra.mxu0 %v341
        %410 = vmatmul.f32.gmra.mxu0 %v392
        %v411 = vpop.f32.mrf.mxu0
        %v412 = vadd.f32 0.0, %v411
        %413 = vdwg.mxu0
        %414 = vmatpush.msra.mxu0 0.0
        %415 = vmatpush.msra.mxu0 0.0
        %416 = vmatpush.msra.mxu0 0.0
        %417 = vmatpush.msra.mxu0 0.0
        %418 = vmatpush.msra.mxu0 0.0
        %419 = vmatpush.msra.mxu0 0.0
        %420 = vmatpush.msra.mxu0 0.0
        %421 = vmatpush.msra.mxu0 0.0
        %422 = vmatpush.msra.mxu0 0.0
        %423 = vmatpush.msra.mxu0 0.0
        %424 = vmatpush.msra.mxu0 0.0
        %425 = vmatpush.msra.mxu0 0.0
        %426 = vmatpush.msra.mxu0 0.0
        %427 = vmatpush.msra.mxu0 0.0
        %428 = vmatpush.msra.mxu0 0.0
        %429 = vmatpush.msra.mxu0 %v342
        %430 = vmatmul.f32.gmra.mxu0 %v392
        %v431 = vpop.f32.mrf.mxu0
        %v432 = vadd.f32 0.0, %v431
        %433 = vdwg.mxu0
        %v435 = vsel %vm347, %v345, 0
        %437 = vmatpush.msra.mxu0 0.0
        %438 = vmatpush.msra.mxu0 0.0
        %439 = vmatpush.msra.mxu0 0.0
        %440 = vmatpush.msra.mxu0 0.0
        %441 = vmatpush.msra.mxu0 0.0
        %442 = vmatpush.msra.mxu0 0.0
        %443 = vmatpush.msra.mxu0 0.0
        %444 = vmatpush.msra.mxu0 0.0
        %445 = vmatpush.msra.mxu0 0.0
        %446 = vmatpush.msra.mxu0 0.0
        %447 = vmatpush.msra.mxu0 0.0
        %448 = vmatpush.msra.mxu0 0.0
        %449 = vmatpush.msra.mxu0 0.0
        %450 = vmatpush.msra.mxu0 0.0
        %451 = vmatpush.msra.mxu0 0.0
        %452 = vmatpush.msra.mxu0 %v341
        %453 = vmatmul.f32.gmra.mxu0 %v435
        %v454 = vpop.f32.mrf.mxu0
        %v455 = vadd.f32 0.0, %v454
        %456 = vdwg.mxu0
        %457 = vmatpush.msra.mxu0 0.0
        %458 = vmatpush.msra.mxu0 0.0
        %459 = vmatpush.msra.mxu0 0.0
        %460 = vmatpush.msra.mxu0 0.0
        %461 = vmatpush.msra.mxu0 0.0
        %462 = vmatpush.msra.mxu0 0.0
        %463 = vmatpush.msra.mxu0 0.0
        %464 = vmatpush.msra.mxu0 0.0
        %465 = vmatpush.msra.mxu0 0.0
        %466 = vmatpush.msra.mxu0 0.0
        %467 = vmatpush.msra.mxu0 0.0
        %468 = vmatpush.msra.mxu0 0.0
        %469 = vmatpush.msra.mxu0 0.0
        %470 = vmatpush.msra.mxu0 0.0
        %471 = vmatpush.msra.mxu0 0.0
        %472 = vmatpush.msra.mxu0 %v342
        %473 = vmatmul.f32.gmra.mxu0 %v435
        %v474 = vpop.f32.mrf.mxu0
        %v475 = vadd.f32 0.0, %v474
        %476 = vdwg.mxu0
        %v478 = vsel %vm347, %v346, 0
        %480 = vmatpush.msra.mxu0 0.0
        %481 = vmatpush.msra.mxu0 0.0
        %482 = vmatpush.msra.mxu0 0.0
        %483 = vmatpush.msra.mxu0 0.0
        %484 = vmatpush.msra.mxu0 0.0
        %485 = vmatpush.msra.mxu0 0.0
        %486 = vmatpush.msra.mxu0 0.0
        %487 = vmatpush.msra.mxu0 0.0
        %488 = vmatpush.msra.mxu0 0.0
        %489 = vmatpush.msra.mxu0 0.0
        %490 = vmatpush.msra.mxu0 0.0
        %491 = vmatpush.msra.mxu0 0.0
        %492 = vmatpush.msra.mxu0 0.0
        %493 = vmatpush.msra.mxu0 0.0
        %494 = vmatpush.msra.mxu0 0.0
        %495 = vmatpush.msra.mxu0 %v341
        %496 = vmatmul.f32.gmra.mxu0 %v478
        %v497 = vpop.f32.mrf.mxu0
        %v498 = vadd.f32 0.0, %v497
        %499 = vdwg.mxu0
        %500 = vmatpush.msra.mxu0 0.0
        %501 = vmatpush.msra.mxu0 0.0
        %502 = vmatpush.msra.mxu0 0.0
        %503 = vmatpush.msra.mxu0 0.0
        %504 = vmatpush.msra.mxu0 0.0
        %505 = vmatpush.msra.mxu0 0.0
        %506 = vmatpush.msra.mxu0 0.0
        %507 = vmatpush.msra.mxu0 0.0
        %508 = vmatpush.msra.mxu0 0.0
        %509 = vmatpush.msra.mxu0 0.0
        %510 = vmatpush.msra.mxu0 0.0
        %511 = vmatpush.msra.mxu0 0.0
        %512 = vmatpush.msra.mxu0 0.0
        %513 = vmatpush.msra.mxu0 0.0
        %514 = vmatpush.msra.mxu0 0.0
        %515 = vmatpush.msra.mxu0 %v342
        %516 = vmatmul.f32.gmra.mxu0 %v478
        %v517 = vpop.f32.mrf.mxu0
        %v518 = vadd.f32 0.0, %v517
        %519 = vdwg.mxu0
        %v520 = vld [vmem:[%s3] sm:$0xf]
        %v521 = vld [vmem:[#allocation8] sm:$0xff]
        %v522 = vld [vmem:[#allocation8 + $0x8] sm:$0xff]
        %s523 = scalar_lea.vmem [#allocation8], 16
        %v524 = vld [vmem:[%s523] sm:$0xff]
        %v525 = vld [vmem:[%s523 + $0x8] sm:$0xff]
        %vm526 = vcmask 130048
        %v528 = vsel %vm526, %v412, 0
        %530 = vmatpush.msra.mxu0 0.0
        %531 = vmatpush.msra.mxu0 0.0
        %532 = vmatpush.msra.mxu0 0.0
        %533 = vmatpush.msra.mxu0 0.0
        %534 = vmatpush.msra.mxu0 0.0
        %535 = vmatpush.msra.mxu0 0.0
        %536 = vmatpush.msra.mxu0 0.0
        %537 = vmatpush.msra.mxu0 0.0
        %538 = vmatpush.msra.mxu0 0.0
        %539 = vmatpush.msra.mxu0 0.0
        %540 = vmatpush.msra.mxu0 0.0
        %541 = vmatpush.msra.mxu0 0.0
        %542 = vmatpush.msra.mxu0 0.0
        %543 = vmatpush.msra.mxu0 0.0
        %544 = vmatpush.msra.mxu0 %v525
        %545 = vmatpush.msra.mxu0 %v524
        %546 = vmatmul.f32.gmra.mxu0 %v528
        %v547 = vpop.f32.mrf.mxu0
        %v548 = vadd.f32 0.0, %v547
        %549 = vdwg.mxu0
        %v551 = vsel %vm526, %v369, 0
        %553 = vmatpush.msra.mxu0 0.0
        %554 = vmatpush.msra.mxu0 0.0
        %555 = vmatpush.msra.mxu0 0.0
        %556 = vmatpush.msra.mxu0 0.0
        %557 = vmatpush.msra.mxu0 0.0
        %558 = vmatpush.msra.mxu0 0.0
        %559 = vmatpush.msra.mxu0 0.0
        %560 = vmatpush.msra.mxu0 0.0
        %561 = vmatpush.msra.mxu0 0.0
        %562 = vmatpush.msra.mxu0 0.0
        %563 = vmatpush.msra.mxu0 0.0
        %564 = vmatpush.msra.mxu0 0.0
        %565 = vmatpush.msra.mxu0 0.0
        %566 = vmatpush.msra.mxu0 0.0
        %567 = vmatpush.msra.mxu0 %v522
        %568 = vmatpush.msra.mxu0 %v521
        %569 = vmatmul.f32.gmra.mxu0 %v551
        %v570 = vpop.f32.mrf.mxu0
        %v571 = vadd.f32 %v548, %v570
        %572 = vdwg.mxu0
        %574 = vset.pattern.permute.xlu0 0
        %575 = vperm.xlu0 %574, %v520
        %v576 = vpop.permute.xlu0 %575
        %v578 = vadd.f32 %v571, %v576
        %v579 = vld [vmem:[%s295] sm:$0xf]
        %v580 = vadd.f32 %v578, %v579
        %vm581 = vcmask 257024
        %582 = vst.msk [vmem:[%s337] sm:$0xf] %vm581, %v580
        %v584 = vsel %vm526, %v498, 0
        %586 = vmatpush.msra.mxu0 0.0
        %587 = vmatpush.msra.mxu0 0.0
        %588 = vmatpush.msra.mxu0 0.0
        %589 = vmatpush.msra.mxu0 0.0
        %590 = vmatpush.msra.mxu0 0.0
        %591 = vmatpush.msra.mxu0 0.0
        %592 = vmatpush.msra.mxu0 0.0
        %593 = vmatpush.msra.mxu0 0.0
        %594 = vmatpush.msra.mxu0 0.0
        %595 = vmatpush.msra.mxu0 0.0
        %596 = vmatpush.msra.mxu0 0.0
        %597 = vmatpush.msra.mxu0 0.0
        %598 = vmatpush.msra.mxu0 0.0
        %599 = vmatpush.msra.mxu0 0.0
        %600 = vmatpush.msra.mxu0 %v525
        %601 = vmatpush.msra.mxu0 %v524
        %602 = vmatmul.f32.gmra.mxu0 %v584
        %v603 = vpop.f32.mrf.mxu0
        %v604 = vadd.f32 0.0, %v603
        %605 = vdwg.mxu0
        %v607 = vsel %vm526, %v455, 0
        %609 = vmatpush.msra.mxu0 0.0
        %610 = vmatpush.msra.mxu0 0.0
        %611 = vmatpush.msra.mxu0 0.0
        %612 = vmatpush.msra.mxu0 0.0
        %613 = vmatpush.msra.mxu0 0.0
        %614 = vmatpush.msra.mxu0 0.0
        %615 = vmatpush.msra.mxu0 0.0
        %616 = vmatpush.msra.mxu0 0.0
        %617 = vmatpush.msra.mxu0 0.0
        %618 = vmatpush.msra.mxu0 0.0
        %619 = vmatpush.msra.mxu0 0.0
        %620 = vmatpush.msra.mxu0 0.0
        %621 = vmatpush.msra.mxu0 0.0
        %622 = vmatpush.msra.mxu0 0.0
        %623 = vmatpush.msra.mxu0 %v522
        %624 = vmatpush.msra.mxu0 %v521
        %625 = vmatmul.f32.gmra.mxu0 %v607
        %v626 = vpop.f32.mrf.mxu0
        %v627 = vadd.f32 %v604, %v626
        %628 = vdwg.mxu0
        %v629 = vadd.f32 %v627, %v576
        %v630 = vld [vmem:[%s295] sm:$0xf]
        %632 = vst [vmem:[#allocation1] ss:$2 sm:$0xff] %v630
        %v633 = vld.sshfl [vmem:[#allocation1] sm:$0xff pattern:$0x75316420]
        %634 = vrot.lane.b32.xlu0 %v633, 96
        %v635 = vpop.permute.xlu0 %634
        %v637 = vadd.f32 %v629, %v635
        %639 = vrot.lane.b32.xlu0 %v637, 32
        %v640 = vpop.permute.xlu0 %639
        %vm642 = vcmask 519424
        %643 = vst.msk [vmem:[%s337] sm:$0xf] %vm642, %v640
        %644 = vrot.lane.b32.xlu0 %v412, 112
        %v645 = vpop.permute.xlu0 %644
        %v646 = vsel %vm526, %v645, 0
        %648 = vmatpush.msra.mxu0 0.0
        %649 = vmatpush.msra.mxu0 0.0
        %650 = vmatpush.msra.mxu0 0.0
        %651 = vmatpush.msra.mxu0 0.0
        %652 = vmatpush.msra.mxu0 0.0
        %653 = vmatpush.msra.mxu0 0.0
        %654 = vmatpush.msra.mxu0 0.0
        %655 = vmatpush.msra.mxu0 0.0
        %656 = vmatpush.msra.mxu0 0.0
        %657 = vmatpush.msra.mxu0 0.0
        %658 = vmatpush.msra.mxu0 0.0
        %659 = vmatpush.msra.mxu0 0.0
        %660 = vmatpush.msra.mxu0 0.0
        %661 = vmatpush.msra.mxu0 0.0
        %662 = vmatpush.msra.mxu0 %v525
        %663 = vmatpush.msra.mxu0 %v524
        %664 = vmatmul.f32.gmra.mxu0 %v646
        %v665 = vpop.f32.mrf.mxu0
        %v666 = vadd.f32 0.0, %v665
        %667 = vdwg.mxu0
        %668 = vrot.lane.b32.xlu0 %v369, 112
        %v669 = vpop.permute.xlu0 %668
        %v670 = vsel %vm526, %v669, 0
        %672 = vmatpush.msra.mxu0 0.0
        %673 = vmatpush.msra.mxu0 0.0
        %674 = vmatpush.msra.mxu0 0.0
        %675 = vmatpush.msra.mxu0 0.0
        %676 = vmatpush.msra.mxu0 0.0
        %677 = vmatpush.msra.mxu0 0.0
        %678 = vmatpush.msra.mxu0 0.0
        %679 = vmatpush.msra.mxu0 0.0
        %680 = vmatpush.msra.mxu0 0.0
        %681 = vmatpush.msra.mxu0 0.0
        %682 = vmatpush.msra.mxu0 0.0
        %683 = vmatpush.msra.mxu0 0.0
        %684 = vmatpush.msra.mxu0 0.0
        %685 = vmatpush.msra.mxu0 0.0
        %686 = vmatpush.msra.mxu0 %v522
        %687 = vmatpush.msra.mxu0 %v521
        %688 = vmatmul.f32.gmra.mxu0 %v670
        %v689 = vpop.f32.mrf.mxu0
        %v690 = vadd.f32 %v666, %v689
        %691 = vdwg.mxu0
        %v692 = vadd.f32 %v690, %v576
        %v693 = vld [vmem:[%s295] sm:$0xf]
        %695 = vst [vmem:[#allocation1] ss:$2 sm:$0xff] %v693
        %v696 = vld.sshfl [vmem:[#allocation1] sm:$0xff pattern:$0x75316420]
        %697 = vrot.lane.b32.xlu0 %v696, 64
        %v698 = vpop.permute.xlu0 %697
        %v700 = vadd.f32 %v692, %v698
        %702 = vrot.lane.b32.xlu0 %v700, 64
        %v703 = vpop.permute.xlu0 %702
        %vm705 = vcmask 781824
        %706 = vst.msk [vmem:[%s337] sm:$0xf] %vm705, %v703
        %707 = vrot.lane.b32.xlu0 %v498, 112
        %v708 = vpop.permute.xlu0 %707
        %v709 = vsel %vm526, %v708, 0
        %711 = vmatpush.msra.mxu0 0.0
        %712 = vmatpush.msra.mxu0 0.0
        %713 = vmatpush.msra.mxu0 0.0
        %714 = vmatpush.msra.mxu0 0.0
        %715 = vmatpush.msra.mxu0 0.0
        %716 = vmatpush.msra.mxu0 0.0
        %717 = vmatpush.msra.mxu0 0.0
        %718 = vmatpush.msra.mxu0 0.0
        %719 = vmatpush.msra.mxu0 0.0
        %720 = vmatpush.msra.mxu0 0.0
        %721 = vmatpush.msra.mxu0 0.0
        %722 = vmatpush.msra.mxu0 0.0
        %723 = vmatpush.msra.mxu0 0.0
        %724 = vmatpush.msra.mxu0 0.0
        %725 = vmatpush.msra.mxu0 %v525
        %726 = vmatpush.msra.mxu0 %v524
        %727 = vmatmul.f32.gmra.mxu0 %v709
        %v728 = vpop.f32.mrf.mxu0
        %v729 = vadd.f32 0.0, %v728
        %730 = vdwg.mxu0
        %731 = vrot.lane.b32.xlu0 %v455, 112
        %v732 = vpop.permute.xlu0 %731
        %v733 = vsel %vm526, %v732, 0
        %735 = vmatpush.msra.mxu0 0.0
        %736 = vmatpush.msra.mxu0 0.0
        %737 = vmatpush.msra.mxu0 0.0
        %738 = vmatpush.msra.mxu0 0.0
        %739 = vmatpush.msra.mxu0 0.0
        %740 = vmatpush.msra.mxu0 0.0
        %741 = vmatpush.msra.mxu0 0.0
        %742 = vmatpush.msra.mxu0 0.0
        %743 = vmatpush.msra.mxu0 0.0
        %744 = vmatpush.msra.mxu0 0.0
        %745 = vmatpush.msra.mxu0 0.0
        %746 = vmatpush.msra.mxu0 0.0
        %747 = vmatpush.msra.mxu0 0.0
        %748 = vmatpush.msra.mxu0 0.0
        %749 = vmatpush.msra.mxu0 %v522
        %750 = vmatpush.msra.mxu0 %v521
        %751 = vmatmul.f32.gmra.mxu0 %v733
        %v752 = vpop.f32.mrf.mxu0
        %v753 = vadd.f32 %v729, %v752
        %754 = vdwg.mxu0
        %v755 = vadd.f32 %v753, %v576
        %v756 = vld [vmem:[%s295] sm:$0xf]
        %758 = vst [vmem:[#allocation1] ss:$2 sm:$0xff] %v756
        %v759 = vld.sshfl [vmem:[#allocation1] sm:$0xff pattern:$0x75316420]
        %760 = vrot.lane.b32.xlu0 %v759, 32
        %v761 = vpop.permute.xlu0 %760
        %v763 = vadd.f32 %v755, %v761
        %765 = vrot.lane.b32.xlu0 %v763, 96
        %v766 = vpop.permute.xlu0 %765
        %vm768 = vcmask 1044224
        %769 = vst.msk [vmem:[%s337] sm:$0xf] %vm768, %v766
        %770 = vrot.lane.b32.xlu0 %v412, 96
        %v771 = vpop.permute.xlu0 %770
        %v772 = vsel %vm526, %v771, 0
        %774 = vmatpush.msra.mxu0 0.0
        %775 = vmatpush.msra.mxu0 0.0
        %776 = vmatpush.msra.mxu0 0.0
        %777 = vmatpush.msra.mxu0 0.0
        %778 = vmatpush.msra.mxu0 0.0
        %779 = vmatpush.msra.mxu0 0.0
        %780 = vmatpush.msra.mxu0 0.0
        %781 = vmatpush.msra.mxu0 0.0
        %782 = vmatpush.msra.mxu0 0.0
        %783 = vmatpush.msra.mxu0 0.0
        %784 = vmatpush.msra.mxu0 0.0
        %785 = vmatpush.msra.mxu0 0.0
        %786 = vmatpush.msra.mxu0 0.0
        %787 = vmatpush.msra.mxu0 0.0
        %788 = vmatpush.msra.mxu0 %v525
        %789 = vmatpush.msra.mxu0 %v524
        %790 = vmatmul.f32.gmra.mxu0 %v772
        %v791 = vpop.f32.mrf.mxu0
        %v792 = vadd.f32 0.0, %v791
        %793 = vdwg.mxu0
        %794 = vrot.lane.b32.xlu0 %v369, 96
        %v795 = vpop.permute.xlu0 %794
        %v796 = vsel %vm526, %v795, 0
        %798 = vmatpush.msra.mxu0 0.0
        %799 = vmatpush.msra.mxu0 0.0
        %800 = vmatpush.msra.mxu0 0.0
        %801 = vmatpush.msra.mxu0 0.0
        %802 = vmatpush.msra.mxu0 0.0
        %803 = vmatpush.msra.mxu0 0.0
        %804 = vmatpush.msra.mxu0 0.0
        %805 = vmatpush.msra.mxu0 0.0
        %806 = vmatpush.msra.mxu0 0.0
        %807 = vmatpush.msra.mxu0 0.0
        %808 = vmatpush.msra.mxu0 0.0
        %809 = vmatpush.msra.mxu0 0.0
        %810 = vmatpush.msra.mxu0 0.0
        %811 = vmatpush.msra.mxu0 0.0
        %812 = vmatpush.msra.mxu0 %v522
        %813 = vmatpush.msra.mxu0 %v521
        %814 = vmatmul.f32.gmra.mxu0 %v796
        %v815 = vpop.f32.mrf.mxu0
        %v816 = vadd.f32 %v792, %v815
        %817 = vdwg.mxu0
        %v818 = vadd.f32 %v816, %v576
        %v819 = vld [vmem:[%s295 + $0x4] sm:$0xf]
        %v820 = vadd.f32 %v818, %v819
        %821 = vst.msk [vmem:[%s337 + $0x4] sm:$0xf] %vm581, %v820
        %822 = vrot.lane.b32.xlu0 %v498, 96
        %v823 = vpop.permute.xlu0 %822
        %v824 = vsel %vm526, %v823, 0
        %826 = vmatpush.msra.mxu0 0.0
        %827 = vmatpush.msra.mxu0 0.0
        %828 = vmatpush.msra.mxu0 0.0
        %829 = vmatpush.msra.mxu0 0.0
        %830 = vmatpush.msra.mxu0 0.0
        %831 = vmatpush.msra.mxu0 0.0
        %832 = vmatpush.msra.mxu0 0.0
        %833 = vmatpush.msra.mxu0 0.0
        %834 = vmatpush.msra.mxu0 0.0
        %835 = vmatpush.msra.mxu0 0.0
        %836 = vmatpush.msra.mxu0 0.0
        %837 = vmatpush.msra.mxu0 0.0
        %838 = vmatpush.msra.mxu0 0.0
        %839 = vmatpush.msra.mxu0 0.0
        %840 = vmatpush.msra.mxu0 %v525
        %841 = vmatpush.msra.mxu0 %v524
        %842 = vmatmul.f32.gmra.mxu0 %v824
        %v843 = vpop.f32.mrf.mxu0
        %v844 = vadd.f32 0.0, %v843
        %845 = vdwg.mxu0
        %846 = vrot.lane.b32.xlu0 %v455, 96
        %v847 = vpop.permute.xlu0 %846
        %v848 = vsel %vm526, %v847, 0
        %850 = vmatpush.msra.mxu0 0.0
        %851 = vmatpush.msra.mxu0 0.0
        %852 = vmatpush.msra.mxu0 0.0
        %853 = vmatpush.msra.mxu0 0.0
        %854 = vmatpush.msra.mxu0 0.0
        %855 = vmatpush.msra.mxu0 0.0
        %856 = vmatpush.msra.mxu0 0.0
        %857 = vmatpush.msra.mxu0 0.0
        %858 = vmatpush.msra.mxu0 0.0
        %859 = vmatpush.msra.mxu0 0.0
        %860 = vmatpush.msra.mxu0 0.0
        %861 = vmatpush.msra.mxu0 0.0
        %862 = vmatpush.msra.mxu0 0.0
        %863 = vmatpush.msra.mxu0 0.0
        %864 = vmatpush.msra.mxu0 %v522
        %865 = vmatpush.msra.mxu0 %v521
        %866 = vmatmul.f32.gmra.mxu0 %v848
        %v867 = vpop.f32.mrf.mxu0
        %v868 = vadd.f32 %v844, %v867
        %869 = vdwg.mxu0
        %v870 = vadd.f32 %v868, %v576
        %v871 = vld [vmem:[%s295 + $0x4] sm:$0xf]
        %873 = vst [vmem:[#allocation1] ss:$2 sm:$0xff] %v871
        %v874 = vld.sshfl [vmem:[#allocation1] sm:$0xff pattern:$0x75316420]
        %875 = vrot.lane.b32.xlu0 %v874, 96
        %v876 = vpop.permute.xlu0 %875
        %v878 = vadd.f32 %v870, %v876
        %880 = vrot.lane.b32.xlu0 %v878, 32
        %v881 = vpop.permute.xlu0 %880
        %883 = vst.msk [vmem:[%s337 + $0x4] sm:$0xf] %vm642, %v881
        %884 = vrot.lane.b32.xlu0 %v412, 80
        %v885 = vpop.permute.xlu0 %884
        %v886 = vsel %vm526, %v885, 0
        %888 = vmatpush.msra.mxu0 0.0
        %889 = vmatpush.msra.mxu0 0.0
        %890 = vmatpush.msra.mxu0 0.0
        %891 = vmatpush.msra.mxu0 0.0
        %892 = vmatpush.msra.mxu0 0.0
        %893 = vmatpush.msra.mxu0 0.0
        %894 = vmatpush.msra.mxu0 0.0
        %895 = vmatpush.msra.mxu0 0.0
        %896 = vmatpush.msra.mxu0 0.0
        %897 = vmatpush.msra.mxu0 0.0
        %898 = vmatpush.msra.mxu0 0.0
        %899 = vmatpush.msra.mxu0 0.0
        %900 = vmatpush.msra.mxu0 0.0
        %901 = vmatpush.msra.mxu0 0.0
        %902 = vmatpush.msra.mxu0 %v525
        %903 = vmatpush.msra.mxu0 %v524
        %904 = vmatmul.f32.gmra.mxu0 %v886
        %v905 = vpop.f32.mrf.mxu0
        %v906 = vadd.f32 0.0, %v905
        %907 = vdwg.mxu0
        %908 = vrot.lane.b32.xlu0 %v369, 80
        %v909 = vpop.permute.xlu0 %908
        %v910 = vsel %vm526, %v909, 0
        %912 = vmatpush.msra.mxu0 0.0
        %913 = vmatpush.msra.mxu0 0.0
        %914 = vmatpush.msra.mxu0 0.0
        %915 = vmatpush.msra.mxu0 0.0
        %916 = vmatpush.msra.mxu0 0.0
        %917 = vmatpush.msra.mxu0 0.0
        %918 = vmatpush.msra.mxu0 0.0
        %919 = vmatpush.msra.mxu0 0.0
        %920 = vmatpush.msra.mxu0 0.0
        %921 = vmatpush.msra.mxu0 0.0
        %922 = vmatpush.msra.mxu0 0.0
        %923 = vmatpush.msra.mxu0 0.0
        %924 = vmatpush.msra.mxu0 0.0
        %925 = vmatpush.msra.mxu0 0.0
        %926 = vmatpush.msra.mxu0 %v522
        %927 = vmatpush.msra.mxu0 %v521
        %928 = vmatmul.f32.gmra.mxu0 %v910
        %v929 = vpop.f32.mrf.mxu0
        %v930 = vadd.f32 %v906, %v929
        %931 = vdwg.mxu0
        %v932 = vadd.f32 %v930, %v576
        %v933 = vld [vmem:[%s295 + $0x4] sm:$0xf]
        %935 = vst [vmem:[#allocation1] ss:$2 sm:$0xff] %v933
        %v936 = vld.sshfl [vmem:[#allocation1] sm:$0xff pattern:$0x75316420]
        %937 = vrot.lane.b32.xlu0 %v936, 64
        %v938 = vpop.permute.xlu0 %937
        %v940 = vadd.f32 %v932, %v938
        %942 = vrot.lane.b32.xlu0 %v940, 64
        %v943 = vpop.permute.xlu0 %942
        %945 = vst.msk [vmem:[%s337 + $0x4] sm:$0xf] %vm705, %v943
        %946 = vrot.lane.b32.xlu0 %v498, 80
        %v947 = vpop.permute.xlu0 %946
        %v948 = vsel %vm526, %v947, 0
        %950 = vmatpush.msra.mxu0 0.0
        %951 = vmatpush.msra.mxu0 0.0
        %952 = vmatpush.msra.mxu0 0.0
        %953 = vmatpush.msra.mxu0 0.0
        %954 = vmatpush.msra.mxu0 0.0
        %955 = vmatpush.msra.mxu0 0.0
        %956 = vmatpush.msra.mxu0 0.0
        %957 = vmatpush.msra.mxu0 0.0
        %958 = vmatpush.msra.mxu0 0.0
        %959 = vmatpush.msra.mxu0 0.0
        %960 = vmatpush.msra.mxu0 0.0
        %961 = vmatpush.msra.mxu0 0.0
        %962 = vmatpush.msra.mxu0 0.0
        %963 = vmatpush.msra.mxu0 0.0
        %964 = vmatpush.msra.mxu0 %v525
        %965 = vmatpush.msra.mxu0 %v524
        %966 = vmatmul.f32.gmra.mxu0 %v948
        %v967 = vpop.f32.mrf.mxu0
        %v968 = vadd.f32 0.0, %v967
        %969 = vdwg.mxu0
        %970 = vrot.lane.b32.xlu0 %v455, 80
        %v971 = vpop.permute.xlu0 %970
        %v972 = vsel %vm526, %v971, 0
        %974 = vmatpush.msra.mxu0 0.0
        %975 = vmatpush.msra.mxu0 0.0
        %976 = vmatpush.msra.mxu0 0.0
        %977 = vmatpush.msra.mxu0 0.0
        %978 = vmatpush.msra.mxu0 0.0
        %979 = vmatpush.msra.mxu0 0.0
        %980 = vmatpush.msra.mxu0 0.0
        %981 = vmatpush.msra.mxu0 0.0
        %982 = vmatpush.msra.mxu0 0.0
        %983 = vmatpush.msra.mxu0 0.0
        %984 = vmatpush.msra.mxu0 0.0
        %985 = vmatpush.msra.mxu0 0.0
        %986 = vmatpush.msra.mxu0 0.0
        %987 = vmatpush.msra.mxu0 0.0
        %988 = vmatpush.msra.mxu0 %v522
        %989 = vmatpush.msra.mxu0 %v521
        %990 = vmatmul.f32.gmra.mxu0 %v972
        %v991 = vpop.f32.mrf.mxu0
        %v992 = vadd.f32 %v968, %v991
        %993 = vdwg.mxu0
        %v994 = vadd.f32 %v992, %v576
        %v995 = vld [vmem:[%s295 + $0x4] sm:$0xf]
        %997 = vst [vmem:[#allocation1] ss:$2 sm:$0xff] %v995
        %v998 = vld.sshfl [vmem:[#allocation1] sm:$0xff pattern:$0x75316420]
        %999 = vrot.lane.b32.xlu0 %v998, 32
        %v1000 = vpop.permute.xlu0 %999
        %v1002 = vadd.f32 %v994, %v1000
        %1004 = vrot.lane.b32.xlu0 %v1002, 96
        %v1005 = vpop.permute.xlu0 %1004
        %1007 = vst.msk [vmem:[%s337 + $0x4] sm:$0xf] %vm768, %v1005
        %1008 = vrot.lane.b32.xlu0 %v412, 64
        %v1009 = vpop.permute.xlu0 %1008
        %v1010 = vsel %vm526, %v1009, 0
        %1012 = vmatpush.msra.mxu0 0.0
        %1013 = vmatpush.msra.mxu0 0.0
        %1014 = vmatpush.msra.mxu0 0.0
        %1015 = vmatpush.msra.mxu0 0.0
        %1016 = vmatpush.msra.mxu0 0.0
        %1017 = vmatpush.msra.mxu0 0.0
        %1018 = vmatpush.msra.mxu0 0.0
        %1019 = vmatpush.msra.mxu0 0.0
        %1020 = vmatpush.msra.mxu0 0.0
        %1021 = vmatpush.msra.mxu0 0.0
        %1022 = vmatpush.msra.mxu0 0.0
        %1023 = vmatpush.msra.mxu0 0.0
        %1024 = vmatpush.msra.mxu0 0.0
        %1025 = vmatpush.msra.mxu0 0.0
        %1026 = vmatpush.msra.mxu0 %v525
        %1027 = vmatpush.msra.mxu0 %v524
        %1028 = vmatmul.f32.gmra.mxu0 %v1010
        %v1029 = vpop.f32.mrf.mxu0
        %v1030 = vadd.f32 0.0, %v1029
        %1031 = vdwg.mxu0
        %1032 = vrot.lane.b32.xlu0 %v369, 64
        %v1033 = vpop.permute.xlu0 %1032
        %v1034 = vsel %vm526, %v1033, 0
        %1036 = vmatpush.msra.mxu0 0.0
        %1037 = vmatpush.msra.mxu0 0.0
        %1038 = vmatpush.msra.mxu0 0.0
        %1039 = vmatpush.msra.mxu0 0.0
        %1040 = vmatpush.msra.mxu0 0.0
        %1041 = vmatpush.msra.mxu0 0.0
        %1042 = vmatpush.msra.mxu0 0.0
        %1043 = vmatpush.msra.mxu0 0.0
        %1044 = vmatpush.msra.mxu0 0.0
        %1045 = vmatpush.msra.mxu0 0.0
        %1046 = vmatpush.msra.mxu0 0.0
        %1047 = vmatpush.msra.mxu0 0.0
        %1048 = vmatpush.msra.mxu0 0.0
        %1049 = vmatpush.msra.mxu0 0.0
        %1050 = vmatpush.msra.mxu0 %v522
        %1051 = vmatpush.msra.mxu0 %v521
        %1052 = vmatmul.f32.gmra.mxu0 %v1034
        %v1053 = vpop.f32.mrf.mxu0
        %v1054 = vadd.f32 %v1030, %v1053
        %1055 = vdwg.mxu0
        %v1056 = vadd.f32 %v1054, %v576
        %v1057 = vld [vmem:[%s295 + $0x8] sm:$0xf]
        %v1058 = vadd.f32 %v1056, %v1057
        %1059 = vst.msk [vmem:[%s337 + $0x8] sm:$0xf] %vm581, %v1058
        %1060 = vrot.lane.b32.xlu0 %v498, 64
        %v1061 = vpop.permute.xlu0 %1060
        %v1062 = vsel %vm526, %v1061, 0
        %1064 = vmatpush.msra.mxu0 0.0
        %1065 = vmatpush.msra.mxu0 0.0
        %1066 = vmatpush.msra.mxu0 0.0
        %1067 = vmatpush.msra.mxu0 0.0
        %1068 = vmatpush.msra.mxu0 0.0
        %1069 = vmatpush.msra.mxu0 0.0
        %1070 = vmatpush.msra.mxu0 0.0
        %1071 = vmatpush.msra.mxu0 0.0
        %1072 = vmatpush.msra.mxu0 0.0
        %1073 = vmatpush.msra.mxu0 0.0
        %1074 = vmatpush.msra.mxu0 0.0
        %1075 = vmatpush.msra.mxu0 0.0
        %1076 = vmatpush.msra.mxu0 0.0
        %1077 = vmatpush.msra.mxu0 0.0
        %1078 = vmatpush.msra.mxu0 %v525
        %1079 = vmatpush.msra.mxu0 %v524
        %1080 = vmatmul.f32.gmra.mxu0 %v1062
        %v1081 = vpop.f32.mrf.mxu0
        %v1082 = vadd.f32 0.0, %v1081
        %1083 = vdwg.mxu0
        %1084 = vrot.lane.b32.xlu0 %v455, 64
        %v1085 = vpop.permute.xlu0 %1084
        %v1086 = vsel %vm526, %v1085, 0
        %1088 = vmatpush.msra.mxu0 0.0
        %1089 = vmatpush.msra.mxu0 0.0
        %1090 = vmatpush.msra.mxu0 0.0
        %1091 = vmatpush.msra.mxu0 0.0
        %1092 = vmatpush.msra.mxu0 0.0
        %1093 = vmatpush.msra.mxu0 0.0
        %1094 = vmatpush.msra.mxu0 0.0
        %1095 = vmatpush.msra.mxu0 0.0
        %1096 = vmatpush.msra.mxu0 0.0
        %1097 = vmatpush.msra.mxu0 0.0
        %1098 = vmatpush.msra.mxu0 0.0
        %1099 = vmatpush.msra.mxu0 0.0
        %1100 = vmatpush.msra.mxu0 0.0
        %1101 = vmatpush.msra.mxu0 0.0
        %1102 = vmatpush.msra.mxu0 %v522
        %1103 = vmatpush.msra.mxu0 %v521
        %1104 = vmatmul.f32.gmra.mxu0 %v1086
        %v1105 = vpop.f32.mrf.mxu0
        %v1106 = vadd.f32 %v1082, %v1105
        %1107 = vdwg.mxu0
        %v1108 = vadd.f32 %v1106, %v576
        %v1109 = vld [vmem:[%s295 + $0x8] sm:$0xf]
        %1111 = vst [vmem:[#allocation1] ss:$2 sm:$0xff] %v1109
        %v1112 = vld.sshfl [vmem:[#allocation1] sm:$0xff pattern:$0x75316420]
        %1113 = vrot.lane.b32.xlu0 %v1112, 96
        %v1114 = vpop.permute.xlu0 %1113
        %v1116 = vadd.f32 %v1108, %v1114
        %1118 = vrot.lane.b32.xlu0 %v1116, 32
        %v1119 = vpop.permute.xlu0 %1118
        %1121 = vst.msk [vmem:[%s337 + $0x8] sm:$0xf] %vm642, %v1119
        %1122 = vrot.lane.b32.xlu0 %v412, 48
        %v1123 = vpop.permute.xlu0 %1122
        %v1124 = vsel %vm526, %v1123, 0
        %1126 = vmatpush.msra.mxu0 0.0
        %1127 = vmatpush.msra.mxu0 0.0
        %1128 = vmatpush.msra.mxu0 0.0
        %1129 = vmatpush.msra.mxu0 0.0
        %1130 = vmatpush.msra.mxu0 0.0
        %1131 = vmatpush.msra.mxu0 0.0
        %1132 = vmatpush.msra.mxu0 0.0
        %1133 = vmatpush.msra.mxu0 0.0
        %1134 = vmatpush.msra.mxu0 0.0
        %1135 = vmatpush.msra.mxu0 0.0
        %1136 = vmatpush.msra.mxu0 0.0
        %1137 = vmatpush.msra.mxu0 0.0
        %1138 = vmatpush.msra.mxu0 0.0
        %1139 = vmatpush.msra.mxu0 0.0
        %1140 = vmatpush.msra.mxu0 %v525
        %1141 = vmatpush.msra.mxu0 %v524
        %1142 = vmatmul.f32.gmra.mxu0 %v1124
        %v1143 = vpop.f32.mrf.mxu0
        %v1144 = vadd.f32 0.0, %v1143
        %1145 = vdwg.mxu0
        %1146 = vrot.lane.b32.xlu0 %v369, 48
        %v1147 = vpop.permute.xlu0 %1146
        %v1148 = vsel %vm526, %v1147, 0
        %1150 = vmatpush.msra.mxu0 0.0
        %1151 = vmatpush.msra.mxu0 0.0
        %1152 = vmatpush.msra.mxu0 0.0
        %1153 = vmatpush.msra.mxu0 0.0
        %1154 = vmatpush.msra.mxu0 0.0
        %1155 = vmatpush.msra.mxu0 0.0
        %1156 = vmatpush.msra.mxu0 0.0
        %1157 = vmatpush.msra.mxu0 0.0
        %1158 = vmatpush.msra.mxu0 0.0
        %1159 = vmatpush.msra.mxu0 0.0
        %1160 = vmatpush.msra.mxu0 0.0
        %1161 = vmatpush.msra.mxu0 0.0
        %1162 = vmatpush.msra.mxu0 0.0
        %1163 = vmatpush.msra.mxu0 0.0
        %1164 = vmatpush.msra.mxu0 %v522
        %1165 = vmatpush.msra.mxu0 %v521
        %1166 = vmatmul.f32.gmra.mxu0 %v1148
        %v1167 = vpop.f32.mrf.mxu0
        %v1168 = vadd.f32 %v1144, %v1167
        %1169 = vdwg.mxu0
        %v1170 = vadd.f32 %v1168, %v576
        %v1171 = vld [vmem:[%s295 + $0x8] sm:$0xf]
        %1173 = vst [vmem:[#allocation1] ss:$2 sm:$0xff] %v1171
        %v1174 = vld.sshfl [vmem:[#allocation1] sm:$0xff pattern:$0x75316420]
        %1175 = vrot.lane.b32.xlu0 %v1174, 64
        %v1176 = vpop.permute.xlu0 %1175
        %v1178 = vadd.f32 %v1170, %v1176
        %1180 = vrot.lane.b32.xlu0 %v1178, 64
        %v1181 = vpop.permute.xlu0 %1180
        %1183 = vst.msk [vmem:[%s337 + $0x8] sm:$0xf] %vm705, %v1181
        %1184 = vrot.lane.b32.xlu0 %v498, 48
        %v1185 = vpop.permute.xlu0 %1184
        %v1186 = vsel %vm526, %v1185, 0
        %1188 = vmatpush.msra.mxu0 0.0
        %1189 = vmatpush.msra.mxu0 0.0
        %1190 = vmatpush.msra.mxu0 0.0
        %1191 = vmatpush.msra.mxu0 0.0
        %1192 = vmatpush.msra.mxu0 0.0
        %1193 = vmatpush.msra.mxu0 0.0
        %1194 = vmatpush.msra.mxu0 0.0
        %1195 = vmatpush.msra.mxu0 0.0
        %1196 = vmatpush.msra.mxu0 0.0
        %1197 = vmatpush.msra.mxu0 0.0
        %1198 = vmatpush.msra.mxu0 0.0
        %1199 = vmatpush.msra.mxu0 0.0
        %1200 = vmatpush.msra.mxu0 0.0
        %1201 = vmatpush.msra.mxu0 0.0
        %1202 = vmatpush.msra.mxu0 %v525
        %1203 = vmatpush.msra.mxu0 %v524
        %1204 = vmatmul.f32.gmra.mxu0 %v1186
        %v1205 = vpop.f32.mrf.mxu0
        %v1206 = vadd.f32 0.0, %v1205
        %1207 = vdwg.mxu0
        %1208 = vrot.lane.b32.xlu0 %v455, 48
        %v1209 = vpop.permute.xlu0 %1208
        %v1210 = vsel %vm526, %v1209, 0
        %1212 = vmatpush.msra.mxu0 0.0
        %1213 = vmatpush.msra.mxu0 0.0
        %1214 = vmatpush.msra.mxu0 0.0
        %1215 = vmatpush.msra.mxu0 0.0
        %1216 = vmatpush.msra.mxu0 0.0
        %1217 = vmatpush.msra.mxu0 0.0
        %1218 = vmatpush.msra.mxu0 0.0
        %1219 = vmatpush.msra.mxu0 0.0
        %1220 = vmatpush.msra.mxu0 0.0
        %1221 = vmatpush.msra.mxu0 0.0
        %1222 = vmatpush.msra.mxu0 0.0
        %1223 = vmatpush.msra.mxu0 0.0
        %1224 = vmatpush.msra.mxu0 0.0
        %1225 = vmatpush.msra.mxu0 0.0
        %1226 = vmatpush.msra.mxu0 %v522
        %1227 = vmatpush.msra.mxu0 %v521
        %1228 = vmatmul.f32.gmra.mxu0 %v1210
        %v1229 = vpop.f32.mrf.mxu0
        %v1230 = vadd.f32 %v1206, %v1229
        %1231 = vdwg.mxu0
        %v1232 = vadd.f32 %v1230, %v576
        %v1233 = vld [vmem:[%s295 + $0x8] sm:$0xf]
        %1235 = vst [vmem:[#allocation1] ss:$2 sm:$0xff] %v1233
        %v1236 = vld.sshfl [vmem:[#allocation1] sm:$0xff pattern:$0x75316420]
        %1237 = vrot.lane.b32.xlu0 %v1236, 32
        %v1238 = vpop.permute.xlu0 %1237
        %v1240 = vadd.f32 %v1232, %v1238
        %1242 = vrot.lane.b32.xlu0 %v1240, 96
        %v1243 = vpop.permute.xlu0 %1242
        %1245 = vst.msk [vmem:[%s337 + $0x8] sm:$0xf] %vm768, %v1243
        %1246 = vrot.lane.b32.xlu0 %v412, 32
        %v1247 = vpop.permute.xlu0 %1246
        %v1248 = vsel %vm526, %v1247, 0
        %1250 = vmatpush.msra.mxu0 0.0
        %1251 = vmatpush.msra.mxu0 0.0
        %1252 = vmatpush.msra.mxu0 0.0
        %1253 = vmatpush.msra.mxu0 0.0
        %1254 = vmatpush.msra.mxu0 0.0
        %1255 = vmatpush.msra.mxu0 0.0
        %1256 = vmatpush.msra.mxu0 0.0
        %1257 = vmatpush.msra.mxu0 0.0
        %1258 = vmatpush.msra.mxu0 0.0
        %1259 = vmatpush.msra.mxu0 0.0
        %1260 = vmatpush.msra.mxu0 0.0
        %1261 = vmatpush.msra.mxu0 0.0
        %1262 = vmatpush.msra.mxu0 0.0
        %1263 = vmatpush.msra.mxu0 0.0
        %1264 = vmatpush.msra.mxu0 %v525
        %1265 = vmatpush.msra.mxu0 %v524
        %1266 = vmatmul.f32.gmra.mxu0 %v1248
        %v1267 = vpop.f32.mrf.mxu0
        %v1268 = vadd.f32 0.0, %v1267
        %1269 = vdwg.mxu0
        %1270 = vrot.lane.b32.xlu0 %v369, 32
        %v1271 = vpop.permute.xlu0 %1270
        %v1272 = vsel %vm526, %v1271, 0
        %1274 = vmatpush.msra.mxu0 0.0
        %1275 = vmatpush.msra.mxu0 0.0
        %1276 = vmatpush.msra.mxu0 0.0
        %1277 = vmatpush.msra.mxu0 0.0
        %1278 = vmatpush.msra.mxu0 0.0
        %1279 = vmatpush.msra.mxu0 0.0
        %1280 = vmatpush.msra.mxu0 0.0
        %1281 = vmatpush.msra.mxu0 0.0
        %1282 = vmatpush.msra.mxu0 0.0
        %1283 = vmatpush.msra.mxu0 0.0
        %1284 = vmatpush.msra.mxu0 0.0
        %1285 = vmatpush.msra.mxu0 0.0
        %1286 = vmatpush.msra.mxu0 0.0
        %1287 = vmatpush.msra.mxu0 0.0
        %1288 = vmatpush.msra.mxu0 %v522
        %1289 = vmatpush.msra.mxu0 %v521
        %1290 = vmatmul.f32.gmra.mxu0 %v1272
        %v1291 = vpop.f32.mrf.mxu0
        %v1292 = vadd.f32 %v1268, %v1291
        %1293 = vdwg.mxu0
        %v1294 = vadd.f32 %v1292, %v576
        %v1295 = vld [vmem:[%s295 + $0xc] sm:$0xf]
        %v1296 = vadd.f32 %v1294, %v1295
        %1297 = vst.msk [vmem:[%s337 + $0xc] sm:$0xf] %vm581, %v1296
        %1298 = vrot.lane.b32.xlu0 %v498, 32
        %v1299 = vpop.permute.xlu0 %1298
        %v1300 = vsel %vm526, %v1299, 0
        %1302 = vmatpush.msra.mxu0 0.0
        %1303 = vmatpush.msra.mxu0 0.0
        %1304 = vmatpush.msra.mxu0 0.0
        %1305 = vmatpush.msra.mxu0 0.0
        %1306 = vmatpush.msra.mxu0 0.0
        %1307 = vmatpush.msra.mxu0 0.0
        %1308 = vmatpush.msra.mxu0 0.0
        %1309 = vmatpush.msra.mxu0 0.0
        %1310 = vmatpush.msra.mxu0 0.0
        %1311 = vmatpush.msra.mxu0 0.0
        %1312 = vmatpush.msra.mxu0 0.0
        %1313 = vmatpush.msra.mxu0 0.0
        %1314 = vmatpush.msra.mxu0 0.0
        %1315 = vmatpush.msra.mxu0 0.0
        %1316 = vmatpush.msra.mxu0 %v525
        %1317 = vmatpush.msra.mxu0 %v524
        %1318 = vmatmul.f32.gmra.mxu0 %v1300
        %v1319 = vpop.f32.mrf.mxu0
        %v1320 = vadd.f32 0.0, %v1319
        %1321 = vdwg.mxu0
        %1322 = vrot.lane.b32.xlu0 %v455, 32
        %v1323 = vpop.permute.xlu0 %1322
        %v1324 = vsel %vm526, %v1323, 0
        %1326 = vmatpush.msra.mxu0 0.0
        %1327 = vmatpush.msra.mxu0 0.0
        %1328 = vmatpush.msra.mxu0 0.0
        %1329 = vmatpush.msra.mxu0 0.0
        %1330 = vmatpush.msra.mxu0 0.0
        %1331 = vmatpush.msra.mxu0 0.0
        %1332 = vmatpush.msra.mxu0 0.0
        %1333 = vmatpush.msra.mxu0 0.0
        %1334 = vmatpush.msra.mxu0 0.0
        %1335 = vmatpush.msra.mxu0 0.0
        %1336 = vmatpush.msra.mxu0 0.0
        %1337 = vmatpush.msra.mxu0 0.0
        %1338 = vmatpush.msra.mxu0 0.0
        %1339 = vmatpush.msra.mxu0 0.0
        %1340 = vmatpush.msra.mxu0 %v522
        %1341 = vmatpush.msra.mxu0 %v521
        %1342 = vmatmul.f32.gmra.mxu0 %v1324
        %v1343 = vpop.f32.mrf.mxu0
        %v1344 = vadd.f32 %v1320, %v1343
        %1345 = vdwg.mxu0
        %v1346 = vadd.f32 %v1344, %v576
        %v1347 = vld [vmem:[%s295 + $0xc] sm:$0xf]
        %1349 = vst [vmem:[#allocation1] ss:$2 sm:$0xff] %v1347
        %v1350 = vld.sshfl [vmem:[#allocation1] sm:$0xff pattern:$0x75316420]
        %1351 = vrot.lane.b32.xlu0 %v1350, 96
        %v1352 = vpop.permute.xlu0 %1351
        %v1354 = vadd.f32 %v1346, %v1352
        %1356 = vrot.lane.b32.xlu0 %v1354, 32
        %v1357 = vpop.permute.xlu0 %1356
        %1359 = vst.msk [vmem:[%s337 + $0xc] sm:$0xf] %vm642, %v1357
        %1360 = vrot.lane.b32.xlu0 %v412, 16
        %v1361 = vpop.permute.xlu0 %1360
        %v1362 = vsel %vm526, %v1361, 0
        %1364 = vmatpush.msra.mxu0 0.0
        %1365 = vmatpush.msra.mxu0 0.0
        %1366 = vmatpush.msra.mxu0 0.0
        %1367 = vmatpush.msra.mxu0 0.0
        %1368 = vmatpush.msra.mxu0 0.0
        %1369 = vmatpush.msra.mxu0 0.0
        %1370 = vmatpush.msra.mxu0 0.0
        %1371 = vmatpush.msra.mxu0 0.0
        %1372 = vmatpush.msra.mxu0 0.0
        %1373 = vmatpush.msra.mxu0 0.0
        %1374 = vmatpush.msra.mxu0 0.0
        %1375 = vmatpush.msra.mxu0 0.0
        %1376 = vmatpush.msra.mxu0 0.0
        %1377 = vmatpush.msra.mxu0 0.0
        %1378 = vmatpush.msra.mxu0 %v525
        %1379 = vmatpush.msra.mxu0 %v524
        %1380 = vmatmul.f32.gmra.mxu0 %v1362
        %v1381 = vpop.f32.mrf.mxu0
        %v1382 = vadd.f32 0.0, %v1381
        %1383 = vdwg.mxu0
        %1384 = vrot.lane.b32.xlu0 %v369, 16
        %v1385 = vpop.permute.xlu0 %1384
        %v1386 = vsel %vm526, %v1385, 0
        %1388 = vmatpush.msra.mxu0 0.0
        %1389 = vmatpush.msra.mxu0 0.0
        %1390 = vmatpush.msra.mxu0 0.0
        %1391 = vmatpush.msra.mxu0 0.0
        %1392 = vmatpush.msra.mxu0 0.0
        %1393 = vmatpush.msra.mxu0 0.0
        %1394 = vmatpush.msra.mxu0 0.0
        %1395 = vmatpush.msra.mxu0 0.0
        %1396 = vmatpush.msra.mxu0 0.0
        %1397 = vmatpush.msra.mxu0 0.0
        %1398 = vmatpush.msra.mxu0 0.0
        %1399 = vmatpush.msra.mxu0 0.0
        %1400 = vmatpush.msra.mxu0 0.0
        %1401 = vmatpush.msra.mxu0 0.0
        %1402 = vmatpush.msra.mxu0 %v522
        %1403 = vmatpush.msra.mxu0 %v521
        %1404 = vmatmul.f32.gmra.mxu0 %v1386
        %v1405 = vpop.f32.mrf.mxu0
        %v1406 = vadd.f32 %v1382, %v1405
        %1407 = vdwg.mxu0
        %v1408 = vadd.f32 %v1406, %v576
        %v1409 = vld [vmem:[%s295 + $0xc] sm:$0xf]
        %1411 = vst [vmem:[#allocation1] ss:$2 sm:$0xff] %v1409
        %v1412 = vld.sshfl [vmem:[#allocation1] sm:$0xff pattern:$0x75316420]
        %1413 = vrot.lane.b32.xlu0 %v1412, 64
        %v1414 = vpop.permute.xlu0 %1413
        %v1416 = vadd.f32 %v1408, %v1414
        %1418 = vrot.lane.b32.xlu0 %v1416, 64
        %v1419 = vpop.permute.xlu0 %1418
        %1421 = vst.msk [vmem:[%s337 + $0xc] sm:$0xf] %vm705, %v1419
        %1422 = vrot.lane.b32.xlu0 %v498, 16
        %v1423 = vpop.permute.xlu0 %1422
        %v1424 = vsel %vm526, %v1423, 0
        %1426 = vmatpush.msra.mxu0 0.0
        %1427 = vmatpush.msra.mxu0 0.0
        %1428 = vmatpush.msra.mxu0 0.0
        %1429 = vmatpush.msra.mxu0 0.0
        %1430 = vmatpush.msra.mxu0 0.0
        %1431 = vmatpush.msra.mxu0 0.0
        %1432 = vmatpush.msra.mxu0 0.0
        %1433 = vmatpush.msra.mxu0 0.0
        %1434 = vmatpush.msra.mxu0 0.0
        %1435 = vmatpush.msra.mxu0 0.0
        %1436 = vmatpush.msra.mxu0 0.0
        %1437 = vmatpush.msra.mxu0 0.0
        %1438 = vmatpush.msra.mxu0 0.0
        %1439 = vmatpush.msra.mxu0 0.0
        %1440 = vmatpush.msra.mxu0 %v525
        %1441 = vmatpush.msra.mxu0 %v524
        %1442 = vmatmul.f32.gmra.mxu0 %v1424
        %v1443 = vpop.f32.mrf.mxu0
        %v1444 = vadd.f32 0.0, %v1443
        %1445 = vdwg.mxu0
        %1446 = vrot.lane.b32.xlu0 %v455, 16
        %v1447 = vpop.permute.xlu0 %1446
        %v1448 = vsel %vm526, %v1447, 0
        %1450 = vmatpush.msra.mxu0 0.0
        %1451 = vmatpush.msra.mxu0 0.0
        %1452 = vmatpush.msra.mxu0 0.0
        %1453 = vmatpush.msra.mxu0 0.0
        %1454 = vmatpush.msra.mxu0 0.0
        %1455 = vmatpush.msra.mxu0 0.0
        %1456 = vmatpush.msra.mxu0 0.0
        %1457 = vmatpush.msra.mxu0 0.0
        %1458 = vmatpush.msra.mxu0 0.0
        %1459 = vmatpush.msra.mxu0 0.0
        %1460 = vmatpush.msra.mxu0 0.0
        %1461 = vmatpush.msra.mxu0 0.0
        %1462 = vmatpush.msra.mxu0 0.0
        %1463 = vmatpush.msra.mxu0 0.0
        %1464 = vmatpush.msra.mxu0 %v522
        %1465 = vmatpush.msra.mxu0 %v521
        %1466 = vmatmul.f32.gmra.mxu0 %v1448
        %v1467 = vpop.f32.mrf.mxu0
        %v1468 = vadd.f32 %v1444, %v1467
        %1469 = vdwg.mxu0
        %v1470 = vadd.f32 %v1468, %v576
        %v1471 = vld [vmem:[%s295 + $0xc] sm:$0xf]
        %1473 = vst [vmem:[#allocation1] ss:$2 sm:$0xff] %v1471
        %v1474 = vld.sshfl [vmem:[#allocation1] sm:$0xff pattern:$0x75316420]
        %1475 = vrot.lane.b32.xlu0 %v1474, 32
        %v1476 = vpop.permute.xlu0 %1475
        %v1478 = vadd.f32 %v1470, %v1476
        %1480 = vrot.lane.b32.xlu0 %v1478, 96
        %v1481 = vpop.permute.xlu0 %1480
        %1483 = vst.msk [vmem:[%s337 + $0xc] sm:$0xf] %vm768, %v1481
        %v1485 = vsel %vm526, %v432, 0
        %1487 = vmatpush.msra.mxu0 0.0
        %1488 = vmatpush.msra.mxu0 0.0
        %1489 = vmatpush.msra.mxu0 0.0
        %1490 = vmatpush.msra.mxu0 0.0
        %1491 = vmatpush.msra.mxu0 0.0
        %1492 = vmatpush.msra.mxu0 0.0
        %1493 = vmatpush.msra.mxu0 0.0
        %1494 = vmatpush.msra.mxu0 0.0
        %1495 = vmatpush.msra.mxu0 0.0
        %1496 = vmatpush.msra.mxu0 0.0
        %1497 = vmatpush.msra.mxu0 0.0
        %1498 = vmatpush.msra.mxu0 0.0
        %1499 = vmatpush.msra.mxu0 0.0
        %1500 = vmatpush.msra.mxu0 0.0
        %1501 = vmatpush.msra.mxu0 %v525
        %1502 = vmatpush.msra.mxu0 %v524
        %1503 = vmatmul.f32.gmra.mxu0 %v1485
        %v1504 = vpop.f32.mrf.mxu0
        %v1505 = vadd.f32 0.0, %v1504
        %1506 = vdwg.mxu0
        %v1508 = vsel %vm526, %v389, 0
        %1510 = vmatpush.msra.mxu0 0.0
        %1511 = vmatpush.msra.mxu0 0.0
        %1512 = vmatpush.msra.mxu0 0.0
        %1513 = vmatpush.msra.mxu0 0.0
        %1514 = vmatpush.msra.mxu0 0.0
        %1515 = vmatpush.msra.mxu0 0.0
        %1516 = vmatpush.msra.mxu0 0.0
        %1517 = vmatpush.msra.mxu0 0.0
        %1518 = vmatpush.msra.mxu0 0.0
        %1519 = vmatpush.msra.mxu0 0.0
        %1520 = vmatpush.msra.mxu0 0.0
        %1521 = vmatpush.msra.mxu0 0.0
        %1522 = vmatpush.msra.mxu0 0.0
        %1523 = vmatpush.msra.mxu0 0.0
        %1524 = vmatpush.msra.mxu0 %v522
        %1525 = vmatpush.msra.mxu0 %v521
        %1526 = vmatmul.f32.gmra.mxu0 %v1508
        %v1527 = vpop.f32.mrf.mxu0
        %v1528 = vadd.f32 %v1505, %v1527
        %1529 = vdwg.mxu0
        %v1530 = vadd.f32 %v1528, %v576
        %v1531 = vld [vmem:[%s295 + $0x10] sm:$0xf]
        %v1532 = vadd.f32 %v1530, %v1531
        %1533 = vst.msk [vmem:[%s337 + $0x10] sm:$0xf] %vm581, %v1532
        %v1535 = vsel %vm526, %v518, 0
        %1537 = vmatpush.msra.mxu0 0.0
        %1538 = vmatpush.msra.mxu0 0.0
        %1539 = vmatpush.msra.mxu0 0.0
        %1540 = vmatpush.msra.mxu0 0.0
        %1541 = vmatpush.msra.mxu0 0.0
        %1542 = vmatpush.msra.mxu0 0.0
        %1543 = vmatpush.msra.mxu0 0.0
        %1544 = vmatpush.msra.mxu0 0.0
        %1545 = vmatpush.msra.mxu0 0.0
        %1546 = vmatpush.msra.mxu0 0.0
        %1547 = vmatpush.msra.mxu0 0.0
        %1548 = vmatpush.msra.mxu0 0.0
        %1549 = vmatpush.msra.mxu0 0.0
        %1550 = vmatpush.msra.mxu0 0.0
        %1551 = vmatpush.msra.mxu0 %v525
        %1552 = vmatpush.msra.mxu0 %v524
        %1553 = vmatmul.f32.gmra.mxu0 %v1535
        %v1554 = vpop.f32.mrf.mxu0
        %v1555 = vadd.f32 0.0, %v1554
        %1556 = vdwg.mxu0
        %v1558 = vsel %vm526, %v475, 0
        %1560 = vmatpush.msra.mxu0 0.0
        %1561 = vmatpush.msra.mxu0 0.0
        %1562 = vmatpush.msra.mxu0 0.0
        %1563 = vmatpush.msra.mxu0 0.0
        %1564 = vmatpush.msra.mxu0 0.0
        %1565 = vmatpush.msra.mxu0 0.0
        %1566 = vmatpush.msra.mxu0 0.0
        %1567 = vmatpush.msra.mxu0 0.0
        %1568 = vmatpush.msra.mxu0 0.0
        %1569 = vmatpush.msra.mxu0 0.0
        %1570 = vmatpush.msra.mxu0 0.0
        %1571 = vmatpush.msra.mxu0 0.0
        %1572 = vmatpush.msra.mxu0 0.0
        %1573 = vmatpush.msra.mxu0 0.0
        %1574 = vmatpush.msra.mxu0 %v522
        %1575 = vmatpush.msra.mxu0 %v521
        %1576 = vmatmul.f32.gmra.mxu0 %v1558
        %v1577 = vpop.f32.mrf.mxu0
        %v1578 = vadd.f32 %v1555, %v1577
        %1579 = vdwg.mxu0
        %v1580 = vadd.f32 %v1578, %v576
        %v1581 = vld [vmem:[%s295 + $0x10] sm:$0xf]
        %1583 = vst [vmem:[#allocation1] ss:$2 sm:$0xff] %v1581
        %v1584 = vld.sshfl [vmem:[#allocation1] sm:$0xff pattern:$0x75316420]
        %1585 = vrot.lane.b32.xlu0 %v1584, 96
        %v1586 = vpop.permute.xlu0 %1585
        %v1588 = vadd.f32 %v1580, %v1586
        %1590 = vrot.lane.b32.xlu0 %v1588, 32
        %v1591 = vpop.permute.xlu0 %1590
        %1593 = vst.msk [vmem:[%s337 + $0x10] sm:$0xf] %vm642, %v1591
        %1594 = vrot.lane.b32.xlu0 %v432, 112
        %v1595 = vpop.permute.xlu0 %1594
        %v1596 = vsel %vm526, %v1595, 0
        %1598 = vmatpush.msra.mxu0 0.0
        %1599 = vmatpush.msra.mxu0 0.0
        %1600 = vmatpush.msra.mxu0 0.0
        %1601 = vmatpush.msra.mxu0 0.0
        %1602 = vmatpush.msra.mxu0 0.0
        %1603 = vmatpush.msra.mxu0 0.0
        %1604 = vmatpush.msra.mxu0 0.0
        %1605 = vmatpush.msra.mxu0 0.0
        %1606 = vmatpush.msra.mxu0 0.0
        %1607 = vmatpush.msra.mxu0 0.0
        %1608 = vmatpush.msra.mxu0 0.0
        %1609 = vmatpush.msra.mxu0 0.0
        %1610 = vmatpush.msra.mxu0 0.0
        %1611 = vmatpush.msra.mxu0 0.0
        %1612 = vmatpush.msra.mxu0 %v525
        %1613 = vmatpush.msra.mxu0 %v524
        %1614 = vmatmul.f32.gmra.mxu0 %v1596
        %v1615 = vpop.f32.mrf.mxu0
        %v1616 = vadd.f32 0.0, %v1615
        %1617 = vdwg.mxu0
        %1618 = vrot.lane.b32.xlu0 %v389, 112
        %v1619 = vpop.permute.xlu0 %1618
        %v1620 = vsel %vm526, %v1619, 0
        %1622 = vmatpush.msra.mxu0 0.0
        %1623 = vmatpush.msra.mxu0 0.0
        %1624 = vmatpush.msra.mxu0 0.0
        %1625 = vmatpush.msra.mxu0 0.0
        %1626 = vmatpush.msra.mxu0 0.0
        %1627 = vmatpush.msra.mxu0 0.0
        %1628 = vmatpush.msra.mxu0 0.0
        %1629 = vmatpush.msra.mxu0 0.0
        %1630 = vmatpush.msra.mxu0 0.0
        %1631 = vmatpush.msra.mxu0 0.0
        %1632 = vmatpush.msra.mxu0 0.0
        %1633 = vmatpush.msra.mxu0 0.0
        %1634 = vmatpush.msra.mxu0 0.0
        %1635 = vmatpush.msra.mxu0 0.0
        %1636 = vmatpush.msra.mxu0 %v522
        %1637 = vmatpush.msra.mxu0 %v521
        %1638 = vmatmul.f32.gmra.mxu0 %v1620
        %v1639 = vpop.f32.mrf.mxu0
        %v1640 = vadd.f32 %v1616, %v1639
        %1641 = vdwg.mxu0
        %v1642 = vadd.f32 %v1640, %v576
        %v1643 = vld [vmem:[%s295 + $0x10] sm:$0xf]
        %1645 = vst [vmem:[#allocation1] ss:$2 sm:$0xff] %v1643
        %v1646 = vld.sshfl [vmem:[#allocation1] sm:$0xff pattern:$0x75316420]
        %1647 = vrot.lane.b32.xlu0 %v1646, 64
        %v1648 = vpop.permute.xlu0 %1647
        %v1650 = vadd.f32 %v1642, %v1648
        %1652 = vrot.lane.b32.xlu0 %v1650, 64
        %v1653 = vpop.permute.xlu0 %1652
        %1655 = vst.msk [vmem:[%s337 + $0x10] sm:$0xf] %vm705, %v1653
        %1656 = vrot.lane.b32.xlu0 %v518, 112
        %v1657 = vpop.permute.xlu0 %1656
        %v1658 = vsel %vm526, %v1657, 0
        %1660 = vmatpush.msra.mxu0 0.0
        %1661 = vmatpush.msra.mxu0 0.0
        %1662 = vmatpush.msra.mxu0 0.0
        %1663 = vmatpush.msra.mxu0 0.0
        %1664 = vmatpush.msra.mxu0 0.0
        %1665 = vmatpush.msra.mxu0 0.0
        %1666 = vmatpush.msra.mxu0 0.0
        %1667 = vmatpush.msra.mxu0 0.0
        %1668 = vmatpush.msra.mxu0 0.0
        %1669 = vmatpush.msra.mxu0 0.0
        %1670 = vmatpush.msra.mxu0 0.0
        %1671 = vmatpush.msra.mxu0 0.0
        %1672 = vmatpush.msra.mxu0 0.0
        %1673 = vmatpush.msra.mxu0 0.0
        %1674 = vmatpush.msra.mxu0 %v525
        %1675 = vmatpush.msra.mxu0 %v524
        %1676 = vmatmul.f32.gmra.mxu0 %v1658
        %v1677 = vpop.f32.mrf.mxu0
        %v1678 = vadd.f32 0.0, %v1677
        %1679 = vdwg.mxu0
        %1680 = vrot.lane.b32.xlu0 %v475, 112
        %v1681 = vpop.permute.xlu0 %1680
        %v1682 = vsel %vm526, %v1681, 0
        %1684 = vmatpush.msra.mxu0 0.0
        %1685 = vmatpush.msra.mxu0 0.0
        %1686 = vmatpush.msra.mxu0 0.0
        %1687 = vmatpush.msra.mxu0 0.0
        %1688 = vmatpush.msra.mxu0 0.0
        %1689 = vmatpush.msra.mxu0 0.0
        %1690 = vmatpush.msra.mxu0 0.0
        %1691 = vmatpush.msra.mxu0 0.0
        %1692 = vmatpush.msra.mxu0 0.0
        %1693 = vmatpush.msra.mxu0 0.0
        %1694 = vmatpush.msra.mxu0 0.0
        %1695 = vmatpush.msra.mxu0 0.0
        %1696 = vmatpush.msra.mxu0 0.0
        %1697 = vmatpush.msra.mxu0 0.0
        %1698 = vmatpush.msra.mxu0 %v522
        %1699 = vmatpush.msra.mxu0 %v521
        %1700 = vmatmul.f32.gmra.mxu0 %v1682
        %v1701 = vpop.f32.mrf.mxu0
        %v1702 = vadd.f32 %v1678, %v1701
        %1703 = vdwg.mxu0
        %v1704 = vadd.f32 %v1702, %v576
        %v1705 = vld [vmem:[%s295 + $0x10] sm:$0xf]
        %1707 = vst [vmem:[#allocation1] ss:$2 sm:$0xff] %v1705
        %v1708 = vld.sshfl [vmem:[#allocation1] sm:$0xff pattern:$0x75316420]
        %1709 = vrot.lane.b32.xlu0 %v1708, 32
        %v1710 = vpop.permute.xlu0 %1709
        %v1712 = vadd.f32 %v1704, %v1710
        %1714 = vrot.lane.b32.xlu0 %v1712, 96
        %v1715 = vpop.permute.xlu0 %1714
        %1717 = vst.msk [vmem:[%s337 + $0x10] sm:$0xf] %vm768, %v1715
        %1718 = vrot.lane.b32.xlu0 %v432, 96
        %v1719 = vpop.permute.xlu0 %1718
        %v1720 = vsel %vm526, %v1719, 0
        %1722 = vmatpush.msra.mxu0 0.0
        %1723 = vmatpush.msra.mxu0 0.0
        %1724 = vmatpush.msra.mxu0 0.0
        %1725 = vmatpush.msra.mxu0 0.0
        %1726 = vmatpush.msra.mxu0 0.0
        %1727 = vmatpush.msra.mxu0 0.0
        %1728 = vmatpush.msra.mxu0 0.0
        %1729 = vmatpush.msra.mxu0 0.0
        %1730 = vmatpush.msra.mxu0 0.0
        %1731 = vmatpush.msra.mxu0 0.0
        %1732 = vmatpush.msra.mxu0 0.0
        %1733 = vmatpush.msra.mxu0 0.0
        %1734 = vmatpush.msra.mxu0 0.0
        %1735 = vmatpush.msra.mxu0 0.0
        %1736 = vmatpush.msra.mxu0 %v525
        %1737 = vmatpush.msra.mxu0 %v524
        %1738 = vmatmul.f32.gmra.mxu0 %v1720
        %v1739 = vpop.f32.mrf.mxu0
        %v1740 = vadd.f32 0.0, %v1739
        %1741 = vdwg.mxu0
        %1742 = vrot.lane.b32.xlu0 %v389, 96
        %v1743 = vpop.permute.xlu0 %1742
        %v1744 = vsel %vm526, %v1743, 0
        %1746 = vmatpush.msra.mxu0 0.0
        %1747 = vmatpush.msra.mxu0 0.0
        %1748 = vmatpush.msra.mxu0 0.0
        %1749 = vmatpush.msra.mxu0 0.0
        %1750 = vmatpush.msra.mxu0 0.0
        %1751 = vmatpush.msra.mxu0 0.0
        %1752 = vmatpush.msra.mxu0 0.0
        %1753 = vmatpush.msra.mxu0 0.0
        %1754 = vmatpush.msra.mxu0 0.0
        %1755 = vmatpush.msra.mxu0 0.0
        %1756 = vmatpush.msra.mxu0 0.0
        %1757 = vmatpush.msra.mxu0 0.0
        %1758 = vmatpush.msra.mxu0 0.0
        %1759 = vmatpush.msra.mxu0 0.0
        %1760 = vmatpush.msra.mxu0 %v522
        %1761 = vmatpush.msra.mxu0 %v521
        %1762 = vmatmul.f32.gmra.mxu0 %v1744
        %v1763 = vpop.f32.mrf.mxu0
        %v1764 = vadd.f32 %v1740, %v1763
        %1765 = vdwg.mxu0
        %v1766 = vadd.f32 %v1764, %v576
        %v1767 = vld [vmem:[%s295 + $0x14] sm:$0xf]
        %v1768 = vadd.f32 %v1766, %v1767
        %1769 = vst.msk [vmem:[%s337 + $0x14] sm:$0xf] %vm581, %v1768
        %1770 = vrot.lane.b32.xlu0 %v518, 96
        %v1771 = vpop.permute.xlu0 %1770
        %v1772 = vsel %vm526, %v1771, 0
        %1774 = vmatpush.msra.mxu0 0.0
        %1775 = vmatpush.msra.mxu0 0.0
        %1776 = vmatpush.msra.mxu0 0.0
        %1777 = vmatpush.msra.mxu0 0.0
        %1778 = vmatpush.msra.mxu0 0.0
        %1779 = vmatpush.msra.mxu0 0.0
        %1780 = vmatpush.msra.mxu0 0.0
        %1781 = vmatpush.msra.mxu0 0.0
        %1782 = vmatpush.msra.mxu0 0.0
        %1783 = vmatpush.msra.mxu0 0.0
        %1784 = vmatpush.msra.mxu0 0.0
        %1785 = vmatpush.msra.mxu0 0.0
        %1786 = vmatpush.msra.mxu0 0.0
        %1787 = vmatpush.msra.mxu0 0.0
        %1788 = vmatpush.msra.mxu0 %v525
        %1789 = vmatpush.msra.mxu0 %v524
        %1790 = vmatmul.f32.gmra.mxu0 %v1772
        %v1791 = vpop.f32.mrf.mxu0
        %v1792 = vadd.f32 0.0, %v1791
        %1793 = vdwg.mxu0
        %1794 = vrot.lane.b32.xlu0 %v475, 96
        %v1795 = vpop.permute.xlu0 %1794
        %v1796 = vsel %vm526, %v1795, 0
        %1798 = vmatpush.msra.mxu0 0.0
        %1799 = vmatpush.msra.mxu0 0.0
        %1800 = vmatpush.msra.mxu0 0.0
        %1801 = vmatpush.msra.mxu0 0.0
        %1802 = vmatpush.msra.mxu0 0.0
        %1803 = vmatpush.msra.mxu0 0.0
        %1804 = vmatpush.msra.mxu0 0.0
        %1805 = vmatpush.msra.mxu0 0.0
        %1806 = vmatpush.msra.mxu0 0.0
        %1807 = vmatpush.msra.mxu0 0.0
        %1808 = vmatpush.msra.mxu0 0.0
        %1809 = vmatpush.msra.mxu0 0.0
        %1810 = vmatpush.msra.mxu0 0.0
        %1811 = vmatpush.msra.mxu0 0.0
        %1812 = vmatpush.msra.mxu0 %v522
        %1813 = vmatpush.msra.mxu0 %v521
        %1814 = vmatmul.f32.gmra.mxu0 %v1796
        %v1815 = vpop.f32.mrf.mxu0
        %v1816 = vadd.f32 %v1792, %v1815
        %1817 = vdwg.mxu0
        %v1818 = vadd.f32 %v1816, %v576
        %v1819 = vld [vmem:[%s295 + $0x14] sm:$0xf]
        %1821 = vst [vmem:[#allocation1] ss:$2 sm:$0xff] %v1819
        %v1822 = vld.sshfl [vmem:[#allocation1] sm:$0xff pattern:$0x75316420]
        %1823 = vrot.lane.b32.xlu0 %v1822, 96
        %v1824 = vpop.permute.xlu0 %1823
        %v1826 = vadd.f32 %v1818, %v1824
        %1828 = vrot.lane.b32.xlu0 %v1826, 32
        %v1829 = vpop.permute.xlu0 %1828
        %1831 = vst.msk [vmem:[%s337 + $0x14] sm:$0xf] %vm642, %v1829
        %1832 = vrot.lane.b32.xlu0 %v432, 80
        %v1833 = vpop.permute.xlu0 %1832
        %v1834 = vsel %vm526, %v1833, 0
        %1836 = vmatpush.msra.mxu0 0.0
        %1837 = vmatpush.msra.mxu0 0.0
        %1838 = vmatpush.msra.mxu0 0.0
        %1839 = vmatpush.msra.mxu0 0.0
        %1840 = vmatpush.msra.mxu0 0.0
        %1841 = vmatpush.msra.mxu0 0.0
        %1842 = vmatpush.msra.mxu0 0.0
        %1843 = vmatpush.msra.mxu0 0.0
        %1844 = vmatpush.msra.mxu0 0.0
        %1845 = vmatpush.msra.mxu0 0.0
        %1846 = vmatpush.msra.mxu0 0.0
        %1847 = vmatpush.msra.mxu0 0.0
        %1848 = vmatpush.msra.mxu0 0.0
        %1849 = vmatpush.msra.mxu0 0.0
        %1850 = vmatpush.msra.mxu0 %v525
        %1851 = vmatpush.msra.mxu0 %v524
        %1852 = vmatmul.f32.gmra.mxu0 %v1834
        %v1853 = vpop.f32.mrf.mxu0
        %v1854 = vadd.f32 0.0, %v1853
        %1855 = vdwg.mxu0
        %1856 = vrot.lane.b32.xlu0 %v389, 80
        %v1857 = vpop.permute.xlu0 %1856
        %v1858 = vsel %vm526, %v1857, 0
        %1860 = vmatpush.msra.mxu0 0.0
        %1861 = vmatpush.msra.mxu0 0.0
        %1862 = vmatpush.msra.mxu0 0.0
        %1863 = vmatpush.msra.mxu0 0.0
        %1864 = vmatpush.msra.mxu0 0.0
        %1865 = vmatpush.msra.mxu0 0.0
        %1866 = vmatpush.msra.mxu0 0.0
        %1867 = vmatpush.msra.mxu0 0.0
        %1868 = vmatpush.msra.mxu0 0.0
        %1869 = vmatpush.msra.mxu0 0.0
        %1870 = vmatpush.msra.mxu0 0.0
        %1871 = vmatpush.msra.mxu0 0.0
        %1872 = vmatpush.msra.mxu0 0.0
        %1873 = vmatpush.msra.mxu0 0.0
        %1874 = vmatpush.msra.mxu0 %v522
        %1875 = vmatpush.msra.mxu0 %v521
        %1876 = vmatmul.f32.gmra.mxu0 %v1858
        %v1877 = vpop.f32.mrf.mxu0
        %v1878 = vadd.f32 %v1854, %v1877
        %1879 = vdwg.mxu0
        %v1880 = vadd.f32 %v1878, %v576
        %v1881 = vld [vmem:[%s295 + $0x14] sm:$0xf]
        %1883 = vst [vmem:[#allocation1] ss:$2 sm:$0xff] %v1881
        %v1884 = vld.sshfl [vmem:[#allocation1] sm:$0xff pattern:$0x75316420]
        %1885 = vrot.lane.b32.xlu0 %v1884, 64
        %v1886 = vpop.permute.xlu0 %1885
        %v1888 = vadd.f32 %v1880, %v1886
        %1890 = vrot.lane.b32.xlu0 %v1888, 64
        %v1891 = vpop.permute.xlu0 %1890
        %1893 = vst.msk [vmem:[%s337 + $0x14] sm:$0xf] %vm705, %v1891
        %1894 = vrot.lane.b32.xlu0 %v518, 80
        %v1895 = vpop.permute.xlu0 %1894
        %v1896 = vsel %vm526, %v1895, 0
        %1898 = vmatpush.msra.mxu0 0.0
        %1899 = vmatpush.msra.mxu0 0.0
        %1900 = vmatpush.msra.mxu0 0.0
        %1901 = vmatpush.msra.mxu0 0.0
        %1902 = vmatpush.msra.mxu0 0.0
        %1903 = vmatpush.msra.mxu0 0.0
        %1904 = vmatpush.msra.mxu0 0.0
        %1905 = vmatpush.msra.mxu0 0.0
        %1906 = vmatpush.msra.mxu0 0.0
        %1907 = vmatpush.msra.mxu0 0.0
        %1908 = vmatpush.msra.mxu0 0.0
        %1909 = vmatpush.msra.mxu0 0.0
        %1910 = vmatpush.msra.mxu0 0.0
        %1911 = vmatpush.msra.mxu0 0.0
        %1912 = vmatpush.msra.mxu0 %v525
        %1913 = vmatpush.msra.mxu0 %v524
        %1914 = vmatmul.f32.gmra.mxu0 %v1896
        %v1915 = vpop.f32.mrf.mxu0
        %v1916 = vadd.f32 0.0, %v1915
        %1917 = vdwg.mxu0
        %1918 = vrot.lane.b32.xlu0 %v475, 80
        %v1919 = vpop.permute.xlu0 %1918
        %v1920 = vsel %vm526, %v1919, 0
        %1922 = vmatpush.msra.mxu0 0.0
        %1923 = vmatpush.msra.mxu0 0.0
        %1924 = vmatpush.msra.mxu0 0.0
        %1925 = vmatpush.msra.mxu0 0.0
        %1926 = vmatpush.msra.mxu0 0.0
        %1927 = vmatpush.msra.mxu0 0.0
        %1928 = vmatpush.msra.mxu0 0.0
        %1929 = vmatpush.msra.mxu0 0.0
        %1930 = vmatpush.msra.mxu0 0.0
        %1931 = vmatpush.msra.mxu0 0.0
        %1932 = vmatpush.msra.mxu0 0.0
        %1933 = vmatpush.msra.mxu0 0.0
        %1934 = vmatpush.msra.mxu0 0.0
        %1935 = vmatpush.msra.mxu0 0.0
        %1936 = vmatpush.msra.mxu0 %v522
        %1937 = vmatpush.msra.mxu0 %v521
        %1938 = vmatmul.f32.gmra.mxu0 %v1920
        %v1939 = vpop.f32.mrf.mxu0
        %v1940 = vadd.f32 %v1916, %v1939
        %1941 = vdwg.mxu0
        %v1942 = vadd.f32 %v1940, %v576
        %v1943 = vld [vmem:[%s295 + $0x14] sm:$0xf]
        %1945 = vst [vmem:[#allocation1] ss:$2 sm:$0xff] %v1943
        %v1946 = vld.sshfl [vmem:[#allocation1] sm:$0xff pattern:$0x75316420]
        %1947 = vrot.lane.b32.xlu0 %v1946, 32
        %v1948 = vpop.permute.xlu0 %1947
        %v1950 = vadd.f32 %v1942, %v1948
        %1952 = vrot.lane.b32.xlu0 %v1950, 96
        %v1953 = vpop.permute.xlu0 %1952
        %1955 = vst.msk [vmem:[%s337 + $0x14] sm:$0xf] %vm768, %v1953
        %1956 = vrot.lane.b32.xlu0 %v432, 64
        %v1957 = vpop.permute.xlu0 %1956
        %v1958 = vsel %vm526, %v1957, 0
        %1960 = vmatpush.msra.mxu0 0.0
        %1961 = vmatpush.msra.mxu0 0.0
        %1962 = vmatpush.msra.mxu0 0.0
        %1963 = vmatpush.msra.mxu0 0.0
        %1964 = vmatpush.msra.mxu0 0.0
        %1965 = vmatpush.msra.mxu0 0.0
        %1966 = vmatpush.msra.mxu0 0.0
        %1967 = vmatpush.msra.mxu0 0.0
        %1968 = vmatpush.msra.mxu0 0.0
        %1969 = vmatpush.msra.mxu0 0.0
        %1970 = vmatpush.msra.mxu0 0.0
        %1971 = vmatpush.msra.mxu0 0.0
        %1972 = vmatpush.msra.mxu0 0.0
        %1973 = vmatpush.msra.mxu0 0.0
        %1974 = vmatpush.msra.mxu0 %v525
        %1975 = vmatpush.msra.mxu0 %v524
        %1976 = vmatmul.f32.gmra.mxu0 %v1958
        %v1977 = vpop.f32.mrf.mxu0
        %v1978 = vadd.f32 0.0, %v1977
        %1979 = vdwg.mxu0
        %1980 = vrot.lane.b32.xlu0 %v389, 64
        %v1981 = vpop.permute.xlu0 %1980
        %v1982 = vsel %vm526, %v1981, 0
        %1984 = vmatpush.msra.mxu0 0.0
        %1985 = vmatpush.msra.mxu0 0.0
        %1986 = vmatpush.msra.mxu0 0.0
        %1987 = vmatpush.msra.mxu0 0.0
        %1988 = vmatpush.msra.mxu0 0.0
        %1989 = vmatpush.msra.mxu0 0.0
        %1990 = vmatpush.msra.mxu0 0.0
        %1991 = vmatpush.msra.mxu0 0.0
        %1992 = vmatpush.msra.mxu0 0.0
        %1993 = vmatpush.msra.mxu0 0.0
        %1994 = vmatpush.msra.mxu0 0.0
        %1995 = vmatpush.msra.mxu0 0.0
        %1996 = vmatpush.msra.mxu0 0.0
        %1997 = vmatpush.msra.mxu0 0.0
        %1998 = vmatpush.msra.mxu0 %v522
        %1999 = vmatpush.msra.mxu0 %v521
        %2000 = vmatmul.f32.gmra.mxu0 %v1982
        %v2001 = vpop.f32.mrf.mxu0
        %v2002 = vadd.f32 %v1978, %v2001
        %2003 = vdwg.mxu0
        %v2004 = vadd.f32 %v2002, %v576
        %v2005 = vld [vmem:[%s295 + $0x18] sm:$0xf]
        %v2006 = vadd.f32 %v2004, %v2005
        %2007 = vst.msk [vmem:[%s337 + $0x18] sm:$0xf] %vm581, %v2006
        %2008 = vrot.lane.b32.xlu0 %v518, 64
        %v2009 = vpop.permute.xlu0 %2008
        %v2010 = vsel %vm526, %v2009, 0
        %2012 = vmatpush.msra.mxu0 0.0
        %2013 = vmatpush.msra.mxu0 0.0
        %2014 = vmatpush.msra.mxu0 0.0
        %2015 = vmatpush.msra.mxu0 0.0
        %2016 = vmatpush.msra.mxu0 0.0
        %2017 = vmatpush.msra.mxu0 0.0
        %2018 = vmatpush.msra.mxu0 0.0
        %2019 = vmatpush.msra.mxu0 0.0
        %2020 = vmatpush.msra.mxu0 0.0
        %2021 = vmatpush.msra.mxu0 0.0
        %2022 = vmatpush.msra.mxu0 0.0
        %2023 = vmatpush.msra.mxu0 0.0
        %2024 = vmatpush.msra.mxu0 0.0
        %2025 = vmatpush.msra.mxu0 0.0
        %2026 = vmatpush.msra.mxu0 %v525
        %2027 = vmatpush.msra.mxu0 %v524
        %2028 = vmatmul.f32.gmra.mxu0 %v2010
        %v2029 = vpop.f32.mrf.mxu0
        %v2030 = vadd.f32 0.0, %v2029
        %2031 = vdwg.mxu0
        %2032 = vrot.lane.b32.xlu0 %v475, 64
        %v2033 = vpop.permute.xlu0 %2032
        %v2034 = vsel %vm526, %v2033, 0
        %2036 = vmatpush.msra.mxu0 0.0
        %2037 = vmatpush.msra.mxu0 0.0
        %2038 = vmatpush.msra.mxu0 0.0
        %2039 = vmatpush.msra.mxu0 0.0
        %2040 = vmatpush.msra.mxu0 0.0
        %2041 = vmatpush.msra.mxu0 0.0
        %2042 = vmatpush.msra.mxu0 0.0
        %2043 = vmatpush.msra.mxu0 0.0
        %2044 = vmatpush.msra.mxu0 0.0
        %2045 = vmatpush.msra.mxu0 0.0
        %2046 = vmatpush.msra.mxu0 0.0
        %2047 = vmatpush.msra.mxu0 0.0
        %2048 = vmatpush.msra.mxu0 0.0
        %2049 = vmatpush.msra.mxu0 0.0
        %2050 = vmatpush.msra.mxu0 %v522
        %2051 = vmatpush.msra.mxu0 %v521
        %2052 = vmatmul.f32.gmra.mxu0 %v2034
        %v2053 = vpop.f32.mrf.mxu0
        %v2054 = vadd.f32 %v2030, %v2053
        %2055 = vdwg.mxu0
        %v2056 = vadd.f32 %v2054, %v576
        %v2057 = vld [vmem:[%s295 + $0x18] sm:$0xf]
        %2059 = vst [vmem:[#allocation1] ss:$2 sm:$0xff] %v2057
        %v2060 = vld.sshfl [vmem:[#allocation1] sm:$0xff pattern:$0x75316420]
        %2061 = vrot.lane.b32.xlu0 %v2060, 96
        %v2062 = vpop.permute.xlu0 %2061
        %v2064 = vadd.f32 %v2056, %v2062
        %2066 = vrot.lane.b32.xlu0 %v2064, 32
        %v2067 = vpop.permute.xlu0 %2066
        %2069 = vst.msk [vmem:[%s337 + $0x18] sm:$0xf] %vm642, %v2067
        %2070 = vrot.lane.b32.xlu0 %v432, 48
        %v2071 = vpop.permute.xlu0 %2070
        %v2072 = vsel %vm526, %v2071, 0
        %2074 = vmatpush.msra.mxu0 0.0
        %2075 = vmatpush.msra.mxu0 0.0
        %2076 = vmatpush.msra.mxu0 0.0
        %2077 = vmatpush.msra.mxu0 0.0
        %2078 = vmatpush.msra.mxu0 0.0
        %2079 = vmatpush.msra.mxu0 0.0
        %2080 = vmatpush.msra.mxu0 0.0
        %2081 = vmatpush.msra.mxu0 0.0
        %2082 = vmatpush.msra.mxu0 0.0
        %2083 = vmatpush.msra.mxu0 0.0
        %2084 = vmatpush.msra.mxu0 0.0
        %2085 = vmatpush.msra.mxu0 0.0
        %2086 = vmatpush.msra.mxu0 0.0
        %2087 = vmatpush.msra.mxu0 0.0
        %2088 = vmatpush.msra.mxu0 %v525
        %2089 = vmatpush.msra.mxu0 %v524
        %2090 = vmatmul.f32.gmra.mxu0 %v2072
        %v2091 = vpop.f32.mrf.mxu0
        %v2092 = vadd.f32 0.0, %v2091
        %2093 = vdwg.mxu0
        %2094 = vrot.lane.b32.xlu0 %v389, 48
        %v2095 = vpop.permute.xlu0 %2094
        %v2096 = vsel %vm526, %v2095, 0
        %2098 = vmatpush.msra.mxu0 0.0
        %2099 = vmatpush.msra.mxu0 0.0
        %2100 = vmatpush.msra.mxu0 0.0
        %2101 = vmatpush.msra.mxu0 0.0
        %2102 = vmatpush.msra.mxu0 0.0
        %2103 = vmatpush.msra.mxu0 0.0
        %2104 = vmatpush.msra.mxu0 0.0
        %2105 = vmatpush.msra.mxu0 0.0
        %2106 = vmatpush.msra.mxu0 0.0
        %2107 = vmatpush.msra.mxu0 0.0
        %2108 = vmatpush.msra.mxu0 0.0
        %2109 = vmatpush.msra.mxu0 0.0
        %2110 = vmatpush.msra.mxu0 0.0
        %2111 = vmatpush.msra.mxu0 0.0
        %2112 = vmatpush.msra.mxu0 %v522
        %2113 = vmatpush.msra.mxu0 %v521
        %2114 = vmatmul.f32.gmra.mxu0 %v2096
        %v2115 = vpop.f32.mrf.mxu0
        %v2116 = vadd.f32 %v2092, %v2115
        %2117 = vdwg.mxu0
        %v2118 = vadd.f32 %v2116, %v576
        %v2119 = vld [vmem:[%s295 + $0x18] sm:$0xf]
        %2121 = vst [vmem:[#allocation1] ss:$2 sm:$0xff] %v2119
        %v2122 = vld.sshfl [vmem:[#allocation1] sm:$0xff pattern:$0x75316420]
        %2123 = vrot.lane.b32.xlu0 %v2122, 64
        %v2124 = vpop.permute.xlu0 %2123
        %v2126 = vadd.f32 %v2118, %v2124
        %2128 = vrot.lane.b32.xlu0 %v2126, 64
        %v2129 = vpop.permute.xlu0 %2128
        %2131 = vst.msk [vmem:[%s337 + $0x18] sm:$0xf] %vm705, %v2129
        %2132 = vrot.lane.b32.xlu0 %v518, 48
        %v2133 = vpop.permute.xlu0 %2132
        %v2134 = vsel %vm526, %v2133, 0
        %2136 = vmatpush.msra.mxu0 0.0
        %2137 = vmatpush.msra.mxu0 0.0
        %2138 = vmatpush.msra.mxu0 0.0
        %2139 = vmatpush.msra.mxu0 0.0
        %2140 = vmatpush.msra.mxu0 0.0
        %2141 = vmatpush.msra.mxu0 0.0
        %2142 = vmatpush.msra.mxu0 0.0
        %2143 = vmatpush.msra.mxu0 0.0
        %2144 = vmatpush.msra.mxu0 0.0
        %2145 = vmatpush.msra.mxu0 0.0
        %2146 = vmatpush.msra.mxu0 0.0
        %2147 = vmatpush.msra.mxu0 0.0
        %2148 = vmatpush.msra.mxu0 0.0
        %2149 = vmatpush.msra.mxu0 0.0
        %2150 = vmatpush.msra.mxu0 %v525
        %2151 = vmatpush.msra.mxu0 %v524
        %2152 = vmatmul.f32.gmra.mxu0 %v2134
        %v2153 = vpop.f32.mrf.mxu0
        %v2154 = vadd.f32 0.0, %v2153
        %2155 = vdwg.mxu0
        %2156 = vrot.lane.b32.xlu0 %v475, 48
        %v2157 = vpop.permute.xlu0 %2156
        %v2158 = vsel %vm526, %v2157, 0
        %2160 = vmatpush.msra.mxu0 0.0
        %2161 = vmatpush.msra.mxu0 0.0
        %2162 = vmatpush.msra.mxu0 0.0
        %2163 = vmatpush.msra.mxu0 0.0
        %2164 = vmatpush.msra.mxu0 0.0
        %2165 = vmatpush.msra.mxu0 0.0
        %2166 = vmatpush.msra.mxu0 0.0
        %2167 = vmatpush.msra.mxu0 0.0
        %2168 = vmatpush.msra.mxu0 0.0
        %2169 = vmatpush.msra.mxu0 0.0
        %2170 = vmatpush.msra.mxu0 0.0
        %2171 = vmatpush.msra.mxu0 0.0
        %2172 = vmatpush.msra.mxu0 0.0
        %2173 = vmatpush.msra.mxu0 0.0
        %2174 = vmatpush.msra.mxu0 %v522
        %2175 = vmatpush.msra.mxu0 %v521
        %2176 = vmatmul.f32.gmra.mxu0 %v2158
        %v2177 = vpop.f32.mrf.mxu0
        %v2178 = vadd.f32 %v2154, %v2177
        %2179 = vdwg.mxu0
        %v2180 = vadd.f32 %v2178, %v576
        %v2181 = vld [vmem:[%s295 + $0x18] sm:$0xf]
        %2183 = vst [vmem:[#allocation1] ss:$2 sm:$0xff] %v2181
        %v2184 = vld.sshfl [vmem:[#allocation1] sm:$0xff pattern:$0x75316420]
        %2185 = vrot.lane.b32.xlu0 %v2184, 32
        %v2186 = vpop.permute.xlu0 %2185
        %v2188 = vadd.f32 %v2180, %v2186
        %2190 = vrot.lane.b32.xlu0 %v2188, 96
        %v2191 = vpop.permute.xlu0 %2190
        %2193 = vst.msk [vmem:[%s337 + $0x18] sm:$0xf] %vm768, %v2191
        %2194 = vrot.lane.b32.xlu0 %v432, 32
        %v2195 = vpop.permute.xlu0 %2194
        %v2196 = vsel %vm526, %v2195, 0
        %2198 = vmatpush.msra.mxu0 0.0
        %2199 = vmatpush.msra.mxu0 0.0
        %2200 = vmatpush.msra.mxu0 0.0
        %2201 = vmatpush.msra.mxu0 0.0
        %2202 = vmatpush.msra.mxu0 0.0
        %2203 = vmatpush.msra.mxu0 0.0
        %2204 = vmatpush.msra.mxu0 0.0
        %2205 = vmatpush.msra.mxu0 0.0
        %2206 = vmatpush.msra.mxu0 0.0
        %2207 = vmatpush.msra.mxu0 0.0
        %2208 = vmatpush.msra.mxu0 0.0
        %2209 = vmatpush.msra.mxu0 0.0
        %2210 = vmatpush.msra.mxu0 0.0
        %2211 = vmatpush.msra.mxu0 0.0
        %2212 = vmatpush.msra.mxu0 %v525
        %2213 = vmatpush.msra.mxu0 %v524
        %2214 = vmatmul.f32.gmra.mxu0 %v2196
        %v2215 = vpop.f32.mrf.mxu0
        %v2216 = vadd.f32 0.0, %v2215
        %2217 = vdwg.mxu0
        %2218 = vrot.lane.b32.xlu0 %v389, 32
        %v2219 = vpop.permute.xlu0 %2218
        %v2220 = vsel %vm526, %v2219, 0
        %2222 = vmatpush.msra.mxu0 0.0
        %2223 = vmatpush.msra.mxu0 0.0
        %2224 = vmatpush.msra.mxu0 0.0
        %2225 = vmatpush.msra.mxu0 0.0
        %2226 = vmatpush.msra.mxu0 0.0
        %2227 = vmatpush.msra.mxu0 0.0
        %2228 = vmatpush.msra.mxu0 0.0
        %2229 = vmatpush.msra.mxu0 0.0
        %2230 = vmatpush.msra.mxu0 0.0
        %2231 = vmatpush.msra.mxu0 0.0
        %2232 = vmatpush.msra.mxu0 0.0
        %2233 = vmatpush.msra.mxu0 0.0
        %2234 = vmatpush.msra.mxu0 0.0
        %2235 = vmatpush.msra.mxu0 0.0
        %2236 = vmatpush.msra.mxu0 %v522
        %2237 = vmatpush.msra.mxu0 %v521
        %2238 = vmatmul.f32.gmra.mxu0 %v2220
        %v2239 = vpop.f32.mrf.mxu0
        %v2240 = vadd.f32 %v2216, %v2239
        %2241 = vdwg.mxu0
        %v2242 = vadd.f32 %v2240, %v576
        %v2243 = vld [vmem:[%s295 + $0x1c] sm:$0xf]
        %v2244 = vadd.f32 %v2242, %v2243
        %2245 = vst.msk [vmem:[%s337 + $0x1c] sm:$0xf] %vm581, %v2244
        %2246 = vrot.lane.b32.xlu0 %v518, 32
        %v2247 = vpop.permute.xlu0 %2246
        %v2248 = vsel %vm526, %v2247, 0
        %2250 = vmatpush.msra.mxu0 0.0
        %2251 = vmatpush.msra.mxu0 0.0
        %2252 = vmatpush.msra.mxu0 0.0
        %2253 = vmatpush.msra.mxu0 0.0
        %2254 = vmatpush.msra.mxu0 0.0
        %2255 = vmatpush.msra.mxu0 0.0
        %2256 = vmatpush.msra.mxu0 0.0
        %2257 = vmatpush.msra.mxu0 0.0
        %2258 = vmatpush.msra.mxu0 0.0
        %2259 = vmatpush.msra.mxu0 0.0
        %2260 = vmatpush.msra.mxu0 0.0
        %2261 = vmatpush.msra.mxu0 0.0
        %2262 = vmatpush.msra.mxu0 0.0
        %2263 = vmatpush.msra.mxu0 0.0
        %2264 = vmatpush.msra.mxu0 %v525
        %2265 = vmatpush.msra.mxu0 %v524
        %2266 = vmatmul.f32.gmra.mxu0 %v2248
        %v2267 = vpop.f32.mrf.mxu0
        %v2268 = vadd.f32 0.0, %v2267
        %2269 = vdwg.mxu0
        %2270 = vrot.lane.b32.xlu0 %v475, 32
        %v2271 = vpop.permute.xlu0 %2270
        %v2272 = vsel %vm526, %v2271, 0
        %2274 = vmatpush.msra.mxu0 0.0
        %2275 = vmatpush.msra.mxu0 0.0
        %2276 = vmatpush.msra.mxu0 0.0
        %2277 = vmatpush.msra.mxu0 0.0
        %2278 = vmatpush.msra.mxu0 0.0
        %2279 = vmatpush.msra.mxu0 0.0
        %2280 = vmatpush.msra.mxu0 0.0
        %2281 = vmatpush.msra.mxu0 0.0
        %2282 = vmatpush.msra.mxu0 0.0
        %2283 = vmatpush.msra.mxu0 0.0
        %2284 = vmatpush.msra.mxu0 0.0
        %2285 = vmatpush.msra.mxu0 0.0
        %2286 = vmatpush.msra.mxu0 0.0
        %2287 = vmatpush.msra.mxu0 0.0
        %2288 = vmatpush.msra.mxu0 %v522
        %2289 = vmatpush.msra.mxu0 %v521
        %2290 = vmatmul.f32.gmra.mxu0 %v2272
        %v2291 = vpop.f32.mrf.mxu0
        %v2292 = vadd.f32 %v2268, %v2291
        %2293 = vdwg.mxu0
        %v2294 = vadd.f32 %v2292, %v576
        %v2295 = vld [vmem:[%s295 + $0x1c] sm:$0xf]
        %2297 = vst [vmem:[#allocation1] ss:$2 sm:$0xff] %v2295
        %v2298 = vld.sshfl [vmem:[#allocation1] sm:$0xff pattern:$0x75316420]
        %2299 = vrot.lane.b32.xlu0 %v2298, 96
        %v2300 = vpop.permute.xlu0 %2299
        %v2302 = vadd.f32 %v2294, %v2300
        %2304 = vrot.lane.b32.xlu0 %v2302, 32
        %v2305 = vpop.permute.xlu0 %2304
        %2307 = vst.msk [vmem:[%s337 + $0x1c] sm:$0xf] %vm642, %v2305
        %2308 = vrot.lane.b32.xlu0 %v432, 16
        %v2309 = vpop.permute.xlu0 %2308
        %v2310 = vsel %vm526, %v2309, 0
        %2312 = vmatpush.msra.mxu0 0.0
        %2313 = vmatpush.msra.mxu0 0.0
        %2314 = vmatpush.msra.mxu0 0.0
        %2315 = vmatpush.msra.mxu0 0.0
        %2316 = vmatpush.msra.mxu0 0.0
        %2317 = vmatpush.msra.mxu0 0.0
        %2318 = vmatpush.msra.mxu0 0.0
        %2319 = vmatpush.msra.mxu0 0.0
        %2320 = vmatpush.msra.mxu0 0.0
        %2321 = vmatpush.msra.mxu0 0.0
        %2322 = vmatpush.msra.mxu0 0.0
        %2323 = vmatpush.msra.mxu0 0.0
        %2324 = vmatpush.msra.mxu0 0.0
        %2325 = vmatpush.msra.mxu0 0.0
        %2326 = vmatpush.msra.mxu0 %v525
        %2327 = vmatpush.msra.mxu0 %v524
        %2328 = vmatmul.f32.gmra.mxu0 %v2310
        %v2329 = vpop.f32.mrf.mxu0
        %v2330 = vadd.f32 0.0, %v2329
        %2331 = vdwg.mxu0
        %2332 = vrot.lane.b32.xlu0 %v389, 16
        %v2333 = vpop.permute.xlu0 %2332
        %v2334 = vsel %vm526, %v2333, 0
        %2336 = vmatpush.msra.mxu0 0.0
        %2337 = vmatpush.msra.mxu0 0.0
        %2338 = vmatpush.msra.mxu0 0.0
        %2339 = vmatpush.msra.mxu0 0.0
        %2340 = vmatpush.msra.mxu0 0.0
        %2341 = vmatpush.msra.mxu0 0.0
        %2342 = vmatpush.msra.mxu0 0.0
        %2343 = vmatpush.msra.mxu0 0.0
        %2344 = vmatpush.msra.mxu0 0.0
        %2345 = vmatpush.msra.mxu0 0.0
        %2346 = vmatpush.msra.mxu0 0.0
        %2347 = vmatpush.msra.mxu0 0.0
        %2348 = vmatpush.msra.mxu0 0.0
        %2349 = vmatpush.msra.mxu0 0.0
        %2350 = vmatpush.msra.mxu0 %v522
        %2351 = vmatpush.msra.mxu0 %v521
        %2352 = vmatmul.f32.gmra.mxu0 %v2334
        %v2353 = vpop.f32.mrf.mxu0
        %v2354 = vadd.f32 %v2330, %v2353
        %2355 = vdwg.mxu0
        %v2356 = vadd.f32 %v2354, %v576
        %v2357 = vld [vmem:[%s295 + $0x1c] sm:$0xf]
        %2359 = vst [vmem:[#allocation1] ss:$2 sm:$0xff] %v2357
        %v2360 = vld.sshfl [vmem:[#allocation1] sm:$0xff pattern:$0x75316420]
        %2361 = vrot.lane.b32.xlu0 %v2360, 64
        %v2362 = vpop.permute.xlu0 %2361
        %v2364 = vadd.f32 %v2356, %v2362
        %2366 = vrot.lane.b32.xlu0 %v2364, 64
        %v2367 = vpop.permute.xlu0 %2366
        %2369 = vst.msk [vmem:[%s337 + $0x1c] sm:$0xf] %vm705, %v2367
        %2370 = vrot.lane.b32.xlu0 %v518, 16
        %v2371 = vpop.permute.xlu0 %2370
        %v2372 = vsel %vm526, %v2371, 0
        %2374 = vmatpush.msra.mxu0 0.0
        %2375 = vmatpush.msra.mxu0 0.0
        %2376 = vmatpush.msra.mxu0 0.0
        %2377 = vmatpush.msra.mxu0 0.0
        %2378 = vmatpush.msra.mxu0 0.0
        %2379 = vmatpush.msra.mxu0 0.0
        %2380 = vmatpush.msra.mxu0 0.0
        %2381 = vmatpush.msra.mxu0 0.0
        %2382 = vmatpush.msra.mxu0 0.0
        %2383 = vmatpush.msra.mxu0 0.0
        %2384 = vmatpush.msra.mxu0 0.0
        %2385 = vmatpush.msra.mxu0 0.0
        %2386 = vmatpush.msra.mxu0 0.0
        %2387 = vmatpush.msra.mxu0 0.0
        %2388 = vmatpush.msra.mxu0 %v525
        %2389 = vmatpush.msra.mxu0 %v524
        %2390 = vmatmul.f32.gmra.mxu0 %v2372
        %v2391 = vpop.f32.mrf.mxu0
        %v2392 = vadd.f32 0.0, %v2391
        %2393 = vdwg.mxu0
        %2394 = vrot.lane.b32.xlu0 %v475, 16
        %v2395 = vpop.permute.xlu0 %2394
        %v2396 = vsel %vm526, %v2395, 0
        %2398 = vmatpush.msra.mxu0 0.0
        %2399 = vmatpush.msra.mxu0 0.0
        %2400 = vmatpush.msra.mxu0 0.0
        %2401 = vmatpush.msra.mxu0 0.0
        %2402 = vmatpush.msra.mxu0 0.0
        %2403 = vmatpush.msra.mxu0 0.0
        %2404 = vmatpush.msra.mxu0 0.0
        %2405 = vmatpush.msra.mxu0 0.0
        %2406 = vmatpush.msra.mxu0 0.0
        %2407 = vmatpush.msra.mxu0 0.0
        %2408 = vmatpush.msra.mxu0 0.0
        %2409 = vmatpush.msra.mxu0 0.0
        %2410 = vmatpush.msra.mxu0 0.0
        %2411 = vmatpush.msra.mxu0 0.0
        %2412 = vmatpush.msra.mxu0 %v522
        %2413 = vmatpush.msra.mxu0 %v521
        %2414 = vmatmul.f32.gmra.mxu0 %v2396
        %v2415 = vpop.f32.mrf.mxu0
        %v2416 = vadd.f32 %v2392, %v2415
        %2417 = vdwg.mxu0
        %v2418 = vadd.f32 %v2416, %v576
        %v2419 = vld [vmem:[%s295 + $0x1c] sm:$0xf]
        %2421 = vst [vmem:[#allocation1] ss:$2 sm:$0xff] %v2419
        %v2422 = vld.sshfl [vmem:[#allocation1] sm:$0xff pattern:$0x75316420]
        %2423 = vrot.lane.b32.xlu0 %v2422, 32
        %v2424 = vpop.permute.xlu0 %2423
        %v2426 = vadd.f32 %v2418, %v2424
        %2428 = vrot.lane.b32.xlu0 %v2426, 96
        %v2429 = vpop.permute.xlu0 %2428
        %2431 = vst.msk [vmem:[%s337 + $0x1c] sm:$0xf] %vm768, %v2429
        %s2432 = sand.u32 %s167, 1
        %s2433 = scalar_lea.sflag [#allocation4], %s2432
        %s2434 = sand.u32 %s167, 1
        %s2435 = smul.addr %s2434, 32
        %s2436 = scalar_lea.vmem [#allocation10], %s2435
        // Predicated region
        $region57: #{tpu_custom_call.1} parent=39 // pred_check
          %p2437 = pneg %p177
        $region58: #{tpu_custom_call.1} parent=39 // pred_check_branch
          %2439 = sbr.rel (%p2437) target = $region60
        $region59: #{tpu_custom_call.1} parent=39 // pred_region
          %s2440 = smul.u32 8, %s31
          %2442 = vsyncadd %s2433, 0
          %s2443 = smul.addr %s30, 8
          %s2444 = sadd.s32 %s2440, %s2443
          %s2445 = smul.addr %s2444, 4
          %s2446 = scalar_lea.hbm %s5, %s2445
          %s2448 = sshll.u32 %s2436, 4
          %s2449 = int_to_ptr.vmem [resolvable:$true] %s2448
          %s2450 = sshll.u32 %s2446, 4
          %s2451 = int_to_ptr.hbm [resolvable:$true] %s2450
          %2453 = dma.vmem_to_hbm [thread:$0]  %s2449, 512, %s2451, %s2433
        $region60: #{tpu_custom_call.1} parent=39 // pred_fallthru
          _
      $region40: #{tpu_custom_call.1} parent=5 // pred_fallthru
        _
      %p2454 = scmp.le.s32.totalorder 2, %s21
      // Predicated region
      $region61: #{tpu_custom_call.1} parent=5 // pred_check
        %p2455 = pneg %p2454
      $region62: #{tpu_custom_call.1} parent=5 // pred_check_branch
        %2457 = sbr.rel (%p2455) target = $region64
      $region63: #{tpu_custom_call.1} parent=5 // pred_region
        %s2458 = ssub.s32 %s21, 2
        // Predicated region
        $region65: #{tpu_custom_call.1} parent=63 // pred_check
          %p2459 = pneg %p183
        $region66: #{tpu_custom_call.1} parent=63 // pred_check_branch
          %2461 = sbr.rel (%p2459) target = $region68
        $region67: #{tpu_custom_call.1} parent=63 // pred_region
          %s2462 = sand.u32 %s168, 1
          %s2463 = scalar_lea.sflag [#allocation4], %s2462
          %s2464 = sand.u32 %s168, 1
          %s2465 = smul.addr %s2464, 32
          %s2466 = scalar_lea.vmem [#allocation10], %s2465
          %2468 = dma.done %s2463, 512
        $region68: #{tpu_custom_call.1} parent=63 // pred_fallthru
          _
      $region64: #{tpu_custom_call.1} parent=5 // pred_fallthru
        _
    $region6: #{tpu_custom_call.1} parent=1 // loop_footer
      %s25 = sadd.s32 1, %s21
    $region7: #{tpu_custom_call.1} parent=1 // loop_footer_branch
      %20 = sbr.rel target = $region3
    $region8: #{tpu_custom_call.1} parent=1 // loop_exit
      _
    %2469 = vsyncpa [#allocation3], 1
    %s2470 = scalar_lea.sflag [#allocation3], 1
    %2471 = vsyncpa %s2470, 1
    %2472 = vsyncpa [#allocation6], 1
    %s2473 = scalar_lea.sflag [#allocation6], 1
    %2474 = vsyncpa %s2473, 1
    %2475 = vsyncpa [#allocation9], 1
    %2476 = vsyncpa [#allocation4], 1
    %s2477 = scalar_lea.sflag [#allocation4], 1
    %2478 = vsyncpa %s2477, 1

</llo_original>
